<compile_context>
chip_gen: v7x
topology: tpu7x:2x2x1
jax: 0.10.0
libtpu: 0.0.40
codegen_flags: <defaults>
</compile_context>

<pallas_src>
import math
from functools import partial

import jax
import jax.numpy as jnp
from jax.experimental import pallas as pl
from jax.experimental.pallas import tpu as pltpu

K = 5          # Conv1d kernel_size=5, padding=2 ("same")
C1 = 128       # 100 channels padded to a full lane width
C2 = 256       # 200 channels padded to a full lane width


# ------------------------------ fused kernel ------------------------------- #

def _fused_cnn_kernel(x_ref, w0_ref, w1_ref, b1_ref, w2_ref, b2_ref,
                      w3_ref, b3_ref, scale_ref, shift_ref,
                      se1_ref, so1_ref, se2_ref, so2_ref, selg_ref,
                      wl_ref, bl_ref, wo_ref, bo_ref,
                      o_ref,
                      p1, p2, p3,
                      *, Bblk, L2, N0, N1, N2):
    """One grid step == Bblk batch samples.  All activations stay in VMEM.

    Striped layout: activations are 2-D (rows, channels).  Sample b of a stage
    with per-sample length Ln and stripe Tn occupies rows [b*Tn, b*Tn+Ln); the
    remaining Tn-Ln (>= 2) rows of the stripe are exact zeros, so 'same' conv
    padding comes for free from the neighbouring stripe (plus a 2-row zero
    header/footer in the halo slab)."""
    f32 = jnp.float32
    bf16 = jnp.bfloat16

    def conv(slab, w_ref, n):
        # slab: (n+4, Cin) f32 halo slab ; w_ref: (K, Cin, Cout) bf16
        acc = jnp.dot(slab[0:n, :].astype(bf16), w_ref[0],
                      preferred_element_type=f32)
        for k in range(1, K):
            acc = acc + jnp.dot(slab[k:k + n, :].astype(bf16), w_ref[k],
                                preferred_element_type=f32)
        return acc

    def pool(y, se_ref, so_ref):
        # MaxPool1d(2,2) + junk-row masking fused into two selection matmuls.
        yb = y.astype(bf16)
        e = jnp.dot(se_ref[...], yb, preferred_element_type=f32)
        o = jnp.dot(so_ref[...], yb, preferred_element_type=f32)
        return jnp.maximum(e, o)        # junk rows: max(0, 0) == 0 exactly

    z1 = jnp.zeros((2, C1), f32)
    z2 = jnp.zeros((2, C2), f32)

    # ---- conv0 + ReLU : single matmul on im2col'd input (bias folded) ----
    y = jnp.dot(x_ref[...], w0_ref[...], preferred_element_type=f32)
    y = jnp.maximum(y, 0.0)                                   # (N0, 128)
    p1[0:2, :] = z1
    p1[N0 + 2:N0 + 4, :] = z1
    p1[2:N0 + 2, :] = y

    # ---- conv1 + ReLU + maxpool  (Dropout(p=0.3) is identity in eval mode) ----
    y = jnp.maximum(conv(p1, w1_ref, N0) + b1_ref[...], 0.0)  # (N0, 128)
    y = pool(y, se1_ref, so1_ref)                             # (N1, 128)
    p2[0:2, :] = z1
    p2[N1 + 2:N1 + 4, :] = z1
    p2[2:N1 + 2, :] = y

    # ---- conv2 + ReLU + maxpool ----
    y = jnp.maximum(conv(p2, w2_ref, N1) + b2_ref[...], 0.0)  # (N1, 256)
    y = pool(y, se2_ref, so2_ref)                             # (N2, 256)
    p3[0:2, :] = z2
    p3[N2 + 2:N2 + 4, :] = z2
    p3[2:N2 + 2, :] = y

    # ---- conv3 + folded eval-mode BatchNorm + ReLU ----
    y = conv(p3, w3_ref, N2) + b3_ref[...]                    # (N2, 256)
    y = jnp.maximum(y * scale_ref[...] + shift_ref[...], 0.0)

    # ---- first Linear: gather the Bblk*L2 valid rows (l-major, b-minor), then
    #      L2 matmuls with M = Bblk (NCL flatten folded into wl's layout) ----
    g = jnp.dot(selg_ref[...], y.astype(bf16),
                preferred_element_type=f32)                   # (L2*Bblk, 256)
    hid = jnp.dot(g[0:Bblk, :].astype(bf16), wl_ref[0],
                  preferred_element_type=f32)
    for l in range(1, L2):
        hid = hid + jnp.dot(g[l * Bblk:(l + 1) * Bblk, :].astype(bf16),
                            wl_ref[l], preferred_element_type=f32)
    hid = jnp.maximum(hid + bl_ref[...], 0.0)                 # (Bblk, 128)

    # ---- output Linear (100 -> 1) ----
    out = jnp.dot(hid.astype(bf16), wo_ref[...],
                  preferred_element_type=f32) + bo_ref[...]
    o_ref[...] = out


def _const_spec(*shape):
    n = len(shape)
    return pl.BlockSpec(shape, lambda i, _n=n: (0,) * _n)


def cnn_forward(x, kp):
    """x: (B, seq_len, 4) -> (B, 1).  Mirrors CNN.forward in eval mode."""
    B, L, cin = x.shape
    assert L % 4 == 0 and cin == 4
    L1, L2 = L // 2, L // 4

    Bblk = B if B <= 8 else 8
    nsteps = -(-B // Bblk)
    B_pad = nsteps * Bblk
    T0, T1, T2 = L + 8, L1 + 4, L2 + 2           # per-sample stripe lengths
    N0, N1, N2 = Bblk * T0, Bblk * T1, Bblk * T2  # rows per grid step

    # ---- host-side (XLA) input prep: 'same'-pad + im2col + bias column + stripe pad
    xp = x.astype(jnp.float32)
    if B_pad != B:
        xp = jnp.pad(xp, ((0, B_pad - B), (0, 0), (0, 0)))
    xh = jnp.pad(xp, ((0, 0), (2, 2), (0, 0)))                    # (B_pad, L+4, 4)
    cols = [xh[:, k:k + L, :] for k in range(K)]                  # k-major, ch-minor
    xi = jnp.concatenate(cols + [jnp.ones((B_pad, L, 1), jnp.float32)], axis=-1)
    xi = jnp.pad(xi, ((0, 0), (0, T0 - L), (0, 32 - xi.shape[-1])))  # (B_pad, T0, 32)
    x2d = xi.reshape(B_pad * T0, 32).astype(jnp.bfloat16)

    # ---- grid-invariant selection matrices (maxpool + junk-row masking fused) ----
    def pool_sel(T, Lv, n):
        m = jnp.arange(n // 2)[:, None]
        c = jnp.arange(n)[None, :]
        valid = ((2 * m) % T) < Lv
        se = ((c == 2 * m) & valid).astype(jnp.bfloat16)
        so = ((c == 2 * m + 1) & valid).astype(jnp.bfloat16)
        return se, so

    se1, so1 = pool_sel(T0, L, N0)
    se2, so2 = pool_sel(T1, L1, N1)

    r = jnp.arange(L2 * Bblk)
    src = (r % Bblk) * T2 + (r // Bblk)           # row (l*Bblk + b) <- Y3[b*T2 + l]
    selg = (jnp.arange(N2)[None, :] == src[:, None]).astype(jnp.bfloat16)

    out = pl.pallas_call(
        partial(_fused_cnn_kernel, Bblk=Bblk, L2=L2, N0=N0, N1=N1, N2=N2),
        out_shape=jax.ShapeDtypeStruct((B_pad, 1), jnp.float32),
        grid=(nsteps,),
        in_specs=[
            pl.BlockSpec((N0, 32), lambda i: (i, 0)),   # im2col'd x, Bblk samples/step
            _const_spec(32, C1),                        # conv0 merged weight (+bias row)
            _const_spec(K, C1, C1), _const_spec(1, C1),  # conv1
            _const_spec(K, C1, C2), _const_spec(1, C2),  # conv2
            _const_spec(K, C2, C2), _const_spec(1, C2),  # conv3
            _const_spec(1, C2), _const_spec(1, C2),      # bn scale / shift
            _const_spec(N0 // 2, N0), _const_spec(N0 // 2, N0),   # pool1 sel (even/odd)
            _const_spec(N1 // 2, N1), _const_spec(N1 // 2, N1),   # pool2 sel (even/odd)
            _const_spec(L2 * Bblk, N2),                 # linear gather selection
            _const_spec(L2, C2, C1), _const_spec(1, C1),  # linear
            _const_spec(C1, 1), _const_spec(1, 1),        # output linear
        ],
        out_specs=pl.BlockSpec((Bblk, 1), lambda i: (i, 0)),
        scratch_shapes=[                                 # zero-haloed striped slabs
            pltpu.VMEM((N0 + 4, C1), jnp.float32),
            pltpu.VMEM((N1 + 4, C1), jnp.float32),
            pltpu.VMEM((N2 + 4, C2), jnp.float32),
        ],
        compiler_params=pltpu.CompilerParams(
            dimension_semantics=("parallel",)),          # both TCs on v7x
    )(x2d, kp["w0m"], kp["w1"], kp["b1"], kp["w2"], kp["b2"],
      kp["w3"], kp["b3"], kp["bn_scale"], kp["bn_shift"],
      se1, so1, se2, so2, selg,
      kp["wl"], kp["bl"], kp["wo"], kp["bo"])
    return out[:B]


# ------------------------------ parameters --------------------------------- #

def init_params(seq_len, key):
    """Deterministic PyTorch-style (uniform +/- 1/sqrt(fan_in)) init, true shapes."""
    def u(k, shape, fan_in):
        bound = 1.0 / math.sqrt(fan_in)
        return jax.random.uniform(k, shape, jnp.float32, -bound, bound)

    ks = jax.random.split(key, 12)
    F = 200 * (seq_len // 4)
    return {
        # conv weights stored as (K, Cin, Cout)  == PyTorch (Cout, Cin, K) transposed
        "w0": u(ks[0], (K, 4, 100), 4 * K),     "b0": u(ks[1], (100,), 4 * K),
        "w1": u(ks[2], (K, 100, 100), 100 * K), "b1": u(ks[3], (100,), 100 * K),
        "w2": u(ks[4], (K, 100, 200), 100 * K), "b2": u(ks[5], (200,), 100 * K),
        "w3": u(ks[6], (K, 200, 200), 200 * K), "b3": u(ks[7], (200,), 200 * K),
        # BatchNorm1d(200) default init
        "bn_gamma": jnp.ones((200,), jnp.float32),
        "bn_beta": jnp.zeros((200,), jnp.float32),
        "bn_mean": jnp.zeros((200,), jnp.float32),
        "bn_var": jnp.ones((200,), jnp.float32),
        # linears stored as (in, out)
        "wl": u(ks[8], (F, 100), F),   "bl": u(ks[9], (100,), F),
        "wo": u(ks[10], (100, 1), 100), "bo": u(ks[11], (1,), 100),
    }


def prepare_kernel_params(p, seq_len):
    """One-time host prep: pad channels to 128/256 lanes, cast matmul weights to
    bf16, fold BN (eval), fold conv0's bias + im2col layout, fold the NCL flatten
    into the first linear's weight layout.  Padded channels stay exactly 0."""
    L2 = seq_len // 4
    bf16 = jnp.bfloat16

    def padw(w, cin_to, cout_to):
        _, cin, cout = w.shape
        return jnp.pad(w, ((0, 0), (0, cin_to - cin), (0, cout_to - cout))).astype(bf16)

    def padb(v, c_to):
        return jnp.pad(v, (0, c_to - v.shape[0])).reshape(1, c_to).astype(jnp.float32)

    # conv0: im2col-merged weight (row order k*4 + c) with bias as row 20 -> (32, 128)
    w0m = jnp.concatenate([p["w0"].reshape(K * 4, 100), p["b0"].reshape(1, 100)], axis=0)
    w0m = jnp.pad(w0m, ((0, 32 - (K * 4 + 1)), (0, C1 - 100))).astype(bf16)

    scale = p["bn_gamma"] / jnp.sqrt(p["bn_var"] + 1e-5)       # eval-mode BN fold
    shift = p["bn_beta"] - p["bn_mean"] * scale

    # PyTorch flattens (C=200, L/4) channel-major: f = c*L2 + l.  Reorder so the
    # kernel can consume per-position channel rows directly.
    wl = p["wl"].reshape(200, L2, 100)                          # [c, l, h]
    wl = jnp.transpose(wl, (1, 0, 2))                           # [l, c, h]
    wl = jnp.pad(wl, ((0, 0), (0, C2 - 200), (0, C1 - 100))).astype(bf16)

    return {
        "w0m": w0m,
        "w1": padw(p["w1"], C1, C1), "b1": padb(p["b1"], C1),
        "w2": padw(p["w2"], C1, C2), "b2": padb(p["b2"], C2),
        "w3": padw(p["w3"], C2, C2), "b3": padb(p["b3"], C2),
        "bn_scale": jnp.pad(scale, (0, C2 - 200),
                            constant_values=1.0).reshape(1, C2).astype(jnp.float32),
        "bn_shift": jnp.pad(shift, (0, C2 - 200)).reshape(1, C2).astype(jnp.float32),
        "wl": wl, "bl": padb(p["bl"], C1),
        "wo": jnp.pad(p["wo"], ((0, C1 - 100), (0, 0))).astype(bf16),   # (128, 1)
        "bo": p["bo"].reshape(1, 1).astype(jnp.float32),
    }


# ------------------------- pure-JAX reference (check) ----------------------- #

def _reference_forward(x, p):
    """XLA replica of CNN.forward (eval mode) on the unpadded f32 params."""
    B = x.shape[0]
    h = jnp.transpose(x, (0, 2, 1))                            # NCL

    def conv(h, w_kio, b):
        w_oik = jnp.transpose(w_kio, (2, 1, 0))                # (Cout, Cin, K)
        y = jax.lax.conv_general_dilated(
            h, w_oik, window_strides=(1,), padding=[(2, 2)],
            dimension_numbers=("NCH", "OIH", "NCH"))
        return y + b[None, :, None]

    def pool(h):
        return jax.lax.reduce_window(h, -jnp.inf, jax.lax.max,
                                     (1, 1, 2), (1, 1, 2), "VALID")

    h = jax.nn.relu(conv(h, p["w0"], p["b0"]))
    h = jax.nn.relu(conv(h, p["w1"], p["b1"]))
    h = pool(h)
    h = jax.nn.relu(conv(h, p["w2"], p["b2"]))
    h = pool(h)
    h = conv(h, p["w3"], p["b3"])
    scale = p["bn_gamma"] / jnp.sqrt(p["bn_var"] + 1e-5)
    shift = p["bn_beta"] - p["bn_mean"] * scale
    h = jax.nn.relu(h * scale[None, :, None] + shift[None, :, None])
    h = h.reshape(B, -1)
    h = jax.nn.relu(h @ p["wl"] + p["bl"])
    return h @ p["wo"] + p["bo"]


# ----------------------------------- main ----------------------------------- #

if __name__ == "__main__":
    SEQ_LEN = 16   # small, divisible by 4 (module default is 44)
    key = jax.random.PRNGKey(0)
    k_x, k_p, k_x2 = jax.random.split(key, 3)

    params = init_params(SEQ_LEN, k_p)
    kparams = prepare_kernel_params(params, SEQ_LEN)

    # TODO(synk): Dropout(p=0.3) is identity in eval mode; training-mode RNG masking not implemented.
    fwd = jax.jit(cnn_forward)

    # Tolerance reflects bf16 matmul operands (f32 accumulation); output magnitudes are O(1e-1).
    TOL = 2e-2

    x = jax.random.normal(k_x, (2, SEQ_LEN, 4), jnp.float32)
    out = jax.block_until_ready(fwd(x, kparams))
    assert out.shape == (2, 1) and out.dtype == jnp.float32, (out.shape, out.dtype)
    ref = _reference_forward(x, params)
    assert jnp.allclose(out, ref, rtol=TOL, atol=TOL), (out, ref)

    # Larger batch: exercises batch padding and a multi-step "parallel" grid.
    x2 = jax.random.normal(k_x2, (18, SEQ_LEN, 4), jnp.float32)
    out2 = jax.block_until_ready(fwd(x2, kparams))
    assert out2.shape == (18, 1), out2.shape
    ref2 = _reference_forward(x2, params)
    assert jnp.allclose(out2, ref2, rtol=TOL, atol=TOL), (out2, ref2)

    print("KERNEL_OK")
</pallas_src>

<mosaic_0001>
module attributes {stable_mosaic.version = 11 : i64} {
  func.func @_fused_cnn_kernel(%arg0: i32, %arg1: memref<48x32xbf16, #tpu.memory_space<vmem>>, %arg2: memref<32x128xbf16, #tpu.memory_space<vmem>>, %arg3: memref<5x128x128xbf16, #tpu.memory_space<vmem>>, %arg4: memref<1x128xf32, #tpu.memory_space<vmem>>, %arg5: memref<5x128x256xbf16, #tpu.memory_space<vmem>>, %arg6: memref<1x256xf32, #tpu.memory_space<vmem>>, %arg7: memref<5x256x256xbf16, #tpu.memory_space<vmem>>, %arg8: memref<1x256xf32, #tpu.memory_space<vmem>>, %arg9: memref<1x256xf32, #tpu.memory_space<vmem>>, %arg10: memref<1x256xf32, #tpu.memory_space<vmem>>, %arg11: memref<24x48xbf16, #tpu.memory_space<vmem>>, %arg12: memref<24x48xbf16, #tpu.memory_space<vmem>>, %arg13: memref<12x24xbf16, #tpu.memory_space<vmem>>, %arg14: memref<12x24xbf16, #tpu.memory_space<vmem>>, %arg15: memref<8x12xbf16, #tpu.memory_space<vmem>>, %arg16: memref<4x256x128xbf16, #tpu.memory_space<vmem>>, %arg17: memref<1x128xf32, #tpu.memory_space<vmem>>, %arg18: memref<128x1xbf16, #tpu.memory_space<vmem>>, %arg19: memref<1x1xf32, #tpu.memory_space<vmem>>, %arg20: memref<2x1xf32, #tpu.memory_space<vmem>>, %arg21: memref<52x128xf32, #tpu.memory_space<vmem>>, %arg22: memref<28x128xf32, #tpu.memory_space<vmem>>, %arg23: memref<16x256xf32, #tpu.memory_space<vmem>>) attributes {dimension_semantics = [#tpu.dimension_semantics<parallel>], iteration_bounds = array<i64: 1>, scalar_prefetch = 0 : i64, scratch_operands = 3 : i64, tpu.core_type = #tpu.core_type<tc>, window_params = [{transform_indices = @transform_0, window_bounds = array<i64: 48, 32>}, {pipeline_mode = #tpu.pipeline_mode<synchronous>, transform_indices = @transform_1, window_bounds = array<i64: 32, 128>}, {pipeline_mode = #tpu.pipeline_mode<synchronous>, transform_indices = @transform_2, window_bounds = array<i64: 5, 128, 128>}, {pipeline_mode = #tpu.pipeline_mode<synchronous>, transform_indices = @transform_3, window_bounds = array<i64: 1, 128>}, {pipeline_mode = #tpu.pipeline_mode<synchronous>, transform_indices = @transform_4, window_bounds = array<i64: 5, 128, 256>}, {pipeline_mode = #tpu.pipeline_mode<synchronous>, transform_indices = @transform_5, window_bounds = array<i64: 1, 256>}, {pipeline_mode = #tpu.pipeline_mode<synchronous>, transform_indices = @transform_6, window_bounds = array<i64: 5, 256, 256>}, {pipeline_mode = #tpu.pipeline_mode<synchronous>, transform_indices = @transform_7, window_bounds = array<i64: 1, 256>}, {pipeline_mode = #tpu.pipeline_mode<synchronous>, transform_indices = @transform_8, window_bounds = array<i64: 1, 256>}, {pipeline_mode = #tpu.pipeline_mode<synchronous>, transform_indices = @transform_9, window_bounds = array<i64: 1, 256>}, {pipeline_mode = #tpu.pipeline_mode<synchronous>, transform_indices = @transform_10, window_bounds = array<i64: 24, 48>}, {pipeline_mode = #tpu.pipeline_mode<synchronous>, transform_indices = @transform_11, window_bounds = array<i64: 24, 48>}, {pipeline_mode = #tpu.pipeline_mode<synchronous>, transform_indices = @transform_12, window_bounds = array<i64: 12, 24>}, {pipeline_mode = #tpu.pipeline_mode<synchronous>, transform_indices = @transform_13, window_bounds = array<i64: 12, 24>}, {pipeline_mode = #tpu.pipeline_mode<synchronous>, transform_indices = @transform_14, window_bounds = array<i64: 8, 12>}, {pipeline_mode = #tpu.pipeline_mode<synchronous>, transform_indices = @transform_15, window_bounds = array<i64: 4, 256, 128>}, {pipeline_mode = #tpu.pipeline_mode<synchronous>, transform_indices = @transform_16, window_bounds = array<i64: 1, 128>}, {pipeline_mode = #tpu.pipeline_mode<synchronous>, transform_indices = @transform_17, window_bounds = array<i64: 128, 1>}, {pipeline_mode = #tpu.pipeline_mode<synchronous>, transform_indices = @transform_18, window_bounds = array<i64: 1, 1>}, {transform_indices = @transform_19, window_bounds = array<i64: 2, 1>}]} {
    %cst = arith.constant 0.000000e+00 : f32
    %0 = vector.broadcast %cst : f32 to vector<2x128xf32>
    %cst_0 = arith.constant 0.000000e+00 : f32
    %1 = vector.broadcast %cst_0 : f32 to vector<2x256xf32>
    %c0 = arith.constant 0 : index
    %c0_1 = arith.constant 0 : index
    %2 = vector.load %arg1[%c0, %c0_1] : memref<48x32xbf16, #tpu.memory_space<vmem>>, vector<48x32xbf16>
    %c0_2 = arith.constant 0 : index
    %c0_3 = arith.constant 0 : index
    %3 = vector.load %arg2[%c0_2, %c0_3] : memref<32x128xbf16, #tpu.memory_space<vmem>>, vector<32x128xbf16>
    %cst_4 = arith.constant dense<0.000000e+00> : vector<48x128xf32>
    %4 = tpu.matmul %2, %3, %cst_4 {dimension_numbers = #tpu.dot_dimension_numbers<[1], [0], [0], [1], [0, 0, 1, 1], [], []>} : vector<48x32xbf16>, vector<32x128xbf16>, vector<48x128xf32> -> vector<48x128xf32>
    %cst_5 = arith.constant 0.000000e+00 : f32
    %5 = vector.broadcast %cst_5 : f32 to vector<48x128xf32>
    %6 = arith.maximumf %4, %5 : vector<48x128xf32>
    %c0_6 = arith.constant 0 : index
    %c0_7 = arith.constant 0 : index
    %7 = vector.load %arg21[%c0_6, %c0_7] : memref<52x128xf32, #tpu.memory_space<vmem>>, vector<2x128xf32>
    tpu.vector_store %arg21[%c0_6, %c0_7], %0 {strides = array<i32>} : memref<52x128xf32, #tpu.memory_space<vmem>>, vector<2x128xf32>,
    %c50 = arith.constant 50 : index
    %c0_8 = arith.constant 0 : index
    %8 = vector.load %arg21[%c50, %c0_8] : memref<52x128xf32, #tpu.memory_space<vmem>>, vector<2x128xf32>
    tpu.vector_store %arg21[%c50, %c0_8], %0 {strides = array<i32>} : memref<52x128xf32, #tpu.memory_space<vmem>>, vector<2x128xf32>,
    %c2 = arith.constant 2 : index
    %c0_9 = arith.constant 0 : index
    %9 = vector.load %arg21[%c2, %c0_9] : memref<52x128xf32, #tpu.memory_space<vmem>>, vector<48x128xf32>
    tpu.vector_store %arg21[%c2, %c0_9], %6 {strides = array<i32>} : memref<52x128xf32, #tpu.memory_space<vmem>>, vector<48x128xf32>,
    %c0_10 = arith.constant 0 : index
    %c0_11 = arith.constant 0 : index
    %10 = vector.load %arg21[%c0_10, %c0_11] : memref<52x128xf32, #tpu.memory_space<vmem>>, vector<48x128xf32>
    %11 = arith.truncf %10 : vector<48x128xf32> to vector<48x128xbf16>
    %c0_12 = arith.constant 0 : index
    %c0_13 = arith.constant 0 : index
    %c0_14 = arith.constant 0 : index
    %12 = vector.load %arg3[%c0_12, %c0_13, %c0_14] : memref<5x128x128xbf16, #tpu.memory_space<vmem>>, vector<1x128x128xbf16>
    %13 = vector.shape_cast %12 : vector<1x128x128xbf16> to vector<128x128xbf16>
    %cst_15 = arith.constant dense<0.000000e+00> : vector<48x128xf32>
    %14 = tpu.matmul %11, %13, %cst_15 {dimension_numbers = #tpu.dot_dimension_numbers<[1], [0], [0], [1], [0, 0, 1, 1], [], []>} : vector<48x128xbf16>, vector<128x128xbf16>, vector<48x128xf32> -> vector<48x128xf32>
    %c1 = arith.constant 1 : index
    %c0_16 = arith.constant 0 : index
    %15 = vector.load %arg21[%c1, %c0_16] : memref<52x128xf32, #tpu.memory_space<vmem>>, vector<48x128xf32>
    %16 = arith.truncf %15 : vector<48x128xf32> to vector<48x128xbf16>
    %c1_17 = arith.constant 1 : index
    %c0_18 = arith.constant 0 : index
    %c0_19 = arith.constant 0 : index
    %17 = vector.load %arg3[%c1_17, %c0_18, %c0_19] : memref<5x128x128xbf16, #tpu.memory_space<vmem>>, vector<1x128x128xbf16>
    %18 = vector.shape_cast %17 : vector<1x128x128xbf16> to vector<128x128xbf16>
    %cst_20 = arith.constant dense<0.000000e+00> : vector<48x128xf32>
    %19 = tpu.matmul %16, %18, %cst_20 {dimension_numbers = #tpu.dot_dimension_numbers<[1], [0], [0], [1], [0, 0, 1, 1], [], []>} : vector<48x128xbf16>, vector<128x128xbf16>, vector<48x128xf32> -> vector<48x128xf32>
    %20 = arith.addf %14, %19 : vector<48x128xf32>
    %c2_21 = arith.constant 2 : index
    %c0_22 = arith.constant 0 : index
    %21 = vector.load %arg21[%c2_21, %c0_22] : memref<52x128xf32, #tpu.memory_space<vmem>>, vector<48x128xf32>
    %22 = arith.truncf %21 : vector<48x128xf32> to vector<48x128xbf16>
    %c2_23 = arith.constant 2 : index
    %c0_24 = arith.constant 0 : index
    %c0_25 = arith.constant 0 : index
    %23 = vector.load %arg3[%c2_23, %c0_24, %c0_25] : memref<5x128x128xbf16, #tpu.memory_space<vmem>>, vector<1x128x128xbf16>
    %24 = vector.shape_cast %23 : vector<1x128x128xbf16> to vector<128x128xbf16>
    %cst_26 = arith.constant dense<0.000000e+00> : vector<48x128xf32>
    %25 = tpu.matmul %22, %24, %cst_26 {dimension_numbers = #tpu.dot_dimension_numbers<[1], [0], [0], [1], [0, 0, 1, 1], [], []>} : vector<48x128xbf16>, vector<128x128xbf16>, vector<48x128xf32> -> vector<48x128xf32>
    %26 = arith.addf %20, %25 : vector<48x128xf32>
    %c3 = arith.constant 3 : index
    %c0_27 = arith.constant 0 : index
    %27 = vector.load %arg21[%c3, %c0_27] : memref<52x128xf32, #tpu.memory_space<vmem>>, vector<48x128xf32>
    %28 = arith.truncf %27 : vector<48x128xf32> to vector<48x128xbf16>
    %c3_28 = arith.constant 3 : index
    %c0_29 = arith.constant 0 : index
    %c0_30 = arith.constant 0 : index
    %29 = vector.load %arg3[%c3_28, %c0_29, %c0_30] : memref<5x128x128xbf16, #tpu.memory_space<vmem>>, vector<1x128x128xbf16>
    %30 = vector.shape_cast %29 : vector<1x128x128xbf16> to vector<128x128xbf16>
    %cst_31 = arith.constant dense<0.000000e+00> : vector<48x128xf32>
    %31 = tpu.matmul %28, %30, %cst_31 {dimension_numbers = #tpu.dot_dimension_numbers<[1], [0], [0], [1], [0, 0, 1, 1], [], []>} : vector<48x128xbf16>, vector<128x128xbf16>, vector<48x128xf32> -> vector<48x128xf32>
    %32 = arith.addf %26, %31 : vector<48x128xf32>
    %c4 = arith.constant 4 : index
    %c0_32 = arith.constant 0 : index
    %33 = vector.load %arg21[%c4, %c0_32] : memref<52x128xf32, #tpu.memory_space<vmem>>, vector<48x128xf32>
    %34 = arith.truncf %33 : vector<48x128xf32> to vector<48x128xbf16>
    %c4_33 = arith.constant 4 : index
    %c0_34 = arith.constant 0 : index
    %c0_35 = arith.constant 0 : index
    %35 = vector.load %arg3[%c4_33, %c0_34, %c0_35] : memref<5x128x128xbf16, #tpu.memory_space<vmem>>, vector<1x128x128xbf16>
    %36 = vector.shape_cast %35 : vector<1x128x128xbf16> to vector<128x128xbf16>
    %cst_36 = arith.constant dense<0.000000e+00> : vector<48x128xf32>
    %37 = tpu.matmul %34, %36, %cst_36 {dimension_numbers = #tpu.dot_dimension_numbers<[1], [0], [0], [1], [0, 0, 1, 1], [], []>} : vector<48x128xbf16>, vector<128x128xbf16>, vector<48x128xf32> -> vector<48x128xf32>
    %38 = arith.addf %32, %37 : vector<48x128xf32>
    %c0_37 = arith.constant 0 : index
    %c0_38 = arith.constant 0 : index
    %39 = vector.load %arg4[%c0_37, %c0_38] : memref<1x128xf32, #tpu.memory_space<vmem>>, vector<1x128xf32>
    %40 = vector.broadcast %39 : vector<1x128xf32> to vector<48x128xf32>
    %41 = arith.addf %38, %40 : vector<48x128xf32>
    %cst_39 = arith.constant 0.000000e+00 : f32
    %42 = vector.broadcast %cst_39 : f32 to vector<48x128xf32>
    %43 = arith.maximumf %41, %42 : vector<48x128xf32>
    %44 = arith.truncf %43 : vector<48x128xf32> to vector<48x128xbf16>
    %c0_40 = arith.constant 0 : index
    %c0_41 = arith.constant 0 : index
    %45 = vector.load %arg11[%c0_40, %c0_41] : memref<24x48xbf16, #tpu.memory_space<vmem>>, vector<24x48xbf16>
    %cst_42 = arith.constant dense<0.000000e+00> : vector<24x128xf32>
    %46 = tpu.matmul %45, %44, %cst_42 {dimension_numbers = #tpu.dot_dimension_numbers<[1], [0], [0], [1], [0, 0, 1, 1], [], []>} : vector<24x48xbf16>, vector<48x128xbf16>, vector<24x128xf32> -> vector<24x128xf32>
    %c0_43 = arith.constant 0 : index
    %c0_44 = arith.constant 0 : index
    %47 = vector.load %arg12[%c0_43, %c0_44] : memref<24x48xbf16, #tpu.memory_space<vmem>>, vector<24x48xbf16>
    %cst_45 = arith.constant dense<0.000000e+00> : vector<24x128xf32>
    %48 = tpu.matmul %47, %44, %cst_45 {dimension_numbers = #tpu.dot_dimension_numbers<[1], [0], [0], [1], [0, 0, 1, 1], [], []>} : vector<24x48xbf16>, vector<48x128xbf16>, vector<24x128xf32> -> vector<24x128xf32>
    %49 = arith.maximumf %46, %48 : vector<24x128xf32>
    %c0_46 = arith.constant 0 : index
    %c0_47 = arith.constant 0 : index
    %50 = vector.load %arg22[%c0_46, %c0_47] : memref<28x128xf32, #tpu.memory_space<vmem>>, vector<2x128xf32>
    tpu.vector_store %arg22[%c0_46, %c0_47], %0 {strides = array<i32>} : memref<28x128xf32, #tpu.memory_space<vmem>>, vector<2x128xf32>,
    %c26 = arith.constant 26 : index
    %c0_48 = arith.constant 0 : index
    %51 = vector.load %arg22[%c26, %c0_48] : memref<28x128xf32, #tpu.memory_space<vmem>>, vector<2x128xf32>
    tpu.vector_store %arg22[%c26, %c0_48], %0 {strides = array<i32>} : memref<28x128xf32, #tpu.memory_space<vmem>>, vector<2x128xf32>,
    %c2_49 = arith.constant 2 : index
    %c0_50 = arith.constant 0 : index
    %52 = vector.load %arg22[%c2_49, %c0_50] : memref<28x128xf32, #tpu.memory_space<vmem>>, vector<24x128xf32>
    tpu.vector_store %arg22[%c2_49, %c0_50], %49 {strides = array<i32>} : memref<28x128xf32, #tpu.memory_space<vmem>>, vector<24x128xf32>,
    %c0_51 = arith.constant 0 : index
    %c0_52 = arith.constant 0 : index
    %53 = vector.load %arg22[%c0_51, %c0_52] : memref<28x128xf32, #tpu.memory_space<vmem>>, vector<24x128xf32>
    %54 = arith.truncf %53 : vector<24x128xf32> to vector<24x128xbf16>
    %c0_53 = arith.constant 0 : index
    %c0_54 = arith.constant 0 : index
    %c0_55 = arith.constant 0 : index
    %55 = vector.load %arg5[%c0_53, %c0_54, %c0_55] : memref<5x128x256xbf16, #tpu.memory_space<vmem>>, vector<1x128x256xbf16>
    %56 = vector.shape_cast %55 : vector<1x128x256xbf16> to vector<128x256xbf16>
    %cst_56 = arith.constant dense<0.000000e+00> : vector<24x256xf32>
    %57 = tpu.matmul %54, %56, %cst_56 {dimension_numbers = #tpu.dot_dimension_numbers<[1], [0], [0], [1], [0, 0, 1, 1], [], []>} : vector<24x128xbf16>, vector<128x256xbf16>, vector<24x256xf32> -> vector<24x256xf32>
    %c1_57 = arith.constant 1 : index
    %c0_58 = arith.constant 0 : index
    %58 = vector.load %arg22[%c1_57, %c0_58] : memref<28x128xf32, #tpu.memory_space<vmem>>, vector<24x128xf32>
    %59 = arith.truncf %58 : vector<24x128xf32> to vector<24x128xbf16>
    %c1_59 = arith.constant 1 : index
    %c0_60 = arith.constant 0 : index
    %c0_61 = arith.constant 0 : index
    %60 = vector.load %arg5[%c1_59, %c0_60, %c0_61] : memref<5x128x256xbf16, #tpu.memory_space<vmem>>, vector<1x128x256xbf16>
    %61 = vector.shape_cast %60 : vector<1x128x256xbf16> to vector<128x256xbf16>
    %cst_62 = arith.constant dense<0.000000e+00> : vector<24x256xf32>
    %62 = tpu.matmul %59, %61, %cst_62 {dimension_numbers = #tpu.dot_dimension_numbers<[1], [0], [0], [1], [0, 0, 1, 1], [], []>} : vector<24x128xbf16>, vector<128x256xbf16>, vector<24x256xf32> -> vector<24x256xf32>
    %63 = arith.addf %57, %62 : vector<24x256xf32>
    %c2_63 = arith.constant 2 : index
    %c0_64 = arith.constant 0 : index
    %64 = vector.load %arg22[%c2_63, %c0_64] : memref<28x128xf32, #tpu.memory_space<vmem>>, vector<24x128xf32>
    %65 = arith.truncf %64 : vector<24x128xf32> to vector<24x128xbf16>
    %c2_65 = arith.constant 2 : index
    %c0_66 = arith.constant 0 : index
    %c0_67 = arith.constant 0 : index
    %66 = vector.load %arg5[%c2_65, %c0_66, %c0_67] : memref<5x128x256xbf16, #tpu.memory_space<vmem>>, vector<1x128x256xbf16>
    %67 = vector.shape_cast %66 : vector<1x128x256xbf16> to vector<128x256xbf16>
    %cst_68 = arith.constant dense<0.000000e+00> : vector<24x256xf32>
    %68 = tpu.matmul %65, %67, %cst_68 {dimension_numbers = #tpu.dot_dimension_numbers<[1], [0], [0], [1], [0, 0, 1, 1], [], []>} : vector<24x128xbf16>, vector<128x256xbf16>, vector<24x256xf32> -> vector<24x256xf32>
    %69 = arith.addf %63, %68 : vector<24x256xf32>
    %c3_69 = arith.constant 3 : index
    %c0_70 = arith.constant 0 : index
    %70 = vector.load %arg22[%c3_69, %c0_70] : memref<28x128xf32, #tpu.memory_space<vmem>>, vector<24x128xf32>
    %71 = arith.truncf %70 : vector<24x128xf32> to vector<24x128xbf16>
    %c3_71 = arith.constant 3 : index
    %c0_72 = arith.constant 0 : index
    %c0_73 = arith.constant 0 : index
    %72 = vector.load %arg5[%c3_71, %c0_72, %c0_73] : memref<5x128x256xbf16, #tpu.memory_space<vmem>>, vector<1x128x256xbf16>
    %73 = vector.shape_cast %72 : vector<1x128x256xbf16> to vector<128x256xbf16>
    %cst_74 = arith.constant dense<0.000000e+00> : vector<24x256xf32>
    %74 = tpu.matmul %71, %73, %cst_74 {dimension_numbers = #tpu.dot_dimension_numbers<[1], [0], [0], [1], [0, 0, 1, 1], [], []>} : vector<24x128xbf16>, vector<128x256xbf16>, vector<24x256xf32> -> vector<24x256xf32>
    %75 = arith.addf %69, %74 : vector<24x256xf32>
    %c4_75 = arith.constant 4 : index
    %c0_76 = arith.constant 0 : index
    %76 = vector.load %arg22[%c4_75, %c0_76] : memref<28x128xf32, #tpu.memory_space<vmem>>, vector<24x128xf32>
    %77 = arith.truncf %76 : vector<24x128xf32> to vector<24x128xbf16>
    %c4_77 = arith.constant 4 : index
    %c0_78 = arith.constant 0 : index
    %c0_79 = arith.constant 0 : index
    %78 = vector.load %arg5[%c4_77, %c0_78, %c0_79] : memref<5x128x256xbf16, #tpu.memory_space<vmem>>, vector<1x128x256xbf16>
    %79 = vector.shape_cast %78 : vector<1x128x256xbf16> to vector<128x256xbf16>
    %cst_80 = arith.constant dense<0.000000e+00> : vector<24x256xf32>
    %80 = tpu.matmul %77, %79, %cst_80 {dimension_numbers = #tpu.dot_dimension_numbers<[1], [0], [0], [1], [0, 0, 1, 1], [], []>} : vector<24x128xbf16>, vector<128x256xbf16>, vector<24x256xf32> -> vector<24x256xf32>
    %81 = arith.addf %75, %80 : vector<24x256xf32>
    %c0_81 = arith.constant 0 : index
    %c0_82 = arith.constant 0 : index
    %82 = vector.load %arg6[%c0_81, %c0_82] : memref<1x256xf32, #tpu.memory_space<vmem>>, vector<1x256xf32>
    %83 = vector.broadcast %82 : vector<1x256xf32> to vector<24x256xf32>
    %84 = arith.addf %81, %83 : vector<24x256xf32>
    %cst_83 = arith.constant 0.000000e+00 : f32
    %85 = vector.broadcast %cst_83 : f32 to vector<24x256xf32>
    %86 = arith.maximumf %84, %85 : vector<24x256xf32>
    %87 = arith.truncf %86 : vector<24x256xf32> to vector<24x256xbf16>
    %c0_84 = arith.constant 0 : index
    %c0_85 = arith.constant 0 : index
    %88 = vector.load %arg13[%c0_84, %c0_85] : memref<12x24xbf16, #tpu.memory_space<vmem>>, vector<12x24xbf16>
    %cst_86 = arith.constant dense<0.000000e+00> : vector<12x256xf32>
    %89 = tpu.matmul %88, %87, %cst_86 {dimension_numbers = #tpu.dot_dimension_numbers<[1], [0], [0], [1], [0, 0, 1, 1], [], []>} : vector<12x24xbf16>, vector<24x256xbf16>, vector<12x256xf32> -> vector<12x256xf32>
    %c0_87 = arith.constant 0 : index
    %c0_88 = arith.constant 0 : index
    %90 = vector.load %arg14[%c0_87, %c0_88] : memref<12x24xbf16, #tpu.memory_space<vmem>>, vector<12x24xbf16>
    %cst_89 = arith.constant dense<0.000000e+00> : vector<12x256xf32>
    %91 = tpu.matmul %90, %87, %cst_89 {dimension_numbers = #tpu.dot_dimension_numbers<[1], [0], [0], [1], [0, 0, 1, 1], [], []>} : vector<12x24xbf16>, vector<24x256xbf16>, vector<12x256xf32> -> vector<12x256xf32>
    %92 = arith.maximumf %89, %91 : vector<12x256xf32>
    %c0_90 = arith.constant 0 : index
    %c0_91 = arith.constant 0 : index
    %93 = vector.load %arg23[%c0_90, %c0_91] : memref<16x256xf32, #tpu.memory_space<vmem>>, vector<2x256xf32>
    tpu.vector_store %arg23[%c0_90, %c0_91], %1 {strides = array<i32>} : memref<16x256xf32, #tpu.memory_space<vmem>>, vector<2x256xf32>,
    %c14 = arith.constant 14 : index
    %c0_92 = arith.constant 0 : index
    %94 = vector.load %arg23[%c14, %c0_92] : memref<16x256xf32, #tpu.memory_space<vmem>>, vector<2x256xf32>
    tpu.vector_store %arg23[%c14, %c0_92], %1 {strides = array<i32>} : memref<16x256xf32, #tpu.memory_space<vmem>>, vector<2x256xf32>,
    %c2_93 = arith.constant 2 : index
    %c0_94 = arith.constant 0 : index
    %95 = vector.load %arg23[%c2_93, %c0_94] : memref<16x256xf32, #tpu.memory_space<vmem>>, vector<12x256xf32>
    tpu.vector_store %arg23[%c2_93, %c0_94], %92 {strides = array<i32>} : memref<16x256xf32, #tpu.memory_space<vmem>>, vector<12x256xf32>,
    %c0_95 = arith.constant 0 : index
    %c0_96 = arith.constant 0 : index
    %96 = vector.load %arg23[%c0_95, %c0_96] : memref<16x256xf32, #tpu.memory_space<vmem>>, vector<12x256xf32>
    %97 = arith.truncf %96 : vector<12x256xf32> to vector<12x256xbf16>
    %c0_97 = arith.constant 0 : index
    %c0_98 = arith.constant 0 : index
    %c0_99 = arith.constant 0 : index
    %98 = vector.load %arg7[%c0_97, %c0_98, %c0_99] : memref<5x256x256xbf16, #tpu.memory_space<vmem>>, vector<1x256x256xbf16>
    %99 = vector.shape_cast %98 : vector<1x256x256xbf16> to vector<256x256xbf16>
    %cst_100 = arith.constant dense<0.000000e+00> : vector<12x256xf32>
    %100 = tpu.matmul %97, %99, %cst_100 {dimension_numbers = #tpu.dot_dimension_numbers<[1], [0], [0], [1], [0, 0, 1, 1], [], []>} : vector<12x256xbf16>, vector<256x256xbf16>, vector<12x256xf32> -> vector<12x256xf32>
    %c1_101 = arith.constant 1 : index
    %c0_102 = arith.constant 0 : index
    %101 = vector.load %arg23[%c1_101, %c0_102] : memref<16x256xf32, #tpu.memory_space<vmem>>, vector<12x256xf32>
    %102 = arith.truncf %101 : vector<12x256xf32> to vector<12x256xbf16>
    %c1_103 = arith.constant 1 : index
    %c0_104 = arith.constant 0 : index
    %c0_105 = arith.constant 0 : index
    %103 = vector.load %arg7[%c1_103, %c0_104, %c0_105] : memref<5x256x256xbf16, #tpu.memory_space<vmem>>, vector<1x256x256xbf16>
    %104 = vector.shape_cast %103 : vector<1x256x256xbf16> to vector<256x256xbf16>
    %cst_106 = arith.constant dense<0.000000e+00> : vector<12x256xf32>
    %105 = tpu.matmul %102, %104, %cst_106 {dimension_numbers = #tpu.dot_dimension_numbers<[1], [0], [0], [1], [0, 0, 1, 1], [], []>} : vector<12x256xbf16>, vector<256x256xbf16>, vector<12x256xf32> -> vector<12x256xf32>
    %106 = arith.addf %100, %105 : vector<12x256xf32>
    %c2_107 = arith.constant 2 : index
    %c0_108 = arith.constant 0 : index
    %107 = vector.load %arg23[%c2_107, %c0_108] : memref<16x256xf32, #tpu.memory_space<vmem>>, vector<12x256xf32>
    %108 = arith.truncf %107 : vector<12x256xf32> to vector<12x256xbf16>
    %c2_109 = arith.constant 2 : index
    %c0_110 = arith.constant 0 : index
    %c0_111 = arith.constant 0 : index
    %109 = vector.load %arg7[%c2_109, %c0_110, %c0_111] : memref<5x256x256xbf16, #tpu.memory_space<vmem>>, vector<1x256x256xbf16>
    %110 = vector.shape_cast %109 : vector<1x256x256xbf16> to vector<256x256xbf16>
    %cst_112 = arith.constant dense<0.000000e+00> : vector<12x256xf32>
    %111 = tpu.matmul %108, %110, %cst_112 {dimension_numbers = #tpu.dot_dimension_numbers<[1], [0], [0], [1], [0, 0, 1, 1], [], []>} : vector<12x256xbf16>, vector<256x256xbf16>, vector<12x256xf32> -> vector<12x256xf32>
    %112 = arith.addf %106, %111 : vector<12x256xf32>
    %c3_113 = arith.constant 3 : index
    %c0_114 = arith.constant 0 : index
    %113 = vector.load %arg23[%c3_113, %c0_114] : memref<16x256xf32, #tpu.memory_space<vmem>>, vector<12x256xf32>
    %114 = arith.truncf %113 : vector<12x256xf32> to vector<12x256xbf16>
    %c3_115 = arith.constant 3 : index
    %c0_116 = arith.constant 0 : index
    %c0_117 = arith.constant 0 : index
    %115 = vector.load %arg7[%c3_115, %c0_116, %c0_117] : memref<5x256x256xbf16, #tpu.memory_space<vmem>>, vector<1x256x256xbf16>
    %116 = vector.shape_cast %115 : vector<1x256x256xbf16> to vector<256x256xbf16>
    %cst_118 = arith.constant dense<0.000000e+00> : vector<12x256xf32>
    %117 = tpu.matmul %114, %116, %cst_118 {dimension_numbers = #tpu.dot_dimension_numbers<[1], [0], [0], [1], [0, 0, 1, 1], [], []>} : vector<12x256xbf16>, vector<256x256xbf16>, vector<12x256xf32> -> vector<12x256xf32>
    %118 = arith.addf %112, %117 : vector<12x256xf32>
    %c4_119 = arith.constant 4 : index
    %c0_120 = arith.constant 0 : index
    %119 = vector.load %arg23[%c4_119, %c0_120] : memref<16x256xf32, #tpu.memory_space<vmem>>, vector<12x256xf32>
    %120 = arith.truncf %119 : vector<12x256xf32> to vector<12x256xbf16>
    %c4_121 = arith.constant 4 : index
    %c0_122 = arith.constant 0 : index
    %c0_123 = arith.constant 0 : index
    %121 = vector.load %arg7[%c4_121, %c0_122, %c0_123] : memref<5x256x256xbf16, #tpu.memory_space<vmem>>, vector<1x256x256xbf16>
    %122 = vector.shape_cast %121 : vector<1x256x256xbf16> to vector<256x256xbf16>
    %cst_124 = arith.constant dense<0.000000e+00> : vector<12x256xf32>
    %123 = tpu.matmul %120, %122, %cst_124 {dimension_numbers = #tpu.dot_dimension_numbers<[1], [0], [0], [1], [0, 0, 1, 1], [], []>} : vector<12x256xbf16>, vector<256x256xbf16>, vector<12x256xf32> -> vector<12x256xf32>
    %124 = arith.addf %118, %123 : vector<12x256xf32>
    %c0_125 = arith.constant 0 : index
    %c0_126 = arith.constant 0 : index
    %125 = vector.load %arg8[%c0_125, %c0_126] : memref<1x256xf32, #tpu.memory_space<vmem>>, vector<1x256xf32>
    %126 = vector.broadcast %125 : vector<1x256xf32> to vector<12x256xf32>
    %127 = arith.addf %124, %126 : vector<12x256xf32>
    %c0_127 = arith.constant 0 : index
    %c0_128 = arith.constant 0 : index
    %128 = vector.load %arg9[%c0_127, %c0_128] : memref<1x256xf32, #tpu.memory_space<vmem>>, vector<1x256xf32>
    %129 = vector.broadcast %128 : vector<1x256xf32> to vector<12x256xf32>
    %130 = arith.mulf %127, %129 : vector<12x256xf32>
    %c0_129 = arith.constant 0 : index
    %c0_130 = arith.constant 0 : index
    %131 = vector.load %arg10[%c0_129, %c0_130] : memref<1x256xf32, #tpu.memory_space<vmem>>, vector<1x256xf32>
    %132 = vector.broadcast %131 : vector<1x256xf32> to vector<12x256xf32>
    %133 = arith.addf %130, %132 : vector<12x256xf32>
    %cst_131 = arith.constant 0.000000e+00 : f32
    %134 = vector.broadcast %cst_131 : f32 to vector<12x256xf32>
    %135 = arith.maximumf %133, %134 : vector<12x256xf32>
    %c0_132 = arith.constant 0 : index
    %c0_133 = arith.constant 0 : index
    %136 = vector.load %arg15[%c0_132, %c0_133] : memref<8x12xbf16, #tpu.memory_space<vmem>>, vector<8x12xbf16>
    %137 = arith.truncf %135 : vector<12x256xf32> to vector<12x256xbf16>
    %cst_134 = arith.constant dense<0.000000e+00> : vector<8x256xf32>
    %138 = tpu.matmul %136, %137, %cst_134 {dimension_numbers = #tpu.dot_dimension_numbers<[1], [0], [0], [1], [0, 0, 1, 1], [], []>} : vector<8x12xbf16>, vector<12x256xbf16>, vector<8x256xf32> -> vector<8x256xf32>
    %139 = vector.extract_strided_slice %138 {offsets = [0, 0], sizes = [2, 256], strides = [1, 1]} : vector<8x256xf32> to vector<2x256xf32>
    %140 = arith.truncf %139 : vector<2x256xf32> to vector<2x256xbf16>
    %c0_135 = arith.constant 0 : index
    %c0_136 = arith.constant 0 : index
    %c0_137 = arith.constant 0 : index
    %141 = vector.load %arg16[%c0_135, %c0_136, %c0_137] : memref<4x256x128xbf16, #tpu.memory_space<vmem>>, vector<1x256x128xbf16>
    %142 = vector.shape_cast %141 : vector<1x256x128xbf16> to vector<256x128xbf16>
    %cst_138 = arith.constant dense<0.000000e+00> : vector<2x128xf32>
    %143 = tpu.matmul %140, %142, %cst_138 {dimension_numbers = #tpu.dot_dimension_numbers<[1], [0], [0], [1], [0, 0, 1, 1], [], []>} : vector<2x256xbf16>, vector<256x128xbf16>, vector<2x128xf32> -> vector<2x128xf32>
    %144 = vector.extract_strided_slice %138 {offsets = [2, 0], sizes = [2, 256], strides = [1, 1]} : vector<8x256xf32> to vector<2x256xf32>
    %145 = arith.truncf %144 : vector<2x256xf32> to vector<2x256xbf16>
    %c1_139 = arith.constant 1 : index
    %c0_140 = arith.constant 0 : index
    %c0_141 = arith.constant 0 : index
    %146 = vector.load %arg16[%c1_139, %c0_140, %c0_141] : memref<4x256x128xbf16, #tpu.memory_space<vmem>>, vector<1x256x128xbf16>
    %147 = vector.shape_cast %146 : vector<1x256x128xbf16> to vector<256x128xbf16>
    %cst_142 = arith.constant dense<0.000000e+00> : vector<2x128xf32>
    %148 = tpu.matmul %145, %147, %cst_142 {dimension_numbers = #tpu.dot_dimension_numbers<[1], [0], [0], [1], [0, 0, 1, 1], [], []>} : vector<2x256xbf16>, vector<256x128xbf16>, vector<2x128xf32> -> vector<2x128xf32>
    %149 = arith.addf %143, %148 : vector<2x128xf32>
    %150 = vector.extract_strided_slice %138 {offsets = [4, 0], sizes = [2, 256], strides = [1, 1]} : vector<8x256xf32> to vector<2x256xf32>
    %151 = arith.truncf %150 : vector<2x256xf32> to vector<2x256xbf16>
    %c2_143 = arith.constant 2 : index
    %c0_144 = arith.constant 0 : index
    %c0_145 = arith.constant 0 : index
    %152 = vector.load %arg16[%c2_143, %c0_144, %c0_145] : memref<4x256x128xbf16, #tpu.memory_space<vmem>>, vector<1x256x128xbf16>
    %153 = vector.shape_cast %152 : vector<1x256x128xbf16> to vector<256x128xbf16>
    %cst_146 = arith.constant dense<0.000000e+00> : vector<2x128xf32>
    %154 = tpu.matmul %151, %153, %cst_146 {dimension_numbers = #tpu.dot_dimension_numbers<[1], [0], [0], [1], [0, 0, 1, 1], [], []>} : vector<2x256xbf16>, vector<256x128xbf16>, vector<2x128xf32> -> vector<2x128xf32>
    %155 = arith.addf %149, %154 : vector<2x128xf32>
    %156 = vector.extract_strided_slice %138 {offsets = [6, 0], sizes = [2, 256], strides = [1, 1]} : vector<8x256xf32> to vector<2x256xf32>
    %157 = arith.truncf %156 : vector<2x256xf32> to vector<2x256xbf16>
    %c3_147 = arith.constant 3 : index
    %c0_148 = arith.constant 0 : index
    %c0_149 = arith.constant 0 : index
    %158 = vector.load %arg16[%c3_147, %c0_148, %c0_149] : memref<4x256x128xbf16, #tpu.memory_space<vmem>>, vector<1x256x128xbf16>
    %159 = vector.shape_cast %158 : vector<1x256x128xbf16> to vector<256x128xbf16>
    %cst_150 = arith.constant dense<0.000000e+00> : vector<2x128xf32>
    %160 = tpu.matmul %157, %159, %cst_150 {dimension_numbers = #tpu.dot_dimension_numbers<[1], [0], [0], [1], [0, 0, 1, 1], [], []>} : vector<2x256xbf16>, vector<256x128xbf16>, vector<2x128xf32> -> vector<2x128xf32>
    %161 = arith.addf %155, %160 : vector<2x128xf32>
    %c0_151 = arith.constant 0 : index
    %c0_152 = arith.constant 0 : index
    %162 = vector.load %arg17[%c0_151, %c0_152] : memref<1x128xf32, #tpu.memory_space<vmem>>, vector<1x128xf32>
    %163 = vector.broadcast %162 : vector<1x128xf32> to vector<2x128xf32>
    %164 = arith.addf %161, %163 : vector<2x128xf32>
    %cst_153 = arith.constant 0.000000e+00 : f32
    %165 = vector.broadcast %cst_153 : f32 to vector<2x128xf32>
    %166 = arith.maximumf %164, %165 : vector<2x128xf32>
    %167 = arith.truncf %166 : vector<2x128xf32> to vector<2x128xbf16>
    %c0_154 = arith.constant 0 : index
    %c0_155 = arith.constant 0 : index
    %168 = vector.load %arg18[%c0_154, %c0_155] : memref<128x1xbf16, #tpu.memory_space<vmem>>, vector<128x1xbf16>
    %cst_156 = arith.constant dense<0.000000e+00> : vector<2x1xf32>
    %169 = tpu.matmul %167, %168, %cst_156 {dimension_numbers = #tpu.dot_dimension_numbers<[1], [0], [0], [1], [0, 0, 1, 1], [], []>} : vector<2x128xbf16>, vector<128x1xbf16>, vector<2x1xf32> -> vector<2x1xf32>
    %c0_157 = arith.constant 0 : index
    %c0_158 = arith.constant 0 : index
    %170 = vector.load %arg19[%c0_157, %c0_158] : memref<1x1xf32, #tpu.memory_space<vmem>>, vector<1x1xf32>
    %171 = vector.broadcast %170 : vector<1x1xf32> to vector<2x1xf32>
    %172 = arith.addf %169, %171 : vector<2x1xf32>
    %c0_159 = arith.constant 0 : index
    %c0_160 = arith.constant 0 : index
    %173 = vector.load %arg20[%c0_159, %c0_160] : memref<2x1xf32, #tpu.memory_space<vmem>>, vector<2x1xf32>
    tpu.vector_store %arg20[%c0_159, %c0_160], %172 {strides = array<i32>} : memref<2x1xf32, #tpu.memory_space<vmem>>, vector<2x1xf32>,
    return
  }
  func.func @transform_0(%arg0: i32) -> (i32, i32) {
    %c0_i32 = arith.constant 0 : i32
    %c0_i32_0 = arith.constant 0 : i32
    return %arg0, %c0_i32 : i32, i32
  }
  func.func @transform_1(%arg0: i32) -> (i32, i32) {
    %c0_i32 = arith.constant 0 : i32
    %c0_i32_0 = arith.constant 0 : i32
    %c0_i32_1 = arith.constant 0 : i32
    return %c0_i32, %c0_i32_0 : i32, i32
  }
  func.func @transform_2(%arg0: i32) -> (i32, i32, i32) {
    %c0_i32 = arith.constant 0 : i32
    %c0_i32_0 = arith.constant 0 : i32
    %c0_i32_1 = arith.constant 0 : i32
    %c0_i32_2 = arith.constant 0 : i32
    return %c0_i32, %c0_i32_0, %c0_i32_1 : i32, i32, i32
  }
  func.func @transform_3(%arg0: i32) -> (i32, i32) {
    %c0_i32 = arith.constant 0 : i32
    %c0_i32_0 = arith.constant 0 : i32
    %c0_i32_1 = arith.constant 0 : i32
    return %c0_i32, %c0_i32_0 : i32, i32
  }
  func.func @transform_4(%arg0: i32) -> (i32, i32, i32) {
    %c0_i32 = arith.constant 0 : i32
    %c0_i32_0 = arith.constant 0 : i32
    %c0_i32_1 = arith.constant 0 : i32
    %c0_i32_2 = arith.constant 0 : i32
    return %c0_i32, %c0_i32_0, %c0_i32_1 : i32, i32, i32
  }
  func.func @transform_5(%arg0: i32) -> (i32, i32) {
    %c0_i32 = arith.constant 0 : i32
    %c0_i32_0 = arith.constant 0 : i32
    %c0_i32_1 = arith.constant 0 : i32
    return %c0_i32, %c0_i32_0 : i32, i32
  }
  func.func @transform_6(%arg0: i32) -> (i32, i32, i32) {
    %c0_i32 = arith.constant 0 : i32
    %c0_i32_0 = arith.constant 0 : i32
    %c0_i32_1 = arith.constant 0 : i32
    %c0_i32_2 = arith.constant 0 : i32
    return %c0_i32, %c0_i32_0, %c0_i32_1 : i32, i32, i32
  }
  func.func @transform_7(%arg0: i32) -> (i32, i32) {
    %c0_i32 = arith.constant 0 : i32
    %c0_i32_0 = arith.constant 0 : i32
    %c0_i32_1 = arith.constant 0 : i32
    return %c0_i32, %c0_i32_0 : i32, i32
  }
  func.func @transform_8(%arg0: i32) -> (i32, i32) {
    %c0_i32 = arith.constant 0 : i32
    %c0_i32_0 = arith.constant 0 : i32
    %c0_i32_1 = arith.constant 0 : i32
    return %c0_i32, %c0_i32_0 : i32, i32
  }
  func.func @transform_9(%arg0: i32) -> (i32, i32) {
    %c0_i32 = arith.constant 0 : i32
    %c0_i32_0 = arith.constant 0 : i32
    %c0_i32_1 = arith.constant 0 : i32
    return %c0_i32, %c0_i32_0 : i32, i32
  }
  func.func @transform_10(%arg0: i32) -> (i32, i32) {
    %c0_i32 = arith.constant 0 : i32
    %c0_i32_0 = arith.constant 0 : i32
    %c0_i32_1 = arith.constant 0 : i32
    return %c0_i32, %c0_i32_0 : i32, i32
  }
  func.func @transform_11(%arg0: i32) -> (i32, i32) {
    %c0_i32 = arith.constant 0 : i32
    %c0_i32_0 = arith.constant 0 : i32
    %c0_i32_1 = arith.constant 0 : i32
    return %c0_i32, %c0_i32_0 : i32, i32
  }
  func.func @transform_12(%arg0: i32) -> (i32, i32) {
    %c0_i32 = arith.constant 0 : i32
    %c0_i32_0 = arith.constant 0 : i32
    %c0_i32_1 = arith.constant 0 : i32
    return %c0_i32, %c0_i32_0 : i32, i32
  }
  func.func @transform_13(%arg0: i32) -> (i32, i32) {
    %c0_i32 = arith.constant 0 : i32
    %c0_i32_0 = arith.constant 0 : i32
    %c0_i32_1 = arith.constant 0 : i32
    return %c0_i32, %c0_i32_0 : i32, i32
  }
  func.func @transform_14(%arg0: i32) -> (i32, i32) {
    %c0_i32 = arith.constant 0 : i32
    %c0_i32_0 = arith.constant 0 : i32
    %c0_i32_1 = arith.constant 0 : i32
    return %c0_i32, %c0_i32_0 : i32, i32
  }
  func.func @transform_15(%arg0: i32) -> (i32, i32, i32) {
    %c0_i32 = arith.constant 0 : i32
    %c0_i32_0 = arith.constant 0 : i32
    %c0_i32_1 = arith.constant 0 : i32
    %c0_i32_2 = arith.constant 0 : i32
    return %c0_i32, %c0_i32_0, %c0_i32_1 : i32, i32, i32
  }
  func.func @transform_16(%arg0: i32) -> (i32, i32) {
    %c0_i32 = arith.constant 0 : i32
    %c0_i32_0 = arith.constant 0 : i32
    %c0_i32_1 = arith.constant 0 : i32
    return %c0_i32, %c0_i32_0 : i32, i32
  }
  func.func @transform_17(%arg0: i32) -> (i32, i32) {
    %c0_i32 = arith.constant 0 : i32
    %c0_i32_0 = arith.constant 0 : i32
    %c0_i32_1 = arith.constant 0 : i32
    return %c0_i32, %c0_i32_0 : i32, i32
  }
  func.func @transform_18(%arg0: i32) -> (i32, i32) {
    %c0_i32 = arith.constant 0 : i32
    %c0_i32_0 = arith.constant 0 : i32
    %c0_i32_1 = arith.constant 0 : i32
    return %c0_i32, %c0_i32_0 : i32, i32
  }
  func.func @transform_19(%arg0: i32) -> (i32, i32) {
    %c0_i32 = arith.constant 0 : i32
    %c0_i32_0 = arith.constant 0 : i32
    return %arg0, %c0_i32 : i32, i32
  }
}

</mosaic_0001>

<llo_original>
// kernel: cnn_forward.1
$region0: #{cnn_forward.1}
  #allocation0 [shape = 'u32[]', space=smem, size = 0x4, offset = 0x4, fixed_abs, tag = 'smem constant byte address 0x4 - core index']
  #allocation1 [shape = 'u32[144,128]{1,0:T(1,128)}', space=vmem, size = 0x12000, scoped, tag = 'internal scratch']
  #allocation2 [shape = 'f32[52,128]{1,0:T(8,128)}', space=vmem, size = 0x7000, scoped, tag = 'scratch operand']
  #allocation3 [shape = 'f32[28,128]{1,0:T(8,128)}', space=vmem, size = 0x4000, scoped, tag = 'scratch operand']
  #allocation4 [shape = 'f32[16,256]{1,0:T(8,128)}', space=vmem, size = 0x4000, scoped, tag = 'scratch operand']
  #allocation5 [shape = 'f32[1,1]{1,0:T(1,128)S(1)}', space=vmem, size = 0x200, scoped, tag = 'scoped memory for cnn_forward.1']
  %s0 = inlined_call_operand.vmem [shape: bf16[48,32], index: 0, kind: input, shape index: {}]
  %s1 = inlined_call_operand.vmem [shape: bf16[32,128], index: 1, kind: input, shape index: {}]
  %s2 = inlined_call_operand.vmem [shape: bf16[5,128,128], index: 2, kind: input, shape index: {}]
  %s3 = inlined_call_operand.vmem [shape: f32[1,128], index: 3, kind: input, shape index: {}]
  %s4 = inlined_call_operand.hbm [shape: bf16[5,128,256], index: 4, kind: input, shape index: {}]
  %s5 = inlined_call_operand.vmem [shape: f32[1,256], index: 5, kind: input, shape index: {}]
  %s6 = inlined_call_operand.hbm [shape: bf16[5,256,256], index: 6, kind: input, shape index: {}]
  %s7 = inlined_call_operand.vmem [shape: f32[1,256], index: 7, kind: input, shape index: {}]
  %s8 = inlined_call_operand.vmem [shape: f32[1,256], index: 8, kind: input, shape index: {}]
  %s9 = inlined_call_operand.vmem [shape: f32[1,256], index: 9, kind: input, shape index: {}]
  %s10 = inlined_call_operand.vmem [shape: bf16[24,48], index: 10, kind: input, shape index: {}]
  %s11 = inlined_call_operand.vmem [shape: bf16[24,48], index: 11, kind: input, shape index: {}]
  %s12 = inlined_call_operand.vmem [shape: bf16[12,24], index: 12, kind: input, shape index: {}]
  %s13 = inlined_call_operand.vmem [shape: bf16[12,24], index: 13, kind: input, shape index: {}]
  %s14 = inlined_call_operand.vmem [shape: bf16[8,12], index: 14, kind: input, shape index: {}]
  %s15 = inlined_call_operand.hbm [shape: bf16[4,256,128], index: 15, kind: input, shape index: {}]
  %s16 = inlined_call_operand.vmem [shape: f32[1,128], index: 16, kind: input, shape index: {}]
  %s17 = inlined_call_operand.vmem [shape: bf16[128,1], index: 17, kind: input, shape index: {}]
  %s18 = inlined_call_operand.<no memory space> [shape: f32[1,1], index: 18, kind: input, shape index: {}]
  %s19 = inlined_call_operand.vmem [shape: f32[2,1], index: 19, kind: output, shape index: {}]
  %s20 = sld [smem:[#allocation0]]
  $region98: #{cnn_forward.1} parent=0
    _
  %s22 = ssub.s32 1, %s20
  %s23 = scalar_select 0, %s22, %s20
  %v24 = vstv %s18
  %25 = vst [vmem:[#allocation5] sm:$0x1] %v24
  $region1: #{cnn_forward.1} parent=0
    #allocation6 [shape = 'u8[327680]{0}', space=vmem, size = 0x50000, scoped, tag = 'input window, operand 4, single buffered']
    #allocation7 [shape = 's32[1]{0}', space=sflag, size = 0x4, scoped, tag = 'scoped memory for cnn_forward.1']
    #allocation8 [shape = 'u8[655360]{0}', space=vmem, size = 0xa0000, scoped, tag = 'input window, operand 6, single buffered']
    #allocation9 [shape = 's32[1]{0}', space=sflag, size = 0x4, scoped, tag = 'scoped memory for cnn_forward.1']
    #allocation10 [shape = 'u8[262144]{0}', space=vmem, size = 0x40000, scoped, tag = 'input window, operand 15, single buffered']
    %26 = vsyncpa [#allocation7], 0
    %27 = vsyncpa [#allocation9], 0
    // Predicated region
    $region2: #{cnn_forward.1} parent=1 // pred_check
      _
    $region3: #{cnn_forward.1} parent=1 // pred_check_branch
      %29 = sbr.rel (0) target = $region5
    $region4: #{cnn_forward.1} parent=1 // pred_region
      _
    $region5: #{cnn_forward.1} parent=1 // pred_fallthru
      _
    // Predicated region
    $region6: #{cnn_forward.1} parent=1 // pred_check
      _
    $region7: #{cnn_forward.1} parent=1 // pred_check_branch
      %31 = sbr.rel (0) target = $region9
    $region8: #{cnn_forward.1} parent=1 // pred_region
      _
    $region9: #{cnn_forward.1} parent=1 // pred_fallthru
      _
    // Predicated region
    $region10: #{cnn_forward.1} parent=1 // pred_check
      _
    $region11: #{cnn_forward.1} parent=1 // pred_check_branch
      %33 = sbr.rel (0) target = $region13
    $region12: #{cnn_forward.1} parent=1 // pred_region
      _
    $region13: #{cnn_forward.1} parent=1 // pred_fallthru
      _
    // Predicated region
    $region14: #{cnn_forward.1} parent=1 // pred_check
      _
    $region15: #{cnn_forward.1} parent=1 // pred_check_branch
      %35 = sbr.rel (0) target = $region17
    $region16: #{cnn_forward.1} parent=1 // pred_region
      _
    $region17: #{cnn_forward.1} parent=1 // pred_fallthru
      _
    // Predicated region
    $region18: #{cnn_forward.1} parent=1 // pred_check
      _
    $region19: #{cnn_forward.1} parent=1 // pred_check_branch
      %37 = sbr.rel (0) target = $region21
    $region20: #{cnn_forward.1} parent=1 // pred_region
      %s39 = ssub.s32 10240, 10240
      %40 = vsyncadd [#allocation7], %s39
      %s41 = sshll.u32 [#allocation6], 4
      %s42 = int_to_ptr.vmem [resolvable:$true] %s41
      %47 = dma.hbm_to_vmem [thread:$0]  %s4, 10240, %s42, [#allocation7], 128, 128, 8
    $region21: #{cnn_forward.1} parent=1 // pred_fallthru
      _
    // Predicated region
    $region22: #{cnn_forward.1} parent=1 // pred_check
      _
    $region23: #{cnn_forward.1} parent=1 // pred_check_branch
      %49 = sbr.rel (0) target = $region25
    $region24: #{cnn_forward.1} parent=1 // pred_region
      _
    $region25: #{cnn_forward.1} parent=1 // pred_fallthru
      _
    // Predicated region
    $region26: #{cnn_forward.1} parent=1 // pred_check
      _
    $region27: #{cnn_forward.1} parent=1 // pred_check_branch
      %51 = sbr.rel (0) target = $region29
    $region28: #{cnn_forward.1} parent=1 // pred_region
      %s53 = ssub.s32 20480, 20480
      %54 = vsyncadd [#allocation9], %s53
      %s55 = sshll.u32 [#allocation8], 4
      %s56 = int_to_ptr.vmem [resolvable:$true] %s55
      %61 = dma.hbm_to_vmem [thread:$0]  %s6, 20480, %s56, [#allocation9], 128, 128, 8
    $region29: #{cnn_forward.1} parent=1 // pred_fallthru
      _
    // Predicated region
    $region30: #{cnn_forward.1} parent=1 // pred_check
      _
    $region31: #{cnn_forward.1} parent=1 // pred_check_branch
      %63 = sbr.rel (0) target = $region33
    $region32: #{cnn_forward.1} parent=1 // pred_region
      _
    $region33: #{cnn_forward.1} parent=1 // pred_fallthru
      _
    // Predicated region
    $region34: #{cnn_forward.1} parent=1 // pred_check
      _
    $region35: #{cnn_forward.1} parent=1 // pred_check_branch
      %65 = sbr.rel (0) target = $region37
    $region36: #{cnn_forward.1} parent=1 // pred_region
      _
    $region37: #{cnn_forward.1} parent=1 // pred_fallthru
      _
    // Predicated region
    $region38: #{cnn_forward.1} parent=1 // pred_check
      _
    $region39: #{cnn_forward.1} parent=1 // pred_check_branch
      %67 = sbr.rel (0) target = $region41
    $region40: #{cnn_forward.1} parent=1 // pred_region
      _
    $region41: #{cnn_forward.1} parent=1 // pred_fallthru
      _
    // Predicated region
    $region42: #{cnn_forward.1} parent=1 // pred_check
      _
    $region43: #{cnn_forward.1} parent=1 // pred_check_branch
      %69 = sbr.rel (0) target = $region45
    $region44: #{cnn_forward.1} parent=1 // pred_region
      _
    $region45: #{cnn_forward.1} parent=1 // pred_fallthru
      _
    // Predicated region
    $region46: #{cnn_forward.1} parent=1 // pred_check
      _
    $region47: #{cnn_forward.1} parent=1 // pred_check_branch
      %71 = sbr.rel (0) target = $region49
    $region48: #{cnn_forward.1} parent=1 // pred_region
      _
    $region49: #{cnn_forward.1} parent=1 // pred_fallthru
      _
    // Predicated region
    $region50: #{cnn_forward.1} parent=1 // pred_check
      _
    $region51: #{cnn_forward.1} parent=1 // pred_check_branch
      %73 = sbr.rel (0) target = $region53
    $region52: #{cnn_forward.1} parent=1 // pred_region
      _
    $region53: #{cnn_forward.1} parent=1 // pred_fallthru
      _
    // Predicated region
    $region54: #{cnn_forward.1} parent=1 // pred_check
      _
    $region55: #{cnn_forward.1} parent=1 // pred_check_branch
      %75 = sbr.rel (0) target = $region57
    $region56: #{cnn_forward.1} parent=1 // pred_region
      _
    $region57: #{cnn_forward.1} parent=1 // pred_fallthru
      _
    // Predicated region
    $region58: #{cnn_forward.1} parent=1 // pred_check
      _
    $region59: #{cnn_forward.1} parent=1 // pred_check_branch
      %77 = sbr.rel (0) target = $region61
    $region60: #{cnn_forward.1} parent=1 // pred_region
      _
    $region61: #{cnn_forward.1} parent=1 // pred_fallthru
      _
    // Predicated region
    $region62: #{cnn_forward.1} parent=1 // pred_check
      _
    $region63: #{cnn_forward.1} parent=1 // pred_check_branch
      %79 = sbr.rel (0) target = $region65
    $region64: #{cnn_forward.1} parent=1 // pred_region
      %s81 = ssub.s32 8192, 8192
      %82 = vsyncadd [#allocation9], %s81
      %s83 = sshll.u32 [#allocation10], 4
      %s84 = int_to_ptr.vmem [resolvable:$true] %s83
      %89 = dma.hbm_to_vmem [thread:$0]  %s15, 8192, %s84, [#allocation9], 64, 64, 4
    $region65: #{cnn_forward.1} parent=1 // pred_fallthru
      _
    // Predicated region
    $region66: #{cnn_forward.1} parent=1 // pred_check
      _
    $region67: #{cnn_forward.1} parent=1 // pred_check_branch
      %91 = sbr.rel (0) target = $region69
    $region68: #{cnn_forward.1} parent=1 // pred_region
      _
    $region69: #{cnn_forward.1} parent=1 // pred_fallthru
      _
    // Predicated region
    $region70: #{cnn_forward.1} parent=1 // pred_check
      _
    $region71: #{cnn_forward.1} parent=1 // pred_check_branch
      %93 = sbr.rel (0) target = $region73
    $region72: #{cnn_forward.1} parent=1 // pred_region
      _
    $region73: #{cnn_forward.1} parent=1 // pred_fallthru
      _
    // Predicated region
    $region74: #{cnn_forward.1} parent=1 // pred_check
      _
    $region75: #{cnn_forward.1} parent=1 // pred_check_branch
      %95 = sbr.rel (0) target = $region77
    $region76: #{cnn_forward.1} parent=1 // pred_region
      _
    $region77: #{cnn_forward.1} parent=1 // pred_fallthru
      _
    // Predicated region
    $region78: #{cnn_forward.1} parent=1 // pred_check
      _
    $region79: #{cnn_forward.1} parent=1 // pred_check_branch
      %97 = sbr.rel (0) target = $region81
    $region80: #{cnn_forward.1} parent=1 // pred_region
      %98 = dma.done [#allocation7], 10240
    $region81: #{cnn_forward.1} parent=1 // pred_fallthru
      _
    // Predicated region
    $region82: #{cnn_forward.1} parent=1 // pred_check
      _
    $region83: #{cnn_forward.1} parent=1 // pred_check_branch
      %100 = sbr.rel (0) target = $region85
    $region84: #{cnn_forward.1} parent=1 // pred_region
      %101 = dma.done [#allocation9], 20480
    $region85: #{cnn_forward.1} parent=1 // pred_fallthru
      _
    // Predicated region
    $region86: #{cnn_forward.1} parent=1 // pred_check
      _
    $region87: #{cnn_forward.1} parent=1 // pred_check_branch
      %103 = sbr.rel (0) target = $region89
    $region88: #{cnn_forward.1} parent=1 // pred_region
      %104 = dma.done [#allocation9], 8192
    $region89: #{cnn_forward.1} parent=1 // pred_fallthru
      _
    %v106 = vld [vmem:[%s0] sm:$0xf]
    %v107 = vld [vmem:[%s0 + $0x4] sm:$0xf]
    %v108 = vld [vmem:[%s0 + $0x8] sm:$0xf]
    %v109 = vld [vmem:[%s0 + $0xc] sm:$0xf]
    %v110 = vld [vmem:[%s0 + $0x10] sm:$0xf]
    %v111 = vld [vmem:[%s0 + $0x14] sm:$0xf]
    %v112 = vld [vmem:[%s1] sm:$0xf]
    %v113 = vld [vmem:[%s1 + $0x4] sm:$0xf]
    %v114 = vld [vmem:[%s1 + $0x8] sm:$0xf]
    %v115 = vld [vmem:[%s1 + $0xc] sm:$0xf]
    %v122 = vunpack.c.l.b16 %v106
    %v123 = vunpack.c.l.b16 %v107
    %v124 = vunpack.c.l.b16 %v108
    %v125 = vunpack.c.l.b16 %v109
    %v126 = vunpack.c.l.b16 %v110
    %v127 = vunpack.c.l.b16 %v111
    %v128 = vpack.c.b16 %v123, %v122
    %v129 = vpack.c.b16 %v125, %v124
    %v130 = vpack.c.b16 %v127, %v126
    %v135 = vunpack.c.l.b16 %v112
    %v136 = vunpack.c.l.b16 %v113
    %v137 = vunpack.c.l.b16 %v114
    %v138 = vunpack.c.l.b16 %v115
    %v139 = vpack.c.b16 %v136, %v135
    %v140 = vpack.c.b16 %v138, %v137
    %vm143 = vcmask 261120
    %v145 = vsel %vm143, %v128, 0
    %v148 = vsel %vm143, %v129, 0
    %v151 = vsel %vm143, %v130, 0
    %153 = vmatprep.subr.bf16.mxu0 0
    %154 = vmatpush1.bf16.msra.mxu0 %v139
    %155 = vmatprep.subr.bf16.mxu0 0
    %156 = vmatpush1.bf16.msra.mxu0 %v140
    %157 = vmatprep.subr.bf16.mxu0 0
    %158 = vmatpush1.bf16.msra.mxu0 0
    %159 = vmatprep.subr.bf16.mxu0 0
    %160 = vmatpush1.bf16.msra.mxu0 0
    %161 = vmatprep.subr.bf16.mxu0 0
    %162 = vmatpush1.bf16.msra.mxu0 0
    %163 = vmatprep.subr.bf16.mxu0 0
    %164 = vmatpush1.bf16.msra.mxu0 0
    %165 = vmatprep.subr.bf16.mxu0 0
    %166 = vmatpush1.bf16.msra.mxu0 0
    %167 = vmatprep.subr.bf16.mxu0 0
    %168 = vmatpush1.bf16.msra.mxu0 0
    %169 = vmatprep.subr.bf16.mxu0 0
    %170 = vmatpush1.bf16.msra.mxu0 0
    %171 = vmatprep.subr.bf16.mxu0 0
    %172 = vmatpush1.bf16.msra.mxu0 0
    %173 = vmatprep.subr.bf16.mxu0 0
    %174 = vmatpush1.bf16.msra.mxu0 0
    %175 = vmatprep.subr.bf16.mxu0 0
    %176 = vmatpush1.bf16.msra.mxu0 0
    %177 = vmatprep.subr.bf16.mxu0 0
    %178 = vmatpush1.bf16.msra.mxu0 0
    %179 = vmatprep.subr.bf16.mxu0 0
    %180 = vmatpush1.bf16.msra.mxu0 0
    %181 = vmatprep.subr.bf16.mxu0 0
    %182 = vmatpush1.bf16.msra.mxu0 0
    %183 = vmatprep.subr.bf16.mxu0 0
    %184 = vmatpush1.bf16.msra.mxu0 0
    %185 = vmatprep.mubr.bf16.mxu0 0
    %186 = vmatmul.mubr.bf16.gmra.mrb[0].mxu0 %v145
    %v187 = vpop.f32.mrb[0].mxu0
    %v188 = vadd.f32 0.0, %v187
    %v189 = vpop.f32.mrb[0].mxu0
    %v190 = vpop.f32.mrb[0].mxu0
    %v191 = vadd.f32 0.0, %v190
    %v192 = vpop.f32.mrb[0].mxu0
    %193 = vmatprep.mubr.bf16.mxu0 0
    %194 = vmatmul.mubr.bf16.gmra.mrb[0].mxu0 %v148
    %v195 = vpop.f32.mrb[0].mxu0
    %v196 = vadd.f32 0.0, %v195
    %v197 = vpop.f32.mrb[0].mxu0
    %v198 = vpop.f32.mrb[0].mxu0
    %v199 = vadd.f32 0.0, %v198
    %v200 = vpop.f32.mrb[0].mxu0
    %201 = vmatprep.mubr.bf16.mxu0 0
    %202 = vmatmul.mubr.bf16.gmra.mrb[0].mxu0 %v151
    %v203 = vpop.f32.mrb[0].mxu0
    %v204 = vadd.f32 0.0, %v203
    %v205 = vpop.f32.mrb[0].mxu0
    %v206 = vpop.f32.mrb[0].mxu0
    %v207 = vadd.f32 0.0, %v206
    %v208 = vpop.f32.mrb[0].mxu0
    %209 = vdwg.mxu0
    %v210 = vmax.f32 %v188, 0.0
    %v211 = vmax.f32 %v191, 0.0
    %v212 = vmax.f32 %v196, 0.0
    %v213 = vmax.f32 %v199, 0.0
    %v214 = vmax.f32 %v204, 0.0
    %v215 = vmax.f32 %v207, 0.0
    %216 = vst [vmem:[#allocation2] sm:$0x3] 0.0
    %217 = vst [vmem:[#allocation2 + $0x32] sm:$0x3] 0.0
    %218 = vst [vmem:[#allocation2 + $0x2] sm:$0xff] %v210
    %219 = vst [vmem:[#allocation2 + $0xa] sm:$0xff] %v211
    %220 = vst [vmem:[#allocation2 + $0x12] sm:$0xff] %v212
    %221 = vst [vmem:[#allocation2 + $0x1a] sm:$0xff] %v213
    %222 = vst [vmem:[#allocation2 + $0x22] sm:$0xff] %v214
    %223 = vst [vmem:[#allocation2 + $0x2a] sm:$0xff] %v215
    %v224 = vld [vmem:[#allocation2] sm:$0xff]
    %v225 = vld [vmem:[#allocation2 + $0x8] sm:$0xff]
    %v226 = vld [vmem:[#allocation2 + $0x10] sm:$0xff]
    %v227 = vld [vmem:[#allocation2 + $0x18] sm:$0xff]
    %v228 = vld [vmem:[#allocation2 + $0x20] sm:$0xff]
    %v229 = vld [vmem:[#allocation2 + $0x28] sm:$0xff]
    %v230 = vpack.c.bf16 %v225, %v224
    %v231 = vpack.c.bf16 %v227, %v226
    %v232 = vpack.c.bf16 %v229, %v228
    %v233 = vld [vmem:[%s2] sm:$0xf]
    %v234 = vld [vmem:[%s2 + $0x4] sm:$0xf]
    %v235 = vld [vmem:[%s2 + $0x8] sm:$0xf]
    %v236 = vld [vmem:[%s2 + $0xc] sm:$0xf]
    %v237 = vld [vmem:[%s2 + $0x10] sm:$0xf]
    %v238 = vld [vmem:[%s2 + $0x14] sm:$0xf]
    %v239 = vld [vmem:[%s2 + $0x18] sm:$0xf]
    %v240 = vld [vmem:[%s2 + $0x1c] sm:$0xf]
    %v241 = vld [vmem:[%s2 + $0x20] sm:$0xf]
    %v242 = vld [vmem:[%s2 + $0x24] sm:$0xf]
    %v243 = vld [vmem:[%s2 + $0x28] sm:$0xf]
    %v244 = vld [vmem:[%s2 + $0x2c] sm:$0xf]
    %v245 = vld [vmem:[%s2 + $0x30] sm:$0xf]
    %v246 = vld [vmem:[%s2 + $0x34] sm:$0xf]
    %v247 = vld [vmem:[%s2 + $0x38] sm:$0xf]
    %v248 = vld [vmem:[%s2 + $0x3c] sm:$0xf]
    %v249 = vld [vmem:[#allocation2 + $0x1] sm:$0xff]
    %v250 = vld [vmem:[#allocation2 + $0x9] sm:$0xff]
    %v251 = vld [vmem:[#allocation2 + $0x11] sm:$0xff]
    %v252 = vld [vmem:[#allocation2 + $0x19] sm:$0xff]
    %v253 = vld [vmem:[#allocation2 + $0x21] sm:$0xff]
    %v254 = vld [vmem:[#allocation2 + $0x29] sm:$0xff]
    %v255 = vpack.c.bf16 %v250, %v249
    %v256 = vpack.c.bf16 %v252, %v251
    %v257 = vpack.c.bf16 %v254, %v253
    %s258 = scalar_lea.vmem %s2, 64
    %v259 = vld [vmem:[%s258] sm:$0xf]
    %v260 = vld [vmem:[%s258 + $0x4] sm:$0xf]
    %v261 = vld [vmem:[%s258 + $0x8] sm:$0xf]
    %v262 = vld [vmem:[%s258 + $0xc] sm:$0xf]
    %v263 = vld [vmem:[%s258 + $0x10] sm:$0xf]
    %v264 = vld [vmem:[%s258 + $0x14] sm:$0xf]
    %v265 = vld [vmem:[%s258 + $0x18] sm:$0xf]
    %v266 = vld [vmem:[%s258 + $0x1c] sm:$0xf]
    %v267 = vld [vmem:[%s258 + $0x20] sm:$0xf]
    %v268 = vld [vmem:[%s258 + $0x24] sm:$0xf]
    %v269 = vld [vmem:[%s258 + $0x28] sm:$0xf]
    %v270 = vld [vmem:[%s258 + $0x2c] sm:$0xf]
    %v271 = vld [vmem:[%s258 + $0x30] sm:$0xf]
    %v272 = vld [vmem:[%s258 + $0x34] sm:$0xf]
    %v273 = vld [vmem:[%s258 + $0x38] sm:$0xf]
    %v274 = vld [vmem:[%s258 + $0x3c] sm:$0xf]
    %v291 = vunpack.c.l.b16 %v259
    %v292 = vunpack.c.l.b16 %v260
    %v293 = vunpack.c.l.b16 %v261
    %v294 = vunpack.c.l.b16 %v262
    %v295 = vunpack.c.l.b16 %v263
    %v296 = vunpack.c.l.b16 %v264
    %v297 = vunpack.c.l.b16 %v265
    %v298 = vunpack.c.l.b16 %v266
    %v299 = vunpack.c.l.b16 %v267
    %v300 = vunpack.c.l.b16 %v268
    %v301 = vunpack.c.l.b16 %v269
    %v302 = vunpack.c.l.b16 %v270
    %v303 = vunpack.c.l.b16 %v271
    %v304 = vunpack.c.l.b16 %v272
    %v305 = vunpack.c.l.b16 %v273
    %v306 = vunpack.c.l.b16 %v274
    %v307 = vpack.c.b16 %v292, %v291
    %v308 = vpack.c.b16 %v294, %v293
    %v309 = vpack.c.b16 %v296, %v295
    %v310 = vpack.c.b16 %v298, %v297
    %v311 = vpack.c.b16 %v300, %v299
    %v312 = vpack.c.b16 %v302, %v301
    %v313 = vpack.c.b16 %v304, %v303
    %v314 = vpack.c.b16 %v306, %v305
    %323 = vmatprep.subr.bf16.mxu0 0
    %324 = vmatpush1.bf16.msra.mxu0 %v307
    %325 = vmatprep.subr.bf16.mxu0 0
    %326 = vmatpush1.bf16.msra.mxu0 %v308
    %327 = vmatprep.subr.bf16.mxu0 0
    %328 = vmatpush1.bf16.msra.mxu0 %v309
    %329 = vmatprep.subr.bf16.mxu0 0
    %330 = vmatpush1.bf16.msra.mxu0 %v310
    %331 = vmatprep.subr.bf16.mxu0 0
    %332 = vmatpush1.bf16.msra.mxu0 %v311
    %333 = vmatprep.subr.bf16.mxu0 0
    %334 = vmatpush1.bf16.msra.mxu0 %v312
    %335 = vmatprep.subr.bf16.mxu0 0
    %336 = vmatpush1.bf16.msra.mxu0 %v313
    %337 = vmatprep.subr.bf16.mxu0 0
    %338 = vmatpush1.bf16.msra.mxu0 %v314
    %339 = vmatprep.subr.bf16.mxu0 0
    %340 = vmatpush1.bf16.msra.mxu0 0
    %341 = vmatprep.subr.bf16.mxu0 0
    %342 = vmatpush1.bf16.msra.mxu0 0
    %343 = vmatprep.subr.bf16.mxu0 0
    %344 = vmatpush1.bf16.msra.mxu0 0
    %345 = vmatprep.subr.bf16.mxu0 0
    %346 = vmatpush1.bf16.msra.mxu0 0
    %347 = vmatprep.subr.bf16.mxu0 0
    %348 = vmatpush1.bf16.msra.mxu0 0
    %349 = vmatprep.subr.bf16.mxu0 0
    %350 = vmatpush1.bf16.msra.mxu0 0
    %351 = vmatprep.subr.bf16.mxu0 0
    %352 = vmatpush1.bf16.msra.mxu0 0
    %353 = vmatprep.subr.bf16.mxu0 0
    %354 = vmatpush1.bf16.msra.mxu0 0
    %355 = vmatprep.mubr.bf16.mxu0 0
    %356 = vmatmul.mubr.bf16.gmra.mrb[0].mxu0 %v255
    %v357 = vpop.f32.mrb[0].mxu0
    %v358 = vadd.f32 0.0, %v357
    %v359 = vpop.f32.mrb[0].mxu0
    %v360 = vpop.f32.mrb[0].mxu0
    %v361 = vadd.f32 0.0, %v360
    %v362 = vpop.f32.mrb[0].mxu0
    %363 = vmatprep.mubr.bf16.mxu0 0
    %364 = vmatmul.mubr.bf16.gmra.mrb[0].mxu0 %v256
    %v365 = vpop.f32.mrb[0].mxu0
    %v366 = vadd.f32 0.0, %v365
    %v367 = vpop.f32.mrb[0].mxu0
    %v368 = vpop.f32.mrb[0].mxu0
    %v369 = vadd.f32 0.0, %v368
    %v370 = vpop.f32.mrb[0].mxu0
    %371 = vmatprep.mubr.bf16.mxu0 0
    %372 = vmatmul.mubr.bf16.gmra.mrb[0].mxu0 %v257
    %v373 = vpop.f32.mrb[0].mxu0
    %v374 = vadd.f32 0.0, %v373
    %v375 = vpop.f32.mrb[0].mxu0
    %v376 = vpop.f32.mrb[0].mxu0
    %v377 = vadd.f32 0.0, %v376
    %v378 = vpop.f32.mrb[0].mxu0
    %379 = vdwg.mxu0
    %v396 = vunpack.c.l.b16 %v233
    %v397 = vunpack.c.l.b16 %v234
    %v398 = vunpack.c.l.b16 %v235
    %v399 = vunpack.c.l.b16 %v236
    %v400 = vunpack.c.l.b16 %v237
    %v401 = vunpack.c.l.b16 %v238
    %v402 = vunpack.c.l.b16 %v239
    %v403 = vunpack.c.l.b16 %v240
    %v404 = vunpack.c.l.b16 %v241
    %v405 = vunpack.c.l.b16 %v242
    %v406 = vunpack.c.l.b16 %v243
    %v407 = vunpack.c.l.b16 %v244
    %v408 = vunpack.c.l.b16 %v245
    %v409 = vunpack.c.l.b16 %v246
    %v410 = vunpack.c.l.b16 %v247
    %v411 = vunpack.c.l.b16 %v248
    %v412 = vpack.c.b16 %v397, %v396
    %v413 = vpack.c.b16 %v399, %v398
    %v414 = vpack.c.b16 %v401, %v400
    %v415 = vpack.c.b16 %v403, %v402
    %v416 = vpack.c.b16 %v405, %v404
    %v417 = vpack.c.b16 %v407, %v406
    %v418 = vpack.c.b16 %v409, %v408
    %v419 = vpack.c.b16 %v411, %v410
    %428 = vmatprep.subr.bf16.mxu0 0
    %429 = vmatpush1.bf16.msra.mxu0 %v412
    %430 = vmatprep.subr.bf16.mxu0 0
    %431 = vmatpush1.bf16.msra.mxu0 %v413
    %432 = vmatprep.subr.bf16.mxu0 0
    %433 = vmatpush1.bf16.msra.mxu0 %v414
    %434 = vmatprep.subr.bf16.mxu0 0
    %435 = vmatpush1.bf16.msra.mxu0 %v415
    %436 = vmatprep.subr.bf16.mxu0 0
    %437 = vmatpush1.bf16.msra.mxu0 %v416
    %438 = vmatprep.subr.bf16.mxu0 0
    %439 = vmatpush1.bf16.msra.mxu0 %v417
    %440 = vmatprep.subr.bf16.mxu0 0
    %441 = vmatpush1.bf16.msra.mxu0 %v418
    %442 = vmatprep.subr.bf16.mxu0 0
    %443 = vmatpush1.bf16.msra.mxu0 %v419
    %444 = vmatprep.subr.bf16.mxu0 0
    %445 = vmatpush1.bf16.msra.mxu0 0
    %446 = vmatprep.subr.bf16.mxu0 0
    %447 = vmatpush1.bf16.msra.mxu0 0
    %448 = vmatprep.subr.bf16.mxu0 0
    %449 = vmatpush1.bf16.msra.mxu0 0
    %450 = vmatprep.subr.bf16.mxu0 0
    %451 = vmatpush1.bf16.msra.mxu0 0
    %452 = vmatprep.subr.bf16.mxu0 0
    %453 = vmatpush1.bf16.msra.mxu0 0
    %454 = vmatprep.subr.bf16.mxu0 0
    %455 = vmatpush1.bf16.msra.mxu0 0
    %456 = vmatprep.subr.bf16.mxu0 0
    %457 = vmatpush1.bf16.msra.mxu0 0
    %458 = vmatprep.subr.bf16.mxu0 0
    %459 = vmatpush1.bf16.msra.mxu0 0
    %460 = vmatprep.mubr.bf16.mxu0 0
    %461 = vmatmul.mubr.bf16.gmra.mrb[0].mxu0 %v230
    %v462 = vpop.f32.mrb[0].mxu0
    %v463 = vadd.f32 %v358, %v462
    %v464 = vpop.f32.mrb[0].mxu0
    %v465 = vpop.f32.mrb[0].mxu0
    %v466 = vadd.f32 %v361, %v465
    %v467 = vpop.f32.mrb[0].mxu0
    %468 = vmatprep.mubr.bf16.mxu0 0
    %469 = vmatmul.mubr.bf16.gmra.mrb[0].mxu0 %v231
    %v470 = vpop.f32.mrb[0].mxu0
    %v471 = vadd.f32 %v366, %v470
    %v472 = vpop.f32.mrb[0].mxu0
    %v473 = vpop.f32.mrb[0].mxu0
    %v474 = vadd.f32 %v369, %v473
    %v475 = vpop.f32.mrb[0].mxu0
    %476 = vmatprep.mubr.bf16.mxu0 0
    %477 = vmatmul.mubr.bf16.gmra.mrb[0].mxu0 %v232
    %v478 = vpop.f32.mrb[0].mxu0
    %v479 = vadd.f32 %v374, %v478
    %v480 = vpop.f32.mrb[0].mxu0
    %v481 = vpop.f32.mrb[0].mxu0
    %v482 = vadd.f32 %v377, %v481
    %v483 = vpop.f32.mrb[0].mxu0
    %484 = vdwg.mxu0
    %v485 = vld [vmem:[#allocation2 + $0x2] sm:$0xff]
    %v486 = vld [vmem:[#allocation2 + $0xa] sm:$0xff]
    %v487 = vld [vmem:[#allocation2 + $0x12] sm:$0xff]
    %v488 = vld [vmem:[#allocation2 + $0x1a] sm:$0xff]
    %v489 = vld [vmem:[#allocation2 + $0x22] sm:$0xff]
    %v490 = vld [vmem:[#allocation2 + $0x2a] sm:$0xff]
    %v491 = vpack.c.bf16 %v486, %v485
    %v492 = vpack.c.bf16 %v488, %v487
    %v493 = vpack.c.bf16 %v490, %v489
    %s494 = scalar_lea.vmem %s2, 128
    %v495 = vld [vmem:[%s494] sm:$0xf]
    %v496 = vld [vmem:[%s494 + $0x4] sm:$0xf]
    %v497 = vld [vmem:[%s494 + $0x8] sm:$0xf]
    %v498 = vld [vmem:[%s494 + $0xc] sm:$0xf]
    %v499 = vld [vmem:[%s494 + $0x10] sm:$0xf]
    %v500 = vld [vmem:[%s494 + $0x14] sm:$0xf]
    %v501 = vld [vmem:[%s494 + $0x18] sm:$0xf]
    %v502 = vld [vmem:[%s494 + $0x1c] sm:$0xf]
    %v503 = vld [vmem:[%s494 + $0x20] sm:$0xf]
    %v504 = vld [vmem:[%s494 + $0x24] sm:$0xf]
    %v505 = vld [vmem:[%s494 + $0x28] sm:$0xf]
    %v506 = vld [vmem:[%s494 + $0x2c] sm:$0xf]
    %v507 = vld [vmem:[%s494 + $0x30] sm:$0xf]
    %v508 = vld [vmem:[%s494 + $0x34] sm:$0xf]
    %v509 = vld [vmem:[%s494 + $0x38] sm:$0xf]
    %v510 = vld [vmem:[%s494 + $0x3c] sm:$0xf]
    %v527 = vunpack.c.l.b16 %v495
    %v528 = vunpack.c.l.b16 %v496
    %v529 = vunpack.c.l.b16 %v497
    %v530 = vunpack.c.l.b16 %v498
    %v531 = vunpack.c.l.b16 %v499
    %v532 = vunpack.c.l.b16 %v500
    %v533 = vunpack.c.l.b16 %v501
    %v534 = vunpack.c.l.b16 %v502
    %v535 = vunpack.c.l.b16 %v503
    %v536 = vunpack.c.l.b16 %v504
    %v537 = vunpack.c.l.b16 %v505
    %v538 = vunpack.c.l.b16 %v506
    %v539 = vunpack.c.l.b16 %v507
    %v540 = vunpack.c.l.b16 %v508
    %v541 = vunpack.c.l.b16 %v509
    %v542 = vunpack.c.l.b16 %v510
    %v543 = vpack.c.b16 %v528, %v527
    %v544 = vpack.c.b16 %v530, %v529
    %v545 = vpack.c.b16 %v532, %v531
    %v546 = vpack.c.b16 %v534, %v533
    %v547 = vpack.c.b16 %v536, %v535
    %v548 = vpack.c.b16 %v538, %v537
    %v549 = vpack.c.b16 %v540, %v539
    %v550 = vpack.c.b16 %v542, %v541
    %559 = vmatprep.subr.bf16.mxu0 0
    %560 = vmatpush1.bf16.msra.mxu0 %v543
    %561 = vmatprep.subr.bf16.mxu0 0
    %562 = vmatpush1.bf16.msra.mxu0 %v544
    %563 = vmatprep.subr.bf16.mxu0 0
    %564 = vmatpush1.bf16.msra.mxu0 %v545
    %565 = vmatprep.subr.bf16.mxu0 0
    %566 = vmatpush1.bf16.msra.mxu0 %v546
    %567 = vmatprep.subr.bf16.mxu0 0
    %568 = vmatpush1.bf16.msra.mxu0 %v547
    %569 = vmatprep.subr.bf16.mxu0 0
    %570 = vmatpush1.bf16.msra.mxu0 %v548
    %571 = vmatprep.subr.bf16.mxu0 0
    %572 = vmatpush1.bf16.msra.mxu0 %v549
    %573 = vmatprep.subr.bf16.mxu0 0
    %574 = vmatpush1.bf16.msra.mxu0 %v550
    %575 = vmatprep.subr.bf16.mxu0 0
    %576 = vmatpush1.bf16.msra.mxu0 0
    %577 = vmatprep.subr.bf16.mxu0 0
    %578 = vmatpush1.bf16.msra.mxu0 0
    %579 = vmatprep.subr.bf16.mxu0 0
    %580 = vmatpush1.bf16.msra.mxu0 0
    %581 = vmatprep.subr.bf16.mxu0 0
    %582 = vmatpush1.bf16.msra.mxu0 0
    %583 = vmatprep.subr.bf16.mxu0 0
    %584 = vmatpush1.bf16.msra.mxu0 0
    %585 = vmatprep.subr.bf16.mxu0 0
    %586 = vmatpush1.bf16.msra.mxu0 0
    %587 = vmatprep.subr.bf16.mxu0 0
    %588 = vmatpush1.bf16.msra.mxu0 0
    %589 = vmatprep.subr.bf16.mxu0 0
    %590 = vmatpush1.bf16.msra.mxu0 0
    %591 = vmatprep.mubr.bf16.mxu0 0
    %592 = vmatmul.mubr.bf16.gmra.mrb[0].mxu0 %v491
    %v593 = vpop.f32.mrb[0].mxu0
    %v594 = vadd.f32 0.0, %v593
    %v595 = vpop.f32.mrb[0].mxu0
    %v596 = vpop.f32.mrb[0].mxu0
    %v597 = vadd.f32 0.0, %v596
    %v598 = vpop.f32.mrb[0].mxu0
    %599 = vmatprep.mubr.bf16.mxu0 0
    %600 = vmatmul.mubr.bf16.gmra.mrb[0].mxu0 %v492
    %v601 = vpop.f32.mrb[0].mxu0
    %v602 = vadd.f32 0.0, %v601
    %v603 = vpop.f32.mrb[0].mxu0
    %v604 = vpop.f32.mrb[0].mxu0
    %v605 = vadd.f32 0.0, %v604
    %v606 = vpop.f32.mrb[0].mxu0
    %607 = vmatprep.mubr.bf16.mxu0 0
    %608 = vmatmul.mubr.bf16.gmra.mrb[0].mxu0 %v493
    %v609 = vpop.f32.mrb[0].mxu0
    %v610 = vadd.f32 0.0, %v609
    %v611 = vpop.f32.mrb[0].mxu0
    %v612 = vpop.f32.mrb[0].mxu0
    %v613 = vadd.f32 0.0, %v612
    %v614 = vpop.f32.mrb[0].mxu0
    %615 = vdwg.mxu0
    %v616 = vadd.f32 %v463, %v594
    %v617 = vadd.f32 %v466, %v597
    %v618 = vadd.f32 %v471, %v602
    %v619 = vadd.f32 %v474, %v605
    %v620 = vadd.f32 %v479, %v610
    %v621 = vadd.f32 %v482, %v613
    %v622 = vld [vmem:[#allocation2 + $0x3] sm:$0xff]
    %v623 = vld [vmem:[#allocation2 + $0xb] sm:$0xff]
    %v624 = vld [vmem:[#allocation2 + $0x13] sm:$0xff]
    %v625 = vld [vmem:[#allocation2 + $0x1b] sm:$0xff]
    %v626 = vld [vmem:[#allocation2 + $0x23] sm:$0xff]
    %v627 = vld [vmem:[#allocation2 + $0x2b] sm:$0xff]
    %v628 = vpack.c.bf16 %v623, %v622
    %v629 = vpack.c.bf16 %v625, %v624
    %v630 = vpack.c.bf16 %v627, %v626
    %s631 = scalar_lea.vmem %s2, 192
    %v632 = vld [vmem:[%s631] sm:$0xf]
    %v633 = vld [vmem:[%s631 + $0x4] sm:$0xf]
    %v634 = vld [vmem:[%s631 + $0x8] sm:$0xf]
    %v635 = vld [vmem:[%s631 + $0xc] sm:$0xf]
    %v636 = vld [vmem:[%s631 + $0x10] sm:$0xf]
    %v637 = vld [vmem:[%s631 + $0x14] sm:$0xf]
    %v638 = vld [vmem:[%s631 + $0x18] sm:$0xf]
    %v639 = vld [vmem:[%s631 + $0x1c] sm:$0xf]
    %v640 = vld [vmem:[%s631 + $0x20] sm:$0xf]
    %v641 = vld [vmem:[%s631 + $0x24] sm:$0xf]
    %v642 = vld [vmem:[%s631 + $0x28] sm:$0xf]
    %v643 = vld [vmem:[%s631 + $0x2c] sm:$0xf]
    %v644 = vld [vmem:[%s631 + $0x30] sm:$0xf]
    %v645 = vld [vmem:[%s631 + $0x34] sm:$0xf]
    %v646 = vld [vmem:[%s631 + $0x38] sm:$0xf]
    %v647 = vld [vmem:[%s631 + $0x3c] sm:$0xf]
    %v664 = vunpack.c.l.b16 %v632
    %v665 = vunpack.c.l.b16 %v633
    %v666 = vunpack.c.l.b16 %v634
    %v667 = vunpack.c.l.b16 %v635
    %v668 = vunpack.c.l.b16 %v636
    %v669 = vunpack.c.l.b16 %v637
    %v670 = vunpack.c.l.b16 %v638
    %v671 = vunpack.c.l.b16 %v639
    %v672 = vunpack.c.l.b16 %v640
    %v673 = vunpack.c.l.b16 %v641
    %v674 = vunpack.c.l.b16 %v642
    %v675 = vunpack.c.l.b16 %v643
    %v676 = vunpack.c.l.b16 %v644
    %v677 = vunpack.c.l.b16 %v645
    %v678 = vunpack.c.l.b16 %v646
    %v679 = vunpack.c.l.b16 %v647
    %v680 = vpack.c.b16 %v665, %v664
    %v681 = vpack.c.b16 %v667, %v666
    %v682 = vpack.c.b16 %v669, %v668
    %v683 = vpack.c.b16 %v671, %v670
    %v684 = vpack.c.b16 %v673, %v672
    %v685 = vpack.c.b16 %v675, %v674
    %v686 = vpack.c.b16 %v677, %v676
    %v687 = vpack.c.b16 %v679, %v678
    %696 = vmatprep.subr.bf16.mxu0 0
    %697 = vmatpush1.bf16.msra.mxu0 %v680
    %698 = vmatprep.subr.bf16.mxu0 0
    %699 = vmatpush1.bf16.msra.mxu0 %v681
    %700 = vmatprep.subr.bf16.mxu0 0
    %701 = vmatpush1.bf16.msra.mxu0 %v682
    %702 = vmatprep.subr.bf16.mxu0 0
    %703 = vmatpush1.bf16.msra.mxu0 %v683
    %704 = vmatprep.subr.bf16.mxu0 0
    %705 = vmatpush1.bf16.msra.mxu0 %v684
    %706 = vmatprep.subr.bf16.mxu0 0
    %707 = vmatpush1.bf16.msra.mxu0 %v685
    %708 = vmatprep.subr.bf16.mxu0 0
    %709 = vmatpush1.bf16.msra.mxu0 %v686
    %710 = vmatprep.subr.bf16.mxu0 0
    %711 = vmatpush1.bf16.msra.mxu0 %v687
    %712 = vmatprep.subr.bf16.mxu0 0
    %713 = vmatpush1.bf16.msra.mxu0 0
    %714 = vmatprep.subr.bf16.mxu0 0
    %715 = vmatpush1.bf16.msra.mxu0 0
    %716 = vmatprep.subr.bf16.mxu0 0
    %717 = vmatpush1.bf16.msra.mxu0 0
    %718 = vmatprep.subr.bf16.mxu0 0
    %719 = vmatpush1.bf16.msra.mxu0 0
    %720 = vmatprep.subr.bf16.mxu0 0
    %721 = vmatpush1.bf16.msra.mxu0 0
    %722 = vmatprep.subr.bf16.mxu0 0
    %723 = vmatpush1.bf16.msra.mxu0 0
    %724 = vmatprep.subr.bf16.mxu0 0
    %725 = vmatpush1.bf16.msra.mxu0 0
    %726 = vmatprep.subr.bf16.mxu0 0
    %727 = vmatpush1.bf16.msra.mxu0 0
    %728 = vmatprep.mubr.bf16.mxu0 0
    %729 = vmatmul.mubr.bf16.gmra.mrb[0].mxu0 %v628
    %v730 = vpop.f32.mrb[0].mxu0
    %v731 = vadd.f32 0.0, %v730
    %v732 = vpop.f32.mrb[0].mxu0
    %v733 = vpop.f32.mrb[0].mxu0
    %v734 = vadd.f32 0.0, %v733
    %v735 = vpop.f32.mrb[0].mxu0
    %736 = vmatprep.mubr.bf16.mxu0 0
    %737 = vmatmul.mubr.bf16.gmra.mrb[0].mxu0 %v629
    %v738 = vpop.f32.mrb[0].mxu0
    %v739 = vadd.f32 0.0, %v738
    %v740 = vpop.f32.mrb[0].mxu0
    %v741 = vpop.f32.mrb[0].mxu0
    %v742 = vadd.f32 0.0, %v741
    %v743 = vpop.f32.mrb[0].mxu0
    %744 = vmatprep.mubr.bf16.mxu0 0
    %745 = vmatmul.mubr.bf16.gmra.mrb[0].mxu0 %v630
    %v746 = vpop.f32.mrb[0].mxu0
    %v747 = vadd.f32 0.0, %v746
    %v748 = vpop.f32.mrb[0].mxu0
    %v749 = vpop.f32.mrb[0].mxu0
    %v750 = vadd.f32 0.0, %v749
    %v751 = vpop.f32.mrb[0].mxu0
    %752 = vdwg.mxu0
    %v753 = vadd.f32 %v616, %v731
    %v754 = vadd.f32 %v617, %v734
    %v755 = vadd.f32 %v618, %v739
    %v756 = vadd.f32 %v619, %v742
    %v757 = vadd.f32 %v620, %v747
    %v758 = vadd.f32 %v621, %v750
    %v759 = vld [vmem:[#allocation2 + $0x4] sm:$0xff]
    %v760 = vld [vmem:[#allocation2 + $0xc] sm:$0xff]
    %v761 = vld [vmem:[#allocation2 + $0x14] sm:$0xff]
    %v762 = vld [vmem:[#allocation2 + $0x1c] sm:$0xff]
    %v763 = vld [vmem:[#allocation2 + $0x24] sm:$0xff]
    %v764 = vld [vmem:[#allocation2 + $0x2c] sm:$0xff]
    %v765 = vpack.c.bf16 %v760, %v759
    %v766 = vpack.c.bf16 %v762, %v761
    %v767 = vpack.c.bf16 %v764, %v763
    %s768 = scalar_lea.vmem %s2, 256
    %v769 = vld [vmem:[%s768] sm:$0xf]
    %v770 = vld [vmem:[%s768 + $0x4] sm:$0xf]
    %v771 = vld [vmem:[%s768 + $0x8] sm:$0xf]
    %v772 = vld [vmem:[%s768 + $0xc] sm:$0xf]
    %v773 = vld [vmem:[%s768 + $0x10] sm:$0xf]
    %v774 = vld [vmem:[%s768 + $0x14] sm:$0xf]
    %v775 = vld [vmem:[%s768 + $0x18] sm:$0xf]
    %v776 = vld [vmem:[%s768 + $0x1c] sm:$0xf]
    %v777 = vld [vmem:[%s768 + $0x20] sm:$0xf]
    %v778 = vld [vmem:[%s768 + $0x24] sm:$0xf]
    %v779 = vld [vmem:[%s768 + $0x28] sm:$0xf]
    %v780 = vld [vmem:[%s768 + $0x2c] sm:$0xf]
    %v781 = vld [vmem:[%s768 + $0x30] sm:$0xf]
    %v782 = vld [vmem:[%s768 + $0x34] sm:$0xf]
    %v783 = vld [vmem:[%s768 + $0x38] sm:$0xf]
    %v784 = vld [vmem:[%s768 + $0x3c] sm:$0xf]
    %v801 = vunpack.c.l.b16 %v769
    %v802 = vunpack.c.l.b16 %v770
    %v803 = vunpack.c.l.b16 %v771
    %v804 = vunpack.c.l.b16 %v772
    %v805 = vunpack.c.l.b16 %v773
    %v806 = vunpack.c.l.b16 %v774
    %v807 = vunpack.c.l.b16 %v775
    %v808 = vunpack.c.l.b16 %v776
    %v809 = vunpack.c.l.b16 %v777
    %v810 = vunpack.c.l.b16 %v778
    %v811 = vunpack.c.l.b16 %v779
    %v812 = vunpack.c.l.b16 %v780
    %v813 = vunpack.c.l.b16 %v781
    %v814 = vunpack.c.l.b16 %v782
    %v815 = vunpack.c.l.b16 %v783
    %v816 = vunpack.c.l.b16 %v784
    %v817 = vpack.c.b16 %v802, %v801
    %v818 = vpack.c.b16 %v804, %v803
    %v819 = vpack.c.b16 %v806, %v805
    %v820 = vpack.c.b16 %v808, %v807
    %v821 = vpack.c.b16 %v810, %v809
    %v822 = vpack.c.b16 %v812, %v811
    %v823 = vpack.c.b16 %v814, %v813
    %v824 = vpack.c.b16 %v816, %v815
    %833 = vmatprep.subr.bf16.mxu0 0
    %834 = vmatpush1.bf16.msra.mxu0 %v817
    %835 = vmatprep.subr.bf16.mxu0 0
    %836 = vmatpush1.bf16.msra.mxu0 %v818
    %837 = vmatprep.subr.bf16.mxu0 0
    %838 = vmatpush1.bf16.msra.mxu0 %v819
    %839 = vmatprep.subr.bf16.mxu0 0
    %840 = vmatpush1.bf16.msra.mxu0 %v820
    %841 = vmatprep.subr.bf16.mxu0 0
    %842 = vmatpush1.bf16.msra.mxu0 %v821
    %843 = vmatprep.subr.bf16.mxu0 0
    %844 = vmatpush1.bf16.msra.mxu0 %v822
    %845 = vmatprep.subr.bf16.mxu0 0
    %846 = vmatpush1.bf16.msra.mxu0 %v823
    %847 = vmatprep.subr.bf16.mxu0 0
    %848 = vmatpush1.bf16.msra.mxu0 %v824
    %849 = vmatprep.subr.bf16.mxu0 0
    %850 = vmatpush1.bf16.msra.mxu0 0
    %851 = vmatprep.subr.bf16.mxu0 0
    %852 = vmatpush1.bf16.msra.mxu0 0
    %853 = vmatprep.subr.bf16.mxu0 0
    %854 = vmatpush1.bf16.msra.mxu0 0
    %855 = vmatprep.subr.bf16.mxu0 0
    %856 = vmatpush1.bf16.msra.mxu0 0
    %857 = vmatprep.subr.bf16.mxu0 0
    %858 = vmatpush1.bf16.msra.mxu0 0
    %859 = vmatprep.subr.bf16.mxu0 0
    %860 = vmatpush1.bf16.msra.mxu0 0
    %861 = vmatprep.subr.bf16.mxu0 0
    %862 = vmatpush1.bf16.msra.mxu0 0
    %863 = vmatprep.subr.bf16.mxu0 0
    %864 = vmatpush1.bf16.msra.mxu0 0
    %865 = vmatprep.mubr.bf16.mxu0 0
    %866 = vmatmul.mubr.bf16.gmra.mrb[0].mxu0 %v765
    %v867 = vpop.f32.mrb[0].mxu0
    %v868 = vadd.f32 0.0, %v867
    %v869 = vpop.f32.mrb[0].mxu0
    %v870 = vpop.f32.mrb[0].mxu0
    %v871 = vadd.f32 0.0, %v870
    %v872 = vpop.f32.mrb[0].mxu0
    %873 = vmatprep.mubr.bf16.mxu0 0
    %874 = vmatmul.mubr.bf16.gmra.mrb[0].mxu0 %v766
    %v875 = vpop.f32.mrb[0].mxu0
    %v876 = vadd.f32 0.0, %v875
    %v877 = vpop.f32.mrb[0].mxu0
    %v878 = vpop.f32.mrb[0].mxu0
    %v879 = vadd.f32 0.0, %v878
    %v880 = vpop.f32.mrb[0].mxu0
    %881 = vmatprep.mubr.bf16.mxu0 0
    %882 = vmatmul.mubr.bf16.gmra.mrb[0].mxu0 %v767
    %v883 = vpop.f32.mrb[0].mxu0
    %v884 = vadd.f32 0.0, %v883
    %v885 = vpop.f32.mrb[0].mxu0
    %v886 = vpop.f32.mrb[0].mxu0
    %v887 = vadd.f32 0.0, %v886
    %v888 = vpop.f32.mrb[0].mxu0
    %889 = vdwg.mxu0
    %v890 = vadd.f32 %v753, %v868
    %v891 = vadd.f32 %v754, %v871
    %v892 = vadd.f32 %v755, %v876
    %v893 = vadd.f32 %v756, %v879
    %v894 = vadd.f32 %v757, %v884
    %v895 = vadd.f32 %v758, %v887
    %v896 = vld [vmem:[%s3] sm:$0x1]
    %v898 = vlaneseq
    %v899 = vshrl.u32 %v898, 7
    %v900 = vsub.s32 0, %v899
    %v901 = vrot.slane %v896, %v900
    %v903 = vadd.f32 %v890, %v901
    %v904 = vadd.f32 %v891, %v901
    %v905 = vadd.f32 %v892, %v901
    %v906 = vadd.f32 %v893, %v901
    %v907 = vadd.f32 %v894, %v901
    %v908 = vadd.f32 %v895, %v901
    %v909 = vmax.f32 %v903, 0.0
    %v910 = vmax.f32 %v904, 0.0
    %v911 = vmax.f32 %v905, 0.0
    %v912 = vmax.f32 %v906, 0.0
    %v913 = vmax.f32 %v907, 0.0
    %v914 = vmax.f32 %v908, 0.0
    %v915 = vpack.c.bf16 %v910, %v909
    %v916 = vpack.c.bf16 %v912, %v911
    %v917 = vpack.c.bf16 %v914, %v913
    %v918 = vld [vmem:[%s10] sm:$0xf]
    %v919 = vld [vmem:[%s10 + $0x4] sm:$0xf]
    %v920 = vld [vmem:[%s10 + $0x8] sm:$0xf]
    %v924 = vunpack.c.l.b16 %v918
    %v925 = vunpack.c.l.b16 %v919
    %v926 = vunpack.c.l.b16 %v920
    %v927 = vpack.c.b16 %v925, %v924
    %v928 = vpack.c.b16 %v926, %v926
    %vm929 = vcmask 392192
    %v931 = vsel %vm929, %v927, 0
    %v934 = vsel %vm929, %v928, 0
    %936 = vmatprep.subr.bf16.mxu0 0
    %937 = vmatpush1.bf16.msra.mxu0 %v915
    %938 = vmatprep.subr.bf16.mxu0 0
    %939 = vmatpush1.bf16.msra.mxu0 %v916
    %940 = vmatprep.subr.bf16.mxu0 0
    %941 = vmatpush1.bf16.msra.mxu0 %v917
    %942 = vmatprep.subr.bf16.mxu0 0
    %943 = vmatpush1.bf16.msra.mxu0 0
    %944 = vmatprep.subr.bf16.mxu0 0
    %945 = vmatpush1.bf16.msra.mxu0 0
    %946 = vmatprep.subr.bf16.mxu0 0
    %947 = vmatpush1.bf16.msra.mxu0 0
    %948 = vmatprep.subr.bf16.mxu0 0
    %949 = vmatpush1.bf16.msra.mxu0 0
    %950 = vmatprep.subr.bf16.mxu0 0
    %951 = vmatpush1.bf16.msra.mxu0 0
    %952 = vmatprep.subr.bf16.mxu0 0
    %953 = vmatpush1.bf16.msra.mxu0 0
    %954 = vmatprep.subr.bf16.mxu0 0
    %955 = vmatpush1.bf16.msra.mxu0 0
    %956 = vmatprep.subr.bf16.mxu0 0
    %957 = vmatpush1.bf16.msra.mxu0 0
    %958 = vmatprep.subr.bf16.mxu0 0
    %959 = vmatpush1.bf16.msra.mxu0 0
    %960 = vmatprep.subr.bf16.mxu0 0
    %961 = vmatpush1.bf16.msra.mxu0 0
    %962 = vmatprep.subr.bf16.mxu0 0
    %963 = vmatpush1.bf16.msra.mxu0 0
    %964 = vmatprep.subr.bf16.mxu0 0
    %965 = vmatpush1.bf16.msra.mxu0 0
    %966 = vmatprep.subr.bf16.mxu0 0
    %967 = vmatpush1.bf16.msra.mxu0 0
    %968 = vmatprep.mubr.bf16.mxu0 0
    %969 = vmatmul.mubr.bf16.gmra.mrb[0].mxu0 %v931
    %v970 = vpop.f32.mrb[0].mxu0
    %v971 = vadd.f32 0.0, %v970
    %v972 = vpop.f32.mrb[0].mxu0
    %v973 = vpop.f32.mrb[0].mxu0
    %v974 = vadd.f32 0.0, %v973
    %v975 = vpop.f32.mrb[0].mxu0
    %976 = vmatprep.mubr.bf16.mxu0 0
    %977 = vmatmul.mubr.bf16.gmra.mrb[0].mxu0 %v934
    %v978 = vpop.f32.mrb[0].mxu0
    %v979 = vadd.f32 0.0, %v978
    %v980 = vpop.f32.mrb[0].mxu0
    %v981 = vpop.f32.mrb[0].mxu0
    %v982 = vpop.f32.mrb[0].mxu0
    %983 = vdwg.mxu0
    %v984 = vld [vmem:[%s11] sm:$0xf]
    %v985 = vld [vmem:[%s11 + $0x4] sm:$0xf]
    %v986 = vld [vmem:[%s11 + $0x8] sm:$0xf]
    %v990 = vunpack.c.l.b16 %v984
    %v991 = vunpack.c.l.b16 %v985
    %v992 = vunpack.c.l.b16 %v986
    %v993 = vpack.c.b16 %v991, %v990
    %v994 = vpack.c.b16 %v992, %v992
    %v996 = vsel %vm929, %v993, 0
    %v999 = vsel %vm929, %v994, 0
    %1001 = vmatprep.subr.bf16.mxu0 0
    %1002 = vmatpush1.bf16.msra.mxu0 %v915
    %1003 = vmatprep.subr.bf16.mxu0 0
    %1004 = vmatpush1.bf16.msra.mxu0 %v916
    %1005 = vmatprep.subr.bf16.mxu0 0
    %1006 = vmatpush1.bf16.msra.mxu0 %v917
    %1007 = vmatprep.subr.bf16.mxu0 0
    %1008 = vmatpush1.bf16.msra.mxu0 0
    %1009 = vmatprep.subr.bf16.mxu0 0
    %1010 = vmatpush1.bf16.msra.mxu0 0
    %1011 = vmatprep.subr.bf16.mxu0 0
    %1012 = vmatpush1.bf16.msra.mxu0 0
    %1013 = vmatprep.subr.bf16.mxu0 0
    %1014 = vmatpush1.bf16.msra.mxu0 0
    %1015 = vmatprep.subr.bf16.mxu0 0
    %1016 = vmatpush1.bf16.msra.mxu0 0
    %1017 = vmatprep.subr.bf16.mxu0 0
    %1018 = vmatpush1.bf16.msra.mxu0 0
    %1019 = vmatprep.subr.bf16.mxu0 0
    %1020 = vmatpush1.bf16.msra.mxu0 0
    %1021 = vmatprep.subr.bf16.mxu0 0
    %1022 = vmatpush1.bf16.msra.mxu0 0
    %1023 = vmatprep.subr.bf16.mxu0 0
    %1024 = vmatpush1.bf16.msra.mxu0 0
    %1025 = vmatprep.subr.bf16.mxu0 0
    %1026 = vmatpush1.bf16.msra.mxu0 0
    %1027 = vmatprep.subr.bf16.mxu0 0
    %1028 = vmatpush1.bf16.msra.mxu0 0
    %1029 = vmatprep.subr.bf16.mxu0 0
    %1030 = vmatpush1.bf16.msra.mxu0 0
    %1031 = vmatprep.subr.bf16.mxu0 0
    %1032 = vmatpush1.bf16.msra.mxu0 0
    %1033 = vmatprep.mubr.bf16.mxu0 0
    %1034 = vmatmul.mubr.bf16.gmra.mrb[0].mxu0 %v996
    %v1035 = vpop.f32.mrb[0].mxu0
    %v1036 = vadd.f32 0.0, %v1035
    %v1037 = vpop.f32.mrb[0].mxu0
    %v1038 = vpop.f32.mrb[0].mxu0
    %v1039 = vadd.f32 0.0, %v1038
    %v1040 = vpop.f32.mrb[0].mxu0
    %1041 = vmatprep.mubr.bf16.mxu0 0
    %1042 = vmatmul.mubr.bf16.gmra.mrb[0].mxu0 %v999
    %v1043 = vpop.f32.mrb[0].mxu0
    %v1044 = vadd.f32 0.0, %v1043
    %v1045 = vpop.f32.mrb[0].mxu0
    %v1046 = vpop.f32.mrb[0].mxu0
    %v1047 = vpop.f32.mrb[0].mxu0
    %1048 = vdwg.mxu0
    %v1049 = vmax.f32 %v971, %v1036
    %v1050 = vmax.f32 %v974, %v1039
    %v1051 = vmax.f32 %v979, %v1044
    %1052 = vst [vmem:[#allocation3] sm:$0x3] 0.0
    %1053 = vst [vmem:[#allocation3 + $0x1a] sm:$0x3] 0.0
    %1054 = vst [vmem:[#allocation3 + $0x2] sm:$0xff] %v1049
    %1055 = vst [vmem:[#allocation3 + $0xa] sm:$0xff] %v1050
    %1056 = vst [vmem:[#allocation3 + $0x12] sm:$0xff] %v1051
    %v1057 = vld [vmem:[#allocation3] sm:$0xff]
    %v1058 = vld [vmem:[#allocation3 + $0x8] sm:$0xff]
    %v1059 = vld [vmem:[#allocation3 + $0x10] sm:$0xff]
    %v1060 = vpack.c.bf16 %v1058, %v1057
    %v1061 = vpack.c.bf16 %v1059, %v1059
    %v1062 = vld [vmem:[#allocation6] sm:$0xff]
    %v1063 = vld [vmem:[#allocation6 + $0x8] sm:$0xff]
    %v1064 = vld [vmem:[#allocation6 + $0x10] sm:$0xff]
    %v1065 = vld [vmem:[#allocation6 + $0x18] sm:$0xff]
    %v1066 = vld [vmem:[#allocation6 + $0x20] sm:$0xff]
    %v1067 = vld [vmem:[#allocation6 + $0x28] sm:$0xff]
    %v1068 = vld [vmem:[#allocation6 + $0x30] sm:$0xff]
    %v1069 = vld [vmem:[#allocation6 + $0x38] sm:$0xff]
    %v1070 = vld [vmem:[#allocation6 + $0x40] sm:$0xff]
    %v1071 = vld [vmem:[#allocation6 + $0x48] sm:$0xff]
    %v1072 = vld [vmem:[#allocation6 + $0x50] sm:$0xff]
    %v1073 = vld [vmem:[#allocation6 + $0x58] sm:$0xff]
    %v1074 = vld [vmem:[#allocation6 + $0x60] sm:$0xff]
    %v1075 = vld [vmem:[#allocation6 + $0x68] sm:$0xff]
    %v1076 = vld [vmem:[#allocation6 + $0x70] sm:$0xff]
    %v1077 = vld [vmem:[#allocation6 + $0x78] sm:$0xff]
    %v1078 = vld [vmem:[#allocation3 + $0x1] sm:$0xff]
    %v1079 = vld [vmem:[#allocation3 + $0x9] sm:$0xff]
    %v1080 = vld [vmem:[#allocation3 + $0x11] sm:$0xff]
    %v1081 = vpack.c.bf16 %v1079, %v1078
    %v1082 = vpack.c.bf16 %v1080, %v1080
    %s1083 = scalar_lea.vmem [#allocation6], 128
    %v1084 = vld [vmem:[%s1083] sm:$0xff]
    %v1085 = vld [vmem:[%s1083 + $0x8] sm:$0xff]
    %v1086 = vld [vmem:[%s1083 + $0x10] sm:$0xff]
    %v1087 = vld [vmem:[%s1083 + $0x18] sm:$0xff]
    %v1088 = vld [vmem:[%s1083 + $0x20] sm:$0xff]
    %v1089 = vld [vmem:[%s1083 + $0x28] sm:$0xff]
    %v1090 = vld [vmem:[%s1083 + $0x30] sm:$0xff]
    %v1091 = vld [vmem:[%s1083 + $0x38] sm:$0xff]
    %v1092 = vld [vmem:[%s1083 + $0x40] sm:$0xff]
    %v1093 = vld [vmem:[%s1083 + $0x48] sm:$0xff]
    %v1094 = vld [vmem:[%s1083 + $0x50] sm:$0xff]
    %v1095 = vld [vmem:[%s1083 + $0x58] sm:$0xff]
    %v1096 = vld [vmem:[%s1083 + $0x60] sm:$0xff]
    %v1097 = vld [vmem:[%s1083 + $0x68] sm:$0xff]
    %v1098 = vld [vmem:[%s1083 + $0x70] sm:$0xff]
    %v1099 = vld [vmem:[%s1083 + $0x78] sm:$0xff]
    %v1116 = vunpack.c.l.b16 %v1084
    %v1117 = vunpack.c.h.b16 %v1084
    %v1118 = vunpack.c.l.b16 %v1085
    %v1119 = vunpack.c.h.b16 %v1085
    %v1120 = vunpack.c.l.b16 %v1086
    %v1121 = vunpack.c.h.b16 %v1086
    %v1122 = vunpack.c.l.b16 %v1087
    %v1123 = vunpack.c.h.b16 %v1087
    %v1124 = vunpack.c.l.b16 %v1088
    %v1125 = vunpack.c.h.b16 %v1088
    %v1126 = vunpack.c.l.b16 %v1089
    %v1127 = vunpack.c.h.b16 %v1089
    %v1128 = vunpack.c.l.b16 %v1090
    %v1129 = vunpack.c.h.b16 %v1090
    %v1130 = vunpack.c.l.b16 %v1091
    %v1131 = vunpack.c.h.b16 %v1091
    %v1132 = vunpack.c.l.b16 %v1092
    %v1133 = vunpack.c.h.b16 %v1092
    %v1134 = vunpack.c.l.b16 %v1093
    %v1135 = vunpack.c.h.b16 %v1093
    %v1136 = vunpack.c.l.b16 %v1094
    %v1137 = vunpack.c.h.b16 %v1094
    %v1138 = vunpack.c.l.b16 %v1095
    %v1139 = vunpack.c.h.b16 %v1095
    %v1140 = vunpack.c.l.b16 %v1096
    %v1141 = vunpack.c.h.b16 %v1096
    %v1142 = vunpack.c.l.b16 %v1097
    %v1143 = vunpack.c.h.b16 %v1097
    %v1144 = vunpack.c.l.b16 %v1098
    %v1145 = vunpack.c.h.b16 %v1098
    %v1146 = vunpack.c.l.b16 %v1099
    %v1147 = vunpack.c.h.b16 %v1099
    %v1148 = vpack.c.b16 %v1118, %v1116
    %v1149 = vpack.c.b16 %v1119, %v1117
    %v1150 = vpack.c.b16 %v1122, %v1120
    %v1151 = vpack.c.b16 %v1123, %v1121
    %v1152 = vpack.c.b16 %v1126, %v1124
    %v1153 = vpack.c.b16 %v1127, %v1125
    %v1154 = vpack.c.b16 %v1130, %v1128
    %v1155 = vpack.c.b16 %v1131, %v1129
    %v1156 = vpack.c.b16 %v1134, %v1132
    %v1157 = vpack.c.b16 %v1135, %v1133
    %v1158 = vpack.c.b16 %v1138, %v1136
    %v1159 = vpack.c.b16 %v1139, %v1137
    %v1160 = vpack.c.b16 %v1142, %v1140
    %v1161 = vpack.c.b16 %v1143, %v1141
    %v1162 = vpack.c.b16 %v1146, %v1144
    %v1163 = vpack.c.b16 %v1147, %v1145
    %1180 = vmatprep.subr.bf16.mxu0 %v1149
    %1181 = vmatpush1.bf16.msra.mxu0 %v1148
    %1182 = vmatprep.subr.bf16.mxu0 %v1151
    %1183 = vmatpush1.bf16.msra.mxu0 %v1150
    %1184 = vmatprep.subr.bf16.mxu0 %v1153
    %1185 = vmatpush1.bf16.msra.mxu0 %v1152
    %1186 = vmatprep.subr.bf16.mxu0 %v1155
    %1187 = vmatpush1.bf16.msra.mxu0 %v1154
    %1188 = vmatprep.subr.bf16.mxu0 %v1157
    %1189 = vmatpush1.bf16.msra.mxu0 %v1156
    %1190 = vmatprep.subr.bf16.mxu0 %v1159
    %1191 = vmatpush1.bf16.msra.mxu0 %v1158
    %1192 = vmatprep.subr.bf16.mxu0 %v1161
    %1193 = vmatpush1.bf16.msra.mxu0 %v1160
    %1194 = vmatprep.subr.bf16.mxu0 %v1163
    %1195 = vmatpush1.bf16.msra.mxu0 %v1162
    %1196 = vmatprep.subr.bf16.mxu0 0
    %1197 = vmatpush1.bf16.msra.mxu0 0
    %1198 = vmatprep.subr.bf16.mxu0 0
    %1199 = vmatpush1.bf16.msra.mxu0 0
    %1200 = vmatprep.subr.bf16.mxu0 0
    %1201 = vmatpush1.bf16.msra.mxu0 0
    %1202 = vmatprep.subr.bf16.mxu0 0
    %1203 = vmatpush1.bf16.msra.mxu0 0
    %1204 = vmatprep.subr.bf16.mxu0 0
    %1205 = vmatpush1.bf16.msra.mxu0 0
    %1206 = vmatprep.subr.bf16.mxu0 0
    %1207 = vmatpush1.bf16.msra.mxu0 0
    %1208 = vmatprep.subr.bf16.mxu0 0
    %1209 = vmatpush1.bf16.msra.mxu0 0
    %1210 = vmatprep.subr.bf16.mxu0 0
    %1211 = vmatpush1.bf16.msra.mxu0 0
    %1212 = vmatprep.mubr.bf16.mxu0 0
    %1213 = vmatmul.mubr.bf16.gmra.mrb[0].mxu0 %v1081
    %v1214 = vpop.f32.mrb[0].mxu0
    %v1215 = vadd.f32 0.0, %v1214
    %v1216 = vpop.f32.mrb[0].mxu0
    %v1217 = vadd.f32 0.0, %v1216
    %v1218 = vpop.f32.mrb[0].mxu0
    %v1219 = vadd.f32 0.0, %v1218
    %v1220 = vpop.f32.mrb[0].mxu0
    %v1221 = vadd.f32 0.0, %v1220
    %1222 = vmatprep.mubr.bf16.mxu0 0
    %1223 = vmatmul.mubr.bf16.gmra.mrb[0].mxu0 %v1082
    %v1224 = vpop.f32.mrb[0].mxu0
    %v1225 = vadd.f32 0.0, %v1224
    %v1226 = vpop.f32.mrb[0].mxu0
    %v1227 = vadd.f32 0.0, %v1226
    %v1228 = vpop.f32.mrb[0].mxu0
    %v1229 = vpop.f32.mrb[0].mxu0
    %1230 = vdwg.mxu0
    %v1247 = vunpack.c.l.b16 %v1062
    %v1248 = vunpack.c.h.b16 %v1062
    %v1249 = vunpack.c.l.b16 %v1063
    %v1250 = vunpack.c.h.b16 %v1063
    %v1251 = vunpack.c.l.b16 %v1064
    %v1252 = vunpack.c.h.b16 %v1064
    %v1253 = vunpack.c.l.b16 %v1065
    %v1254 = vunpack.c.h.b16 %v1065
    %v1255 = vunpack.c.l.b16 %v1066
    %v1256 = vunpack.c.h.b16 %v1066
    %v1257 = vunpack.c.l.b16 %v1067
    %v1258 = vunpack.c.h.b16 %v1067
    %v1259 = vunpack.c.l.b16 %v1068
    %v1260 = vunpack.c.h.b16 %v1068
    %v1261 = vunpack.c.l.b16 %v1069
    %v1262 = vunpack.c.h.b16 %v1069
    %v1263 = vunpack.c.l.b16 %v1070
    %v1264 = vunpack.c.h.b16 %v1070
    %v1265 = vunpack.c.l.b16 %v1071
    %v1266 = vunpack.c.h.b16 %v1071
    %v1267 = vunpack.c.l.b16 %v1072
    %v1268 = vunpack.c.h.b16 %v1072
    %v1269 = vunpack.c.l.b16 %v1073
    %v1270 = vunpack.c.h.b16 %v1073
    %v1271 = vunpack.c.l.b16 %v1074
    %v1272 = vunpack.c.h.b16 %v1074
    %v1273 = vunpack.c.l.b16 %v1075
    %v1274 = vunpack.c.h.b16 %v1075
    %v1275 = vunpack.c.l.b16 %v1076
    %v1276 = vunpack.c.h.b16 %v1076
    %v1277 = vunpack.c.l.b16 %v1077
    %v1278 = vunpack.c.h.b16 %v1077
    %v1279 = vpack.c.b16 %v1249, %v1247
    %v1280 = vpack.c.b16 %v1250, %v1248
    %v1281 = vpack.c.b16 %v1253, %v1251
    %v1282 = vpack.c.b16 %v1254, %v1252
    %v1283 = vpack.c.b16 %v1257, %v1255
    %v1284 = vpack.c.b16 %v1258, %v1256
    %v1285 = vpack.c.b16 %v1261, %v1259
    %v1286 = vpack.c.b16 %v1262, %v1260
    %v1287 = vpack.c.b16 %v1265, %v1263
    %v1288 = vpack.c.b16 %v1266, %v1264
    %v1289 = vpack.c.b16 %v1269, %v1267
    %v1290 = vpack.c.b16 %v1270, %v1268
    %v1291 = vpack.c.b16 %v1273, %v1271
    %v1292 = vpack.c.b16 %v1274, %v1272
    %v1293 = vpack.c.b16 %v1277, %v1275
    %v1294 = vpack.c.b16 %v1278, %v1276
    %1311 = vmatprep.subr.bf16.mxu0 %v1280
    %1312 = vmatpush1.bf16.msra.mxu0 %v1279
    %1313 = vmatprep.subr.bf16.mxu0 %v1282
    %1314 = vmatpush1.bf16.msra.mxu0 %v1281
    %1315 = vmatprep.subr.bf16.mxu0 %v1284
    %1316 = vmatpush1.bf16.msra.mxu0 %v1283
    %1317 = vmatprep.subr.bf16.mxu0 %v1286
    %1318 = vmatpush1.bf16.msra.mxu0 %v1285
    %1319 = vmatprep.subr.bf16.mxu0 %v1288
    %1320 = vmatpush1.bf16.msra.mxu0 %v1287
    %1321 = vmatprep.subr.bf16.mxu0 %v1290
    %1322 = vmatpush1.bf16.msra.mxu0 %v1289
    %1323 = vmatprep.subr.bf16.mxu0 %v1292
    %1324 = vmatpush1.bf16.msra.mxu0 %v1291
    %1325 = vmatprep.subr.bf16.mxu0 %v1294
    %1326 = vmatpush1.bf16.msra.mxu0 %v1293
    %1327 = vmatprep.subr.bf16.mxu0 0
    %1328 = vmatpush1.bf16.msra.mxu0 0
    %1329 = vmatprep.subr.bf16.mxu0 0
    %1330 = vmatpush1.bf16.msra.mxu0 0
    %1331 = vmatprep.subr.bf16.mxu0 0
    %1332 = vmatpush1.bf16.msra.mxu0 0
    %1333 = vmatprep.subr.bf16.mxu0 0
    %1334 = vmatpush1.bf16.msra.mxu0 0
    %1335 = vmatprep.subr.bf16.mxu0 0
    %1336 = vmatpush1.bf16.msra.mxu0 0
    %1337 = vmatprep.subr.bf16.mxu0 0
    %1338 = vmatpush1.bf16.msra.mxu0 0
    %1339 = vmatprep.subr.bf16.mxu0 0
    %1340 = vmatpush1.bf16.msra.mxu0 0
    %1341 = vmatprep.subr.bf16.mxu0 0
    %1342 = vmatpush1.bf16.msra.mxu0 0
    %1343 = vmatprep.mubr.bf16.mxu0 0
    %1344 = vmatmul.mubr.bf16.gmra.mrb[0].mxu0 %v1060
    %v1345 = vpop.f32.mrb[0].mxu0
    %v1346 = vadd.f32 %v1215, %v1345
    %v1347 = vpop.f32.mrb[0].mxu0
    %v1348 = vadd.f32 %v1217, %v1347
    %v1349 = vpop.f32.mrb[0].mxu0
    %v1350 = vadd.f32 %v1219, %v1349
    %v1351 = vpop.f32.mrb[0].mxu0
    %v1352 = vadd.f32 %v1221, %v1351
    %1353 = vmatprep.mubr.bf16.mxu0 0
    %1354 = vmatmul.mubr.bf16.gmra.mrb[0].mxu0 %v1061
    %v1355 = vpop.f32.mrb[0].mxu0
    %v1356 = vadd.f32 %v1225, %v1355
    %v1357 = vpop.f32.mrb[0].mxu0
    %v1358 = vadd.f32 %v1227, %v1357
    %v1359 = vpop.f32.mrb[0].mxu0
    %v1360 = vpop.f32.mrb[0].mxu0
    %1361 = vdwg.mxu0
    %v1362 = vld [vmem:[#allocation3 + $0x2] sm:$0xff]
    %v1363 = vld [vmem:[#allocation3 + $0xa] sm:$0xff]
    %v1364 = vld [vmem:[#allocation3 + $0x12] sm:$0xff]
    %v1365 = vpack.c.bf16 %v1363, %v1362
    %v1366 = vpack.c.bf16 %v1364, %v1364
    %s1367 = scalar_lea.vmem [#allocation6], 256
    %v1368 = vld [vmem:[%s1367] sm:$0xff]
    %v1369 = vld [vmem:[%s1367 + $0x8] sm:$0xff]
    %v1370 = vld [vmem:[%s1367 + $0x10] sm:$0xff]
    %v1371 = vld [vmem:[%s1367 + $0x18] sm:$0xff]
    %v1372 = vld [vmem:[%s1367 + $0x20] sm:$0xff]
    %v1373 = vld [vmem:[%s1367 + $0x28] sm:$0xff]
    %v1374 = vld [vmem:[%s1367 + $0x30] sm:$0xff]
    %v1375 = vld [vmem:[%s1367 + $0x38] sm:$0xff]
    %v1376 = vld [vmem:[%s1367 + $0x40] sm:$0xff]
    %v1377 = vld [vmem:[%s1367 + $0x48] sm:$0xff]
    %v1378 = vld [vmem:[%s1367 + $0x50] sm:$0xff]
    %v1379 = vld [vmem:[%s1367 + $0x58] sm:$0xff]
    %v1380 = vld [vmem:[%s1367 + $0x60] sm:$0xff]
    %v1381 = vld [vmem:[%s1367 + $0x68] sm:$0xff]
    %v1382 = vld [vmem:[%s1367 + $0x70] sm:$0xff]
    %v1383 = vld [vmem:[%s1367 + $0x78] sm:$0xff]
    %v1400 = vunpack.c.l.b16 %v1368
    %v1401 = vunpack.c.h.b16 %v1368
    %v1402 = vunpack.c.l.b16 %v1369
    %v1403 = vunpack.c.h.b16 %v1369
    %v1404 = vunpack.c.l.b16 %v1370
    %v1405 = vunpack.c.h.b16 %v1370
    %v1406 = vunpack.c.l.b16 %v1371
    %v1407 = vunpack.c.h.b16 %v1371
    %v1408 = vunpack.c.l.b16 %v1372
    %v1409 = vunpack.c.h.b16 %v1372
    %v1410 = vunpack.c.l.b16 %v1373
    %v1411 = vunpack.c.h.b16 %v1373
    %v1412 = vunpack.c.l.b16 %v1374
    %v1413 = vunpack.c.h.b16 %v1374
    %v1414 = vunpack.c.l.b16 %v1375
    %v1415 = vunpack.c.h.b16 %v1375
    %v1416 = vunpack.c.l.b16 %v1376
    %v1417 = vunpack.c.h.b16 %v1376
    %v1418 = vunpack.c.l.b16 %v1377
    %v1419 = vunpack.c.h.b16 %v1377
    %v1420 = vunpack.c.l.b16 %v1378
    %v1421 = vunpack.c.h.b16 %v1378
    %v1422 = vunpack.c.l.b16 %v1379
    %v1423 = vunpack.c.h.b16 %v1379
    %v1424 = vunpack.c.l.b16 %v1380
    %v1425 = vunpack.c.h.b16 %v1380
    %v1426 = vunpack.c.l.b16 %v1381
    %v1427 = vunpack.c.h.b16 %v1381
    %v1428 = vunpack.c.l.b16 %v1382
    %v1429 = vunpack.c.h.b16 %v1382
    %v1430 = vunpack.c.l.b16 %v1383
    %v1431 = vunpack.c.h.b16 %v1383
    %v1432 = vpack.c.b16 %v1402, %v1400
    %v1433 = vpack.c.b16 %v1403, %v1401
    %v1434 = vpack.c.b16 %v1406, %v1404
    %v1435 = vpack.c.b16 %v1407, %v1405
    %v1436 = vpack.c.b16 %v1410, %v1408
    %v1437 = vpack.c.b16 %v1411, %v1409
    %v1438 = vpack.c.b16 %v1414, %v1412
    %v1439 = vpack.c.b16 %v1415, %v1413
    %v1440 = vpack.c.b16 %v1418, %v1416
    %v1441 = vpack.c.b16 %v1419, %v1417
    %v1442 = vpack.c.b16 %v1422, %v1420
    %v1443 = vpack.c.b16 %v1423, %v1421
    %v1444 = vpack.c.b16 %v1426, %v1424
    %v1445 = vpack.c.b16 %v1427, %v1425
    %v1446 = vpack.c.b16 %v1430, %v1428
    %v1447 = vpack.c.b16 %v1431, %v1429
    %1464 = vmatprep.subr.bf16.mxu0 %v1433
    %1465 = vmatpush1.bf16.msra.mxu0 %v1432
    %1466 = vmatprep.subr.bf16.mxu0 %v1435
    %1467 = vmatpush1.bf16.msra.mxu0 %v1434
    %1468 = vmatprep.subr.bf16.mxu0 %v1437
    %1469 = vmatpush1.bf16.msra.mxu0 %v1436
    %1470 = vmatprep.subr.bf16.mxu0 %v1439
    %1471 = vmatpush1.bf16.msra.mxu0 %v1438
    %1472 = vmatprep.subr.bf16.mxu0 %v1441
    %1473 = vmatpush1.bf16.msra.mxu0 %v1440
    %1474 = vmatprep.subr.bf16.mxu0 %v1443
    %1475 = vmatpush1.bf16.msra.mxu0 %v1442
    %1476 = vmatprep.subr.bf16.mxu0 %v1445
    %1477 = vmatpush1.bf16.msra.mxu0 %v1444
    %1478 = vmatprep.subr.bf16.mxu0 %v1447
    %1479 = vmatpush1.bf16.msra.mxu0 %v1446
    %1480 = vmatprep.subr.bf16.mxu0 0
    %1481 = vmatpush1.bf16.msra.mxu0 0
    %1482 = vmatprep.subr.bf16.mxu0 0
    %1483 = vmatpush1.bf16.msra.mxu0 0
    %1484 = vmatprep.subr.bf16.mxu0 0
    %1485 = vmatpush1.bf16.msra.mxu0 0
    %1486 = vmatprep.subr.bf16.mxu0 0
    %1487 = vmatpush1.bf16.msra.mxu0 0
    %1488 = vmatprep.subr.bf16.mxu0 0
    %1489 = vmatpush1.bf16.msra.mxu0 0
    %1490 = vmatprep.subr.bf16.mxu0 0
    %1491 = vmatpush1.bf16.msra.mxu0 0
    %1492 = vmatprep.subr.bf16.mxu0 0
    %1493 = vmatpush1.bf16.msra.mxu0 0
    %1494 = vmatprep.subr.bf16.mxu0 0
    %1495 = vmatpush1.bf16.msra.mxu0 0
    %1496 = vmatprep.mubr.bf16.mxu0 0
    %1497 = vmatmul.mubr.bf16.gmra.mrb[0].mxu0 %v1365
    %v1498 = vpop.f32.mrb[0].mxu0
    %v1499 = vadd.f32 0.0, %v1498
    %v1500 = vpop.f32.mrb[0].mxu0
    %v1501 = vadd.f32 0.0, %v1500
    %v1502 = vpop.f32.mrb[0].mxu0
    %v1503 = vadd.f32 0.0, %v1502
    %v1504 = vpop.f32.mrb[0].mxu0
    %v1505 = vadd.f32 0.0, %v1504
    %1506 = vmatprep.mubr.bf16.mxu0 0
    %1507 = vmatmul.mubr.bf16.gmra.mrb[0].mxu0 %v1366
    %v1508 = vpop.f32.mrb[0].mxu0
    %v1509 = vadd.f32 0.0, %v1508
    %v1510 = vpop.f32.mrb[0].mxu0
    %v1511 = vadd.f32 0.0, %v1510
    %v1512 = vpop.f32.mrb[0].mxu0
    %v1513 = vpop.f32.mrb[0].mxu0
    %1514 = vdwg.mxu0
    %v1515 = vadd.f32 %v1346, %v1499
    %v1516 = vadd.f32 %v1348, %v1501
    %v1517 = vadd.f32 %v1350, %v1503
    %v1518 = vadd.f32 %v1352, %v1505
    %v1519 = vadd.f32 %v1356, %v1509
    %v1520 = vadd.f32 %v1358, %v1511
    %v1521 = vld [vmem:[#allocation3 + $0x3] sm:$0xff]
    %v1522 = vld [vmem:[#allocation3 + $0xb] sm:$0xff]
    %v1523 = vld [vmem:[#allocation3 + $0x13] sm:$0xff]
    %v1524 = vpack.c.bf16 %v1522, %v1521
    %v1525 = vpack.c.bf16 %v1523, %v1523
    %s1526 = scalar_lea.vmem [#allocation6], 384
    %v1527 = vld [vmem:[%s1526] sm:$0xff]
    %v1528 = vld [vmem:[%s1526 + $0x8] sm:$0xff]
    %v1529 = vld [vmem:[%s1526 + $0x10] sm:$0xff]
    %v1530 = vld [vmem:[%s1526 + $0x18] sm:$0xff]
    %v1531 = vld [vmem:[%s1526 + $0x20] sm:$0xff]
    %v1532 = vld [vmem:[%s1526 + $0x28] sm:$0xff]
    %v1533 = vld [vmem:[%s1526 + $0x30] sm:$0xff]
    %v1534 = vld [vmem:[%s1526 + $0x38] sm:$0xff]
    %v1535 = vld [vmem:[%s1526 + $0x40] sm:$0xff]
    %v1536 = vld [vmem:[%s1526 + $0x48] sm:$0xff]
    %v1537 = vld [vmem:[%s1526 + $0x50] sm:$0xff]
    %v1538 = vld [vmem:[%s1526 + $0x58] sm:$0xff]
    %v1539 = vld [vmem:[%s1526 + $0x60] sm:$0xff]
    %v1540 = vld [vmem:[%s1526 + $0x68] sm:$0xff]
    %v1541 = vld [vmem:[%s1526 + $0x70] sm:$0xff]
    %v1542 = vld [vmem:[%s1526 + $0x78] sm:$0xff]
    %v1559 = vunpack.c.l.b16 %v1527
    %v1560 = vunpack.c.h.b16 %v1527
    %v1561 = vunpack.c.l.b16 %v1528
    %v1562 = vunpack.c.h.b16 %v1528
    %v1563 = vunpack.c.l.b16 %v1529
    %v1564 = vunpack.c.h.b16 %v1529
    %v1565 = vunpack.c.l.b16 %v1530
    %v1566 = vunpack.c.h.b16 %v1530
    %v1567 = vunpack.c.l.b16 %v1531
    %v1568 = vunpack.c.h.b16 %v1531
    %v1569 = vunpack.c.l.b16 %v1532
    %v1570 = vunpack.c.h.b16 %v1532
    %v1571 = vunpack.c.l.b16 %v1533
    %v1572 = vunpack.c.h.b16 %v1533
    %v1573 = vunpack.c.l.b16 %v1534
    %v1574 = vunpack.c.h.b16 %v1534
    %v1575 = vunpack.c.l.b16 %v1535
    %v1576 = vunpack.c.h.b16 %v1535
    %v1577 = vunpack.c.l.b16 %v1536
    %v1578 = vunpack.c.h.b16 %v1536
    %v1579 = vunpack.c.l.b16 %v1537
    %v1580 = vunpack.c.h.b16 %v1537
    %v1581 = vunpack.c.l.b16 %v1538
    %v1582 = vunpack.c.h.b16 %v1538
    %v1583 = vunpack.c.l.b16 %v1539
    %v1584 = vunpack.c.h.b16 %v1539
    %v1585 = vunpack.c.l.b16 %v1540
    %v1586 = vunpack.c.h.b16 %v1540
    %v1587 = vunpack.c.l.b16 %v1541
    %v1588 = vunpack.c.h.b16 %v1541
    %v1589 = vunpack.c.l.b16 %v1542
    %v1590 = vunpack.c.h.b16 %v1542
    %v1591 = vpack.c.b16 %v1561, %v1559
    %v1592 = vpack.c.b16 %v1562, %v1560
    %v1593 = vpack.c.b16 %v1565, %v1563
    %v1594 = vpack.c.b16 %v1566, %v1564
    %v1595 = vpack.c.b16 %v1569, %v1567
    %v1596 = vpack.c.b16 %v1570, %v1568
    %v1597 = vpack.c.b16 %v1573, %v1571
    %v1598 = vpack.c.b16 %v1574, %v1572
    %v1599 = vpack.c.b16 %v1577, %v1575
    %v1600 = vpack.c.b16 %v1578, %v1576
    %v1601 = vpack.c.b16 %v1581, %v1579
    %v1602 = vpack.c.b16 %v1582, %v1580
    %v1603 = vpack.c.b16 %v1585, %v1583
    %v1604 = vpack.c.b16 %v1586, %v1584
    %v1605 = vpack.c.b16 %v1589, %v1587
    %v1606 = vpack.c.b16 %v1590, %v1588
    %1623 = vmatprep.subr.bf16.mxu0 %v1592
    %1624 = vmatpush1.bf16.msra.mxu0 %v1591
    %1625 = vmatprep.subr.bf16.mxu0 %v1594
    %1626 = vmatpush1.bf16.msra.mxu0 %v1593
    %1627 = vmatprep.subr.bf16.mxu0 %v1596
    %1628 = vmatpush1.bf16.msra.mxu0 %v1595
    %1629 = vmatprep.subr.bf16.mxu0 %v1598
    %1630 = vmatpush1.bf16.msra.mxu0 %v1597
    %1631 = vmatprep.subr.bf16.mxu0 %v1600
    %1632 = vmatpush1.bf16.msra.mxu0 %v1599
    %1633 = vmatprep.subr.bf16.mxu0 %v1602
    %1634 = vmatpush1.bf16.msra.mxu0 %v1601
    %1635 = vmatprep.subr.bf16.mxu0 %v1604
    %1636 = vmatpush1.bf16.msra.mxu0 %v1603
    %1637 = vmatprep.subr.bf16.mxu0 %v1606
    %1638 = vmatpush1.bf16.msra.mxu0 %v1605
    %1639 = vmatprep.subr.bf16.mxu0 0
    %1640 = vmatpush1.bf16.msra.mxu0 0
    %1641 = vmatprep.subr.bf16.mxu0 0
    %1642 = vmatpush1.bf16.msra.mxu0 0
    %1643 = vmatprep.subr.bf16.mxu0 0
    %1644 = vmatpush1.bf16.msra.mxu0 0
    %1645 = vmatprep.subr.bf16.mxu0 0
    %1646 = vmatpush1.bf16.msra.mxu0 0
    %1647 = vmatprep.subr.bf16.mxu0 0
    %1648 = vmatpush1.bf16.msra.mxu0 0
    %1649 = vmatprep.subr.bf16.mxu0 0
    %1650 = vmatpush1.bf16.msra.mxu0 0
    %1651 = vmatprep.subr.bf16.mxu0 0
    %1652 = vmatpush1.bf16.msra.mxu0 0
    %1653 = vmatprep.subr.bf16.mxu0 0
    %1654 = vmatpush1.bf16.msra.mxu0 0
    %1655 = vmatprep.mubr.bf16.mxu0 0
    %1656 = vmatmul.mubr.bf16.gmra.mrb[0].mxu0 %v1524
    %v1657 = vpop.f32.mrb[0].mxu0
    %v1658 = vadd.f32 0.0, %v1657
    %v1659 = vpop.f32.mrb[0].mxu0
    %v1660 = vadd.f32 0.0, %v1659
    %v1661 = vpop.f32.mrb[0].mxu0
    %v1662 = vadd.f32 0.0, %v1661
    %v1663 = vpop.f32.mrb[0].mxu0
    %v1664 = vadd.f32 0.0, %v1663
    %1665 = vmatprep.mubr.bf16.mxu0 0
    %1666 = vmatmul.mubr.bf16.gmra.mrb[0].mxu0 %v1525
    %v1667 = vpop.f32.mrb[0].mxu0
    %v1668 = vadd.f32 0.0, %v1667
    %v1669 = vpop.f32.mrb[0].mxu0
    %v1670 = vadd.f32 0.0, %v1669
    %v1671 = vpop.f32.mrb[0].mxu0
    %v1672 = vpop.f32.mrb[0].mxu0
    %1673 = vdwg.mxu0
    %v1674 = vadd.f32 %v1515, %v1658
    %v1675 = vadd.f32 %v1516, %v1660
    %v1676 = vadd.f32 %v1517, %v1662
    %v1677 = vadd.f32 %v1518, %v1664
    %v1678 = vadd.f32 %v1519, %v1668
    %v1679 = vadd.f32 %v1520, %v1670
    %v1680 = vld [vmem:[#allocation3 + $0x4] sm:$0xff]
    %v1681 = vld [vmem:[#allocation3 + $0xc] sm:$0xff]
    %v1682 = vld [vmem:[#allocation3 + $0x14] sm:$0xff]
    %v1683 = vpack.c.bf16 %v1681, %v1680
    %v1684 = vpack.c.bf16 %v1682, %v1682
    %s1685 = scalar_lea.vmem [#allocation6], 512
    %v1686 = vld [vmem:[%s1685] sm:$0xff]
    %v1687 = vld [vmem:[%s1685 + $0x8] sm:$0xff]
    %v1688 = vld [vmem:[%s1685 + $0x10] sm:$0xff]
    %v1689 = vld [vmem:[%s1685 + $0x18] sm:$0xff]
    %v1690 = vld [vmem:[%s1685 + $0x20] sm:$0xff]
    %v1691 = vld [vmem:[%s1685 + $0x28] sm:$0xff]
    %v1692 = vld [vmem:[%s1685 + $0x30] sm:$0xff]
    %v1693 = vld [vmem:[%s1685 + $0x38] sm:$0xff]
    %v1694 = vld [vmem:[%s1685 + $0x40] sm:$0xff]
    %v1695 = vld [vmem:[%s1685 + $0x48] sm:$0xff]
    %v1696 = vld [vmem:[%s1685 + $0x50] sm:$0xff]
    %v1697 = vld [vmem:[%s1685 + $0x58] sm:$0xff]
    %v1698 = vld [vmem:[%s1685 + $0x60] sm:$0xff]
    %v1699 = vld [vmem:[%s1685 + $0x68] sm:$0xff]
    %v1700 = vld [vmem:[%s1685 + $0x70] sm:$0xff]
    %v1701 = vld [vmem:[%s1685 + $0x78] sm:$0xff]
    %v1718 = vunpack.c.l.b16 %v1686
    %v1719 = vunpack.c.h.b16 %v1686
    %v1720 = vunpack.c.l.b16 %v1687
    %v1721 = vunpack.c.h.b16 %v1687
    %v1722 = vunpack.c.l.b16 %v1688
    %v1723 = vunpack.c.h.b16 %v1688
    %v1724 = vunpack.c.l.b16 %v1689
    %v1725 = vunpack.c.h.b16 %v1689
    %v1726 = vunpack.c.l.b16 %v1690
    %v1727 = vunpack.c.h.b16 %v1690
    %v1728 = vunpack.c.l.b16 %v1691
    %v1729 = vunpack.c.h.b16 %v1691
    %v1730 = vunpack.c.l.b16 %v1692
    %v1731 = vunpack.c.h.b16 %v1692
    %v1732 = vunpack.c.l.b16 %v1693
    %v1733 = vunpack.c.h.b16 %v1693
    %v1734 = vunpack.c.l.b16 %v1694
    %v1735 = vunpack.c.h.b16 %v1694
    %v1736 = vunpack.c.l.b16 %v1695
    %v1737 = vunpack.c.h.b16 %v1695
    %v1738 = vunpack.c.l.b16 %v1696
    %v1739 = vunpack.c.h.b16 %v1696
    %v1740 = vunpack.c.l.b16 %v1697
    %v1741 = vunpack.c.h.b16 %v1697
    %v1742 = vunpack.c.l.b16 %v1698
    %v1743 = vunpack.c.h.b16 %v1698
    %v1744 = vunpack.c.l.b16 %v1699
    %v1745 = vunpack.c.h.b16 %v1699
    %v1746 = vunpack.c.l.b16 %v1700
    %v1747 = vunpack.c.h.b16 %v1700
    %v1748 = vunpack.c.l.b16 %v1701
    %v1749 = vunpack.c.h.b16 %v1701
    %v1750 = vpack.c.b16 %v1720, %v1718
    %v1751 = vpack.c.b16 %v1721, %v1719
    %v1752 = vpack.c.b16 %v1724, %v1722
    %v1753 = vpack.c.b16 %v1725, %v1723
    %v1754 = vpack.c.b16 %v1728, %v1726
    %v1755 = vpack.c.b16 %v1729, %v1727
    %v1756 = vpack.c.b16 %v1732, %v1730
    %v1757 = vpack.c.b16 %v1733, %v1731
    %v1758 = vpack.c.b16 %v1736, %v1734
    %v1759 = vpack.c.b16 %v1737, %v1735
    %v1760 = vpack.c.b16 %v1740, %v1738
    %v1761 = vpack.c.b16 %v1741, %v1739
    %v1762 = vpack.c.b16 %v1744, %v1742
    %v1763 = vpack.c.b16 %v1745, %v1743
    %v1764 = vpack.c.b16 %v1748, %v1746
    %v1765 = vpack.c.b16 %v1749, %v1747
    %1782 = vmatprep.subr.bf16.mxu0 %v1751
    %1783 = vmatpush1.bf16.msra.mxu0 %v1750
    %1784 = vmatprep.subr.bf16.mxu0 %v1753
    %1785 = vmatpush1.bf16.msra.mxu0 %v1752
    %1786 = vmatprep.subr.bf16.mxu0 %v1755
    %1787 = vmatpush1.bf16.msra.mxu0 %v1754
    %1788 = vmatprep.subr.bf16.mxu0 %v1757
    %1789 = vmatpush1.bf16.msra.mxu0 %v1756
    %1790 = vmatprep.subr.bf16.mxu0 %v1759
    %1791 = vmatpush1.bf16.msra.mxu0 %v1758
    %1792 = vmatprep.subr.bf16.mxu0 %v1761
    %1793 = vmatpush1.bf16.msra.mxu0 %v1760
    %1794 = vmatprep.subr.bf16.mxu0 %v1763
    %1795 = vmatpush1.bf16.msra.mxu0 %v1762
    %1796 = vmatprep.subr.bf16.mxu0 %v1765
    %1797 = vmatpush1.bf16.msra.mxu0 %v1764
    %1798 = vmatprep.subr.bf16.mxu0 0
    %1799 = vmatpush1.bf16.msra.mxu0 0
    %1800 = vmatprep.subr.bf16.mxu0 0
    %1801 = vmatpush1.bf16.msra.mxu0 0
    %1802 = vmatprep.subr.bf16.mxu0 0
    %1803 = vmatpush1.bf16.msra.mxu0 0
    %1804 = vmatprep.subr.bf16.mxu0 0
    %1805 = vmatpush1.bf16.msra.mxu0 0
    %1806 = vmatprep.subr.bf16.mxu0 0
    %1807 = vmatpush1.bf16.msra.mxu0 0
    %1808 = vmatprep.subr.bf16.mxu0 0
    %1809 = vmatpush1.bf16.msra.mxu0 0
    %1810 = vmatprep.subr.bf16.mxu0 0
    %1811 = vmatpush1.bf16.msra.mxu0 0
    %1812 = vmatprep.subr.bf16.mxu0 0
    %1813 = vmatpush1.bf16.msra.mxu0 0
    %1814 = vmatprep.mubr.bf16.mxu0 0
    %1815 = vmatmul.mubr.bf16.gmra.mrb[0].mxu0 %v1683
    %v1816 = vpop.f32.mrb[0].mxu0
    %v1817 = vadd.f32 0.0, %v1816
    %v1818 = vpop.f32.mrb[0].mxu0
    %v1819 = vadd.f32 0.0, %v1818
    %v1820 = vpop.f32.mrb[0].mxu0
    %v1821 = vadd.f32 0.0, %v1820
    %v1822 = vpop.f32.mrb[0].mxu0
    %v1823 = vadd.f32 0.0, %v1822
    %1824 = vmatprep.mubr.bf16.mxu0 0
    %1825 = vmatmul.mubr.bf16.gmra.mrb[0].mxu0 %v1684
    %v1826 = vpop.f32.mrb[0].mxu0
    %v1827 = vadd.f32 0.0, %v1826
    %v1828 = vpop.f32.mrb[0].mxu0
    %v1829 = vadd.f32 0.0, %v1828
    %v1830 = vpop.f32.mrb[0].mxu0
    %v1831 = vpop.f32.mrb[0].mxu0
    %1832 = vdwg.mxu0
    %v1833 = vadd.f32 %v1674, %v1817
    %v1834 = vadd.f32 %v1675, %v1819
    %v1835 = vadd.f32 %v1676, %v1821
    %v1836 = vadd.f32 %v1677, %v1823
    %v1837 = vadd.f32 %v1678, %v1827
    %v1838 = vadd.f32 %v1679, %v1829
    %v1839 = vld [vmem:[%s5] sm:$0x3]
    %v1841 = vlaneseq
    %v1842 = vshrl.u32 %v1841, 7
    %v1843 = vsub.s32 0, %v1842
    %v1844 = vrot.slane %v1839, %v1843
    %v1845 = vlaneseq
    %v1846 = vshrl.u32 %v1845, 7
    %v1847 = vsub.s32 1, %v1846
    %v1848 = vrot.slane %v1839, %v1847
    %v1851 = vadd.f32 %v1833, %v1844
    %v1852 = vadd.f32 %v1834, %v1848
    %v1853 = vadd.f32 %v1835, %v1844
    %v1854 = vadd.f32 %v1836, %v1848
    %v1855 = vadd.f32 %v1837, %v1844
    %v1856 = vadd.f32 %v1838, %v1848
    %v1857 = vmax.f32 %v1851, 0.0
    %v1858 = vmax.f32 %v1852, 0.0
    %v1859 = vmax.f32 %v1853, 0.0
    %v1860 = vmax.f32 %v1854, 0.0
    %v1861 = vmax.f32 %v1855, 0.0
    %v1862 = vmax.f32 %v1856, 0.0
    %v1863 = vpack.c.bf16 %v1859, %v1857
    %v1864 = vpack.c.bf16 %v1860, %v1858
    %v1865 = vpack.c.bf16 %v1861, %v1861
    %v1866 = vpack.c.bf16 %v1862, %v1862
    %v1867 = vld [vmem:[%s12] sm:$0xf]
    %v1868 = vld [vmem:[%s12 + $0x4] sm:$0x3]
    %v1871 = vunpack.c.l.b16 %v1867
    %v1872 = vunpack.c.l.b16 %v1868
    %v1873 = vpack.c.b16 %v1872, %v1871
    %vm1874 = vcmask 195584
    %v1876 = vsel %vm1874, %v1873, 0
    %vm1878 = vcmask 1043456
    %v1880 = vsel %vm1878, %v1865, 0
    %v1883 = vsel %vm1878, %v1866, 0
    %1885 = vmatprep.subr.bf16.mxu0 %v1864
    %1886 = vmatpush1.bf16.msra.mxu0 %v1863
    %1887 = vmatprep.subr.bf16.mxu0 %v1883
    %1888 = vmatpush1.bf16.msra.mxu0 %v1880
    %1889 = vmatprep.subr.bf16.mxu0 0
    %1890 = vmatpush1.bf16.msra.mxu0 0
    %1891 = vmatprep.subr.bf16.mxu0 0
    %1892 = vmatpush1.bf16.msra.mxu0 0
    %1893 = vmatprep.subr.bf16.mxu0 0
    %1894 = vmatpush1.bf16.msra.mxu0 0
    %1895 = vmatprep.subr.bf16.mxu0 0
    %1896 = vmatpush1.bf16.msra.mxu0 0
    %1897 = vmatprep.subr.bf16.mxu0 0
    %1898 = vmatpush1.bf16.msra.mxu0 0
    %1899 = vmatprep.subr.bf16.mxu0 0
    %1900 = vmatpush1.bf16.msra.mxu0 0
    %1901 = vmatprep.subr.bf16.mxu0 0
    %1902 = vmatpush1.bf16.msra.mxu0 0
    %1903 = vmatprep.subr.bf16.mxu0 0
    %1904 = vmatpush1.bf16.msra.mxu0 0
    %1905 = vmatprep.subr.bf16.mxu0 0
    %1906 = vmatpush1.bf16.msra.mxu0 0
    %1907 = vmatprep.subr.bf16.mxu0 0
    %1908 = vmatpush1.bf16.msra.mxu0 0
    %1909 = vmatprep.subr.bf16.mxu0 0
    %1910 = vmatpush1.bf16.msra.mxu0 0
    %1911 = vmatprep.subr.bf16.mxu0 0
    %1912 = vmatpush1.bf16.msra.mxu0 0
    %1913 = vmatprep.subr.bf16.mxu0 0
    %1914 = vmatpush1.bf16.msra.mxu0 0
    %1915 = vmatprep.subr.bf16.mxu0 0
    %1916 = vmatpush1.bf16.msra.mxu0 0
    %1917 = vmatprep.mubr.bf16.mxu0 0
    %1918 = vmatmul.mubr.bf16.gmra.mrb[0].mxu0 %v1876
    %v1919 = vpop.f32.mrb[0].mxu0
    %v1920 = vadd.f32 0.0, %v1919
    %v1921 = vpop.f32.mrb[0].mxu0
    %v1922 = vadd.f32 0.0, %v1921
    %v1923 = vpop.f32.mrb[0].mxu0
    %v1924 = vadd.f32 0.0, %v1923
    %v1925 = vpop.f32.mrb[0].mxu0
    %v1926 = vadd.f32 0.0, %v1925
    %1927 = vdwg.mxu0
    %v1928 = vld [vmem:[%s13] sm:$0xf]
    %v1929 = vld [vmem:[%s13 + $0x4] sm:$0x3]
    %v1932 = vunpack.c.l.b16 %v1928
    %v1933 = vunpack.c.l.b16 %v1929
    %v1934 = vpack.c.b16 %v1933, %v1932
    %v1936 = vsel %vm1874, %v1934, 0
    %1938 = vmatprep.subr.bf16.mxu0 %v1864
    %1939 = vmatpush1.bf16.msra.mxu0 %v1863
    %1940 = vmatprep.subr.bf16.mxu0 %v1883
    %1941 = vmatpush1.bf16.msra.mxu0 %v1880
    %1942 = vmatprep.subr.bf16.mxu0 0
    %1943 = vmatpush1.bf16.msra.mxu0 0
    %1944 = vmatprep.subr.bf16.mxu0 0
    %1945 = vmatpush1.bf16.msra.mxu0 0
    %1946 = vmatprep.subr.bf16.mxu0 0
    %1947 = vmatpush1.bf16.msra.mxu0 0
    %1948 = vmatprep.subr.bf16.mxu0 0
    %1949 = vmatpush1.bf16.msra.mxu0 0
    %1950 = vmatprep.subr.bf16.mxu0 0
    %1951 = vmatpush1.bf16.msra.mxu0 0
    %1952 = vmatprep.subr.bf16.mxu0 0
    %1953 = vmatpush1.bf16.msra.mxu0 0
    %1954 = vmatprep.subr.bf16.mxu0 0
    %1955 = vmatpush1.bf16.msra.mxu0 0
    %1956 = vmatprep.subr.bf16.mxu0 0
    %1957 = vmatpush1.bf16.msra.mxu0 0
    %1958 = vmatprep.subr.bf16.mxu0 0
    %1959 = vmatpush1.bf16.msra.mxu0 0
    %1960 = vmatprep.subr.bf16.mxu0 0
    %1961 = vmatpush1.bf16.msra.mxu0 0
    %1962 = vmatprep.subr.bf16.mxu0 0
    %1963 = vmatpush1.bf16.msra.mxu0 0
    %1964 = vmatprep.subr.bf16.mxu0 0
    %1965 = vmatpush1.bf16.msra.mxu0 0
    %1966 = vmatprep.subr.bf16.mxu0 0
    %1967 = vmatpush1.bf16.msra.mxu0 0
    %1968 = vmatprep.subr.bf16.mxu0 0
    %1969 = vmatpush1.bf16.msra.mxu0 0
    %1970 = vmatprep.mubr.bf16.mxu0 0
    %1971 = vmatmul.mubr.bf16.gmra.mrb[0].mxu0 %v1936
    %v1972 = vpop.f32.mrb[0].mxu0
    %v1973 = vadd.f32 0.0, %v1972
    %v1974 = vpop.f32.mrb[0].mxu0
    %v1975 = vadd.f32 0.0, %v1974
    %v1976 = vpop.f32.mrb[0].mxu0
    %v1977 = vadd.f32 0.0, %v1976
    %v1978 = vpop.f32.mrb[0].mxu0
    %v1979 = vadd.f32 0.0, %v1978
    %1980 = vdwg.mxu0
    %v1981 = vmax.f32 %v1920, %v1973
    %v1982 = vmax.f32 %v1922, %v1975
    %v1983 = vmax.f32 %v1924, %v1977
    %v1984 = vmax.f32 %v1926, %v1979
    %1985 = vst [vmem:[#allocation4] sm:$0x3] 0.0
    %1986 = vst [vmem:[#allocation4 + $0x8] sm:$0x3] 0.0
    %1987 = vst [vmem:[#allocation4 + $0x10] sm:$0xc0] 0.0
    %1988 = vst [vmem:[#allocation4 + $0x18] sm:$0xc0] 0.0
    %vm1993 = vcmask 1041408
    %v1994 = vrot.slane %v1981, 6
    %v1995 = vrot.slane %v1982, 6
    %v1996 = vrot.slane %v1983, 6
    %v1997 = vsel %vm1993, %v1994, %v1996
    %v1998 = vrot.slane %v1984, 6
    %v1999 = vsel %vm1993, %v1995, %v1998
    %2004 = vst [vmem:[#allocation4] sm:$0xfc] %v1994
    %2005 = vst [vmem:[#allocation4 + $0x8] sm:$0xfc] %v1995
    %2006 = vst [vmem:[#allocation4 + $0x10] sm:$0x3f] %v1997
    %2007 = vst [vmem:[#allocation4 + $0x18] sm:$0x3f] %v1999
    %v2008 = vld [vmem:[#allocation4] sm:$0xff]
    %v2009 = vld [vmem:[#allocation4 + $0x8] sm:$0xff]
    %v2010 = vld [vmem:[#allocation4 + $0x10] sm:$0xf]
    %v2011 = vld [vmem:[#allocation4 + $0x18] sm:$0xf]
    %v2012 = vpack.c.bf16 %v2010, %v2008
    %v2013 = vpack.c.bf16 %v2011, %v2009
    %v2014 = vld [vmem:[#allocation8] sm:$0xff]
    %v2015 = vld [vmem:[#allocation8 + $0x8] sm:$0xff]
    %v2016 = vld [vmem:[#allocation8 + $0x10] sm:$0xff]
    %v2017 = vld [vmem:[#allocation8 + $0x18] sm:$0xff]
    %v2018 = vld [vmem:[#allocation8 + $0x20] sm:$0xff]
    %v2019 = vld [vmem:[#allocation8 + $0x28] sm:$0xff]
    %v2020 = vld [vmem:[#allocation8 + $0x30] sm:$0xff]
    %v2021 = vld [vmem:[#allocation8 + $0x38] sm:$0xff]
    %v2022 = vld [vmem:[#allocation8 + $0x40] sm:$0xff]
    %v2023 = vld [vmem:[#allocation8 + $0x48] sm:$0xff]
    %v2024 = vld [vmem:[#allocation8 + $0x50] sm:$0xff]
    %v2025 = vld [vmem:[#allocation8 + $0x58] sm:$0xff]
    %v2026 = vld [vmem:[#allocation8 + $0x60] sm:$0xff]
    %v2027 = vld [vmem:[#allocation8 + $0x68] sm:$0xff]
    %v2028 = vld [vmem:[#allocation8 + $0x70] sm:$0xff]
    %v2029 = vld [vmem:[#allocation8 + $0x78] sm:$0xff]
    %v2030 = vld [vmem:[#allocation8 + $0x80] sm:$0xff]
    %v2031 = vld [vmem:[#allocation8 + $0x88] sm:$0xff]
    %v2032 = vld [vmem:[#allocation8 + $0x90] sm:$0xff]
    %v2033 = vld [vmem:[#allocation8 + $0x98] sm:$0xff]
    %v2034 = vld [vmem:[#allocation8 + $0xa0] sm:$0xff]
    %v2035 = vld [vmem:[#allocation8 + $0xa8] sm:$0xff]
    %v2036 = vld [vmem:[#allocation8 + $0xb0] sm:$0xff]
    %v2037 = vld [vmem:[#allocation8 + $0xb8] sm:$0xff]
    %v2038 = vld [vmem:[#allocation8 + $0xc0] sm:$0xff]
    %v2039 = vld [vmem:[#allocation8 + $0xc8] sm:$0xff]
    %v2040 = vld [vmem:[#allocation8 + $0xd0] sm:$0xff]
    %v2041 = vld [vmem:[#allocation8 + $0xd8] sm:$0xff]
    %v2042 = vld [vmem:[#allocation8 + $0xe0] sm:$0xff]
    %v2043 = vld [vmem:[#allocation8 + $0xe8] sm:$0xff]
    %v2044 = vld [vmem:[#allocation8 + $0xf0] sm:$0xff]
    %v2045 = vld [vmem:[#allocation8 + $0xf8] sm:$0xff]
    %v2046 = vld [vmem:[#allocation4] sm:$0xfe]
    %v2047 = vld [vmem:[#allocation4 + $0x8] sm:$0xfe]
    %v2048 = vld [vmem:[#allocation4 + $0x10] sm:$0x1f]
    %v2049 = vld [vmem:[#allocation4 + $0x18] sm:$0x1f]
    %v2050 = vpack.c.bf16 %v2048, %v2046
    %v2051 = vpack.c.bf16 %v2049, %v2047
    %s2052 = scalar_lea.vmem [#allocation8], 256
    %v2053 = vld [vmem:[%s2052] sm:$0xff]
    %v2054 = vld [vmem:[%s2052 + $0x8] sm:$0xff]
    %v2055 = vld [vmem:[%s2052 + $0x10] sm:$0xff]
    %v2056 = vld [vmem:[%s2052 + $0x18] sm:$0xff]
    %v2057 = vld [vmem:[%s2052 + $0x20] sm:$0xff]
    %v2058 = vld [vmem:[%s2052 + $0x28] sm:$0xff]
    %v2059 = vld [vmem:[%s2052 + $0x30] sm:$0xff]
    %v2060 = vld [vmem:[%s2052 + $0x38] sm:$0xff]
    %v2061 = vld [vmem:[%s2052 + $0x40] sm:$0xff]
    %v2062 = vld [vmem:[%s2052 + $0x48] sm:$0xff]
    %v2063 = vld [vmem:[%s2052 + $0x50] sm:$0xff]
    %v2064 = vld [vmem:[%s2052 + $0x58] sm:$0xff]
    %v2065 = vld [vmem:[%s2052 + $0x60] sm:$0xff]
    %v2066 = vld [vmem:[%s2052 + $0x68] sm:$0xff]
    %v2067 = vld [vmem:[%s2052 + $0x70] sm:$0xff]
    %v2068 = vld [vmem:[%s2052 + $0x78] sm:$0xff]
    %v2069 = vld [vmem:[%s2052 + $0x80] sm:$0xff]
    %v2070 = vld [vmem:[%s2052 + $0x88] sm:$0xff]
    %v2071 = vld [vmem:[%s2052 + $0x90] sm:$0xff]
    %v2072 = vld [vmem:[%s2052 + $0x98] sm:$0xff]
    %v2073 = vld [vmem:[%s2052 + $0xa0] sm:$0xff]
    %v2074 = vld [vmem:[%s2052 + $0xa8] sm:$0xff]
    %v2075 = vld [vmem:[%s2052 + $0xb0] sm:$0xff]
    %v2076 = vld [vmem:[%s2052 + $0xb8] sm:$0xff]
    %v2077 = vld [vmem:[%s2052 + $0xc0] sm:$0xff]
    %v2078 = vld [vmem:[%s2052 + $0xc8] sm:$0xff]
    %v2079 = vld [vmem:[%s2052 + $0xd0] sm:$0xff]
    %v2080 = vld [vmem:[%s2052 + $0xd8] sm:$0xff]
    %v2081 = vld [vmem:[%s2052 + $0xe0] sm:$0xff]
    %v2082 = vld [vmem:[%s2052 + $0xe8] sm:$0xff]
    %v2083 = vld [vmem:[%s2052 + $0xf0] sm:$0xff]
    %v2084 = vld [vmem:[%s2052 + $0xf8] sm:$0xff]
    %v2086 = vshrl.u32 %v2050, 16
    %v2088 = vshll.u32 %v2050, 16
    %v2090 = vrot.slane %v2088, 1
    %v2091 = vor.u32 %v2086, %v2090
    %v2093 = vshrl.u32 %v2051, 16
    %v2095 = vshll.u32 %v2051, 16
    %v2097 = vrot.slane %v2095, 1
    %v2098 = vor.u32 %v2093, %v2097
    %v2133 = vunpack.c.l.b16 %v2053
    %v2134 = vunpack.c.h.b16 %v2053
    %v2135 = vunpack.c.l.b16 %v2054
    %v2136 = vunpack.c.h.b16 %v2054
    %v2137 = vunpack.c.l.b16 %v2055
    %v2138 = vunpack.c.h.b16 %v2055
    %v2139 = vunpack.c.l.b16 %v2056
    %v2140 = vunpack.c.h.b16 %v2056
    %v2141 = vunpack.c.l.b16 %v2057
    %v2142 = vunpack.c.h.b16 %v2057
    %v2143 = vunpack.c.l.b16 %v2058
    %v2144 = vunpack.c.h.b16 %v2058
    %v2145 = vunpack.c.l.b16 %v2059
    %v2146 = vunpack.c.h.b16 %v2059
    %v2147 = vunpack.c.l.b16 %v2060
    %v2148 = vunpack.c.h.b16 %v2060
    %v2149 = vunpack.c.l.b16 %v2061
    %v2150 = vunpack.c.h.b16 %v2061
    %v2151 = vunpack.c.l.b16 %v2062
    %v2152 = vunpack.c.h.b16 %v2062
    %v2153 = vunpack.c.l.b16 %v2063
    %v2154 = vunpack.c.h.b16 %v2063
    %v2155 = vunpack.c.l.b16 %v2064
    %v2156 = vunpack.c.h.b16 %v2064
    %v2157 = vunpack.c.l.b16 %v2065
    %v2158 = vunpack.c.h.b16 %v2065
    %v2159 = vunpack.c.l.b16 %v2066
    %v2160 = vunpack.c.h.b16 %v2066
    %v2161 = vunpack.c.l.b16 %v2067
    %v2162 = vunpack.c.h.b16 %v2067
    %v2163 = vunpack.c.l.b16 %v2068
    %v2164 = vunpack.c.h.b16 %v2068
    %v2165 = vunpack.c.l.b16 %v2069
    %v2166 = vunpack.c.h.b16 %v2069
    %v2167 = vunpack.c.l.b16 %v2070
    %v2168 = vunpack.c.h.b16 %v2070
    %v2169 = vunpack.c.l.b16 %v2071
    %v2170 = vunpack.c.h.b16 %v2071
    %v2171 = vunpack.c.l.b16 %v2072
    %v2172 = vunpack.c.h.b16 %v2072
    %v2173 = vunpack.c.l.b16 %v2073
    %v2174 = vunpack.c.h.b16 %v2073
    %v2175 = vunpack.c.l.b16 %v2074
    %v2176 = vunpack.c.h.b16 %v2074
    %v2177 = vunpack.c.l.b16 %v2075
    %v2178 = vunpack.c.h.b16 %v2075
    %v2179 = vunpack.c.l.b16 %v2076
    %v2180 = vunpack.c.h.b16 %v2076
    %v2181 = vunpack.c.l.b16 %v2077
    %v2182 = vunpack.c.h.b16 %v2077
    %v2183 = vunpack.c.l.b16 %v2078
    %v2184 = vunpack.c.h.b16 %v2078
    %v2185 = vunpack.c.l.b16 %v2079
    %v2186 = vunpack.c.h.b16 %v2079
    %v2187 = vunpack.c.l.b16 %v2080
    %v2188 = vunpack.c.h.b16 %v2080
    %v2189 = vunpack.c.l.b16 %v2081
    %v2190 = vunpack.c.h.b16 %v2081
    %v2191 = vunpack.c.l.b16 %v2082
    %v2192 = vunpack.c.h.b16 %v2082
    %v2193 = vunpack.c.l.b16 %v2083
    %v2194 = vunpack.c.h.b16 %v2083
    %v2195 = vunpack.c.l.b16 %v2084
    %v2196 = vunpack.c.h.b16 %v2084
    %v2197 = vpack.c.b16 %v2135, %v2133
    %v2198 = vpack.c.b16 %v2136, %v2134
    %v2199 = vpack.c.b16 %v2139, %v2137
    %v2200 = vpack.c.b16 %v2140, %v2138
    %v2201 = vpack.c.b16 %v2143, %v2141
    %v2202 = vpack.c.b16 %v2144, %v2142
    %v2203 = vpack.c.b16 %v2147, %v2145
    %v2204 = vpack.c.b16 %v2148, %v2146
    %v2205 = vpack.c.b16 %v2151, %v2149
    %v2206 = vpack.c.b16 %v2152, %v2150
    %v2207 = vpack.c.b16 %v2155, %v2153
    %v2208 = vpack.c.b16 %v2156, %v2154
    %v2209 = vpack.c.b16 %v2159, %v2157
    %v2210 = vpack.c.b16 %v2160, %v2158
    %v2211 = vpack.c.b16 %v2163, %v2161
    %v2212 = vpack.c.b16 %v2164, %v2162
    %v2213 = vpack.c.b16 %v2167, %v2165
    %v2214 = vpack.c.b16 %v2168, %v2166
    %v2215 = vpack.c.b16 %v2171, %v2169
    %v2216 = vpack.c.b16 %v2172, %v2170
    %v2217 = vpack.c.b16 %v2175, %v2173
    %v2218 = vpack.c.b16 %v2176, %v2174
    %v2219 = vpack.c.b16 %v2179, %v2177
    %v2220 = vpack.c.b16 %v2180, %v2178
    %v2221 = vpack.c.b16 %v2183, %v2181
    %v2222 = vpack.c.b16 %v2184, %v2182
    %v2223 = vpack.c.b16 %v2187, %v2185
    %v2224 = vpack.c.b16 %v2188, %v2186
    %v2225 = vpack.c.b16 %v2191, %v2189
    %v2226 = vpack.c.b16 %v2192, %v2190
    %v2227 = vpack.c.b16 %v2195, %v2193
    %v2228 = vpack.c.b16 %v2196, %v2194
    %2261 = vmatprep.subr.bf16.mxu0 %v2198
    %2262 = vmatpush1.bf16.msra.mxu0 %v2197
    %2263 = vmatprep.subr.bf16.mxu0 %v2200
    %2264 = vmatpush1.bf16.msra.mxu0 %v2199
    %2265 = vmatprep.subr.bf16.mxu0 %v2202
    %2266 = vmatpush1.bf16.msra.mxu0 %v2201
    %2267 = vmatprep.subr.bf16.mxu0 %v2204
    %2268 = vmatpush1.bf16.msra.mxu0 %v2203
    %2269 = vmatprep.subr.bf16.mxu0 %v2206
    %2270 = vmatpush1.bf16.msra.mxu0 %v2205
    %2271 = vmatprep.subr.bf16.mxu0 %v2208
    %2272 = vmatpush1.bf16.msra.mxu0 %v2207
    %2273 = vmatprep.subr.bf16.mxu0 %v2210
    %2274 = vmatpush1.bf16.msra.mxu0 %v2209
    %2275 = vmatprep.subr.bf16.mxu0 %v2212
    %2276 = vmatpush1.bf16.msra.mxu0 %v2211
    %2277 = vmatprep.subr.bf16.mxu0 %v2214
    %2278 = vmatpush1.bf16.msra.mxu0 %v2213
    %2279 = vmatprep.subr.bf16.mxu0 %v2216
    %2280 = vmatpush1.bf16.msra.mxu0 %v2215
    %2281 = vmatprep.subr.bf16.mxu0 %v2218
    %2282 = vmatpush1.bf16.msra.mxu0 %v2217
    %2283 = vmatprep.subr.bf16.mxu0 %v2220
    %2284 = vmatpush1.bf16.msra.mxu0 %v2219
    %2285 = vmatprep.subr.bf16.mxu0 %v2222
    %2286 = vmatpush1.bf16.msra.mxu0 %v2221
    %2287 = vmatprep.subr.bf16.mxu0 %v2224
    %2288 = vmatpush1.bf16.msra.mxu0 %v2223
    %2289 = vmatprep.subr.bf16.mxu0 %v2226
    %2290 = vmatpush1.bf16.msra.mxu0 %v2225
    %2291 = vmatprep.subr.bf16.mxu0 %v2228
    %2292 = vmatpush1.bf16.msra.mxu0 %v2227
    %2293 = vmatprep.mubr.bf16.mxu0 %v2098
    %2294 = vmatmul.mubr.bf16.gmra.mrb[0].mxu0 %v2091
    %v2295 = vpop.f32.mrb[0].mxu0
    %v2296 = vadd.f32 0.0, %v2295
    %v2297 = vpop.f32.mrb[0].mxu0
    %v2298 = vadd.f32 0.0, %v2297
    %v2299 = vpop.f32.mrb[0].mxu0
    %v2300 = vadd.f32 0.0, %v2299
    %v2301 = vpop.f32.mrb[0].mxu0
    %v2302 = vadd.f32 0.0, %v2301
    %2303 = vdwg.mxu0
    %v2336 = vunpack.c.l.b16 %v2014
    %v2337 = vunpack.c.h.b16 %v2014
    %v2338 = vunpack.c.l.b16 %v2015
    %v2339 = vunpack.c.h.b16 %v2015
    %v2340 = vunpack.c.l.b16 %v2016
    %v2341 = vunpack.c.h.b16 %v2016
    %v2342 = vunpack.c.l.b16 %v2017
    %v2343 = vunpack.c.h.b16 %v2017
    %v2344 = vunpack.c.l.b16 %v2018
    %v2345 = vunpack.c.h.b16 %v2018
    %v2346 = vunpack.c.l.b16 %v2019
    %v2347 = vunpack.c.h.b16 %v2019
    %v2348 = vunpack.c.l.b16 %v2020
    %v2349 = vunpack.c.h.b16 %v2020
    %v2350 = vunpack.c.l.b16 %v2021
    %v2351 = vunpack.c.h.b16 %v2021
    %v2352 = vunpack.c.l.b16 %v2022
    %v2353 = vunpack.c.h.b16 %v2022
    %v2354 = vunpack.c.l.b16 %v2023
    %v2355 = vunpack.c.h.b16 %v2023
    %v2356 = vunpack.c.l.b16 %v2024
    %v2357 = vunpack.c.h.b16 %v2024
    %v2358 = vunpack.c.l.b16 %v2025
    %v2359 = vunpack.c.h.b16 %v2025
    %v2360 = vunpack.c.l.b16 %v2026
    %v2361 = vunpack.c.h.b16 %v2026
    %v2362 = vunpack.c.l.b16 %v2027
    %v2363 = vunpack.c.h.b16 %v2027
    %v2364 = vunpack.c.l.b16 %v2028
    %v2365 = vunpack.c.h.b16 %v2028
    %v2366 = vunpack.c.l.b16 %v2029
    %v2367 = vunpack.c.h.b16 %v2029
    %v2368 = vunpack.c.l.b16 %v2030
    %v2369 = vunpack.c.h.b16 %v2030
    %v2370 = vunpack.c.l.b16 %v2031
    %v2371 = vunpack.c.h.b16 %v2031
    %v2372 = vunpack.c.l.b16 %v2032
    %v2373 = vunpack.c.h.b16 %v2032
    %v2374 = vunpack.c.l.b16 %v2033
    %v2375 = vunpack.c.h.b16 %v2033
    %v2376 = vunpack.c.l.b16 %v2034
    %v2377 = vunpack.c.h.b16 %v2034
    %v2378 = vunpack.c.l.b16 %v2035
    %v2379 = vunpack.c.h.b16 %v2035
    %v2380 = vunpack.c.l.b16 %v2036
    %v2381 = vunpack.c.h.b16 %v2036
    %v2382 = vunpack.c.l.b16 %v2037
    %v2383 = vunpack.c.h.b16 %v2037
    %v2384 = vunpack.c.l.b16 %v2038
    %v2385 = vunpack.c.h.b16 %v2038
    %v2386 = vunpack.c.l.b16 %v2039
    %v2387 = vunpack.c.h.b16 %v2039
    %v2388 = vunpack.c.l.b16 %v2040
    %v2389 = vunpack.c.h.b16 %v2040
    %v2390 = vunpack.c.l.b16 %v2041
    %v2391 = vunpack.c.h.b16 %v2041
    %v2392 = vunpack.c.l.b16 %v2042
    %v2393 = vunpack.c.h.b16 %v2042
    %v2394 = vunpack.c.l.b16 %v2043
    %v2395 = vunpack.c.h.b16 %v2043
    %v2396 = vunpack.c.l.b16 %v2044
    %v2397 = vunpack.c.h.b16 %v2044
    %v2398 = vunpack.c.l.b16 %v2045
    %v2399 = vunpack.c.h.b16 %v2045
    %v2400 = vpack.c.b16 %v2338, %v2336
    %v2401 = vpack.c.b16 %v2339, %v2337
    %v2402 = vpack.c.b16 %v2342, %v2340
    %v2403 = vpack.c.b16 %v2343, %v2341
    %v2404 = vpack.c.b16 %v2346, %v2344
    %v2405 = vpack.c.b16 %v2347, %v2345
    %v2406 = vpack.c.b16 %v2350, %v2348
    %v2407 = vpack.c.b16 %v2351, %v2349
    %v2408 = vpack.c.b16 %v2354, %v2352
    %v2409 = vpack.c.b16 %v2355, %v2353
    %v2410 = vpack.c.b16 %v2358, %v2356
    %v2411 = vpack.c.b16 %v2359, %v2357
    %v2412 = vpack.c.b16 %v2362, %v2360
    %v2413 = vpack.c.b16 %v2363, %v2361
    %v2414 = vpack.c.b16 %v2366, %v2364
    %v2415 = vpack.c.b16 %v2367, %v2365
    %v2416 = vpack.c.b16 %v2370, %v2368
    %v2417 = vpack.c.b16 %v2371, %v2369
    %v2418 = vpack.c.b16 %v2374, %v2372
    %v2419 = vpack.c.b16 %v2375, %v2373
    %v2420 = vpack.c.b16 %v2378, %v2376
    %v2421 = vpack.c.b16 %v2379, %v2377
    %v2422 = vpack.c.b16 %v2382, %v2380
    %v2423 = vpack.c.b16 %v2383, %v2381
    %v2424 = vpack.c.b16 %v2386, %v2384
    %v2425 = vpack.c.b16 %v2387, %v2385
    %v2426 = vpack.c.b16 %v2390, %v2388
    %v2427 = vpack.c.b16 %v2391, %v2389
    %v2428 = vpack.c.b16 %v2394, %v2392
    %v2429 = vpack.c.b16 %v2395, %v2393
    %v2430 = vpack.c.b16 %v2398, %v2396
    %v2431 = vpack.c.b16 %v2399, %v2397
    %2464 = vmatprep.subr.bf16.mxu0 %v2401
    %2465 = vmatpush1.bf16.msra.mxu0 %v2400
    %2466 = vmatprep.subr.bf16.mxu0 %v2403
    %2467 = vmatpush1.bf16.msra.mxu0 %v2402
    %2468 = vmatprep.subr.bf16.mxu0 %v2405
    %2469 = vmatpush1.bf16.msra.mxu0 %v2404
    %2470 = vmatprep.subr.bf16.mxu0 %v2407
    %2471 = vmatpush1.bf16.msra.mxu0 %v2406
    %2472 = vmatprep.subr.bf16.mxu0 %v2409
    %2473 = vmatpush1.bf16.msra.mxu0 %v2408
    %2474 = vmatprep.subr.bf16.mxu0 %v2411
    %2475 = vmatpush1.bf16.msra.mxu0 %v2410
    %2476 = vmatprep.subr.bf16.mxu0 %v2413
    %2477 = vmatpush1.bf16.msra.mxu0 %v2412
    %2478 = vmatprep.subr.bf16.mxu0 %v2415
    %2479 = vmatpush1.bf16.msra.mxu0 %v2414
    %2480 = vmatprep.subr.bf16.mxu0 %v2417
    %2481 = vmatpush1.bf16.msra.mxu0 %v2416
    %2482 = vmatprep.subr.bf16.mxu0 %v2419
    %2483 = vmatpush1.bf16.msra.mxu0 %v2418
    %2484 = vmatprep.subr.bf16.mxu0 %v2421
    %2485 = vmatpush1.bf16.msra.mxu0 %v2420
    %2486 = vmatprep.subr.bf16.mxu0 %v2423
    %2487 = vmatpush1.bf16.msra.mxu0 %v2422
    %2488 = vmatprep.subr.bf16.mxu0 %v2425
    %2489 = vmatpush1.bf16.msra.mxu0 %v2424
    %2490 = vmatprep.subr.bf16.mxu0 %v2427
    %2491 = vmatpush1.bf16.msra.mxu0 %v2426
    %2492 = vmatprep.subr.bf16.mxu0 %v2429
    %2493 = vmatpush1.bf16.msra.mxu0 %v2428
    %2494 = vmatprep.subr.bf16.mxu0 %v2431
    %2495 = vmatpush1.bf16.msra.mxu0 %v2430
    %2496 = vmatprep.mubr.bf16.mxu0 %v2013
    %2497 = vmatmul.mubr.bf16.gmra.mrb[0].mxu0 %v2012
    %v2498 = vpop.f32.mrb[0].mxu0
    %v2499 = vadd.f32 %v2296, %v2498
    %v2500 = vpop.f32.mrb[0].mxu0
    %v2501 = vadd.f32 %v2298, %v2500
    %v2502 = vpop.f32.mrb[0].mxu0
    %v2503 = vadd.f32 %v2300, %v2502
    %v2504 = vpop.f32.mrb[0].mxu0
    %v2505 = vadd.f32 %v2302, %v2504
    %2506 = vdwg.mxu0
    %v2507 = vld [vmem:[#allocation4] sm:$0xfc]
    %v2508 = vld [vmem:[#allocation4 + $0x8] sm:$0xfc]
    %v2509 = vld [vmem:[#allocation4 + $0x10] sm:$0x3f]
    %v2510 = vld [vmem:[#allocation4 + $0x18] sm:$0x3f]
    %v2511 = vpack.c.bf16 %v2509, %v2507
    %v2512 = vpack.c.bf16 %v2510, %v2508
    %s2513 = scalar_lea.vmem [#allocation8], 512
    %v2514 = vld [vmem:[%s2513] sm:$0xff]
    %v2515 = vld [vmem:[%s2513 + $0x8] sm:$0xff]
    %v2516 = vld [vmem:[%s2513 + $0x10] sm:$0xff]
    %v2517 = vld [vmem:[%s2513 + $0x18] sm:$0xff]
    %v2518 = vld [vmem:[%s2513 + $0x20] sm:$0xff]
    %v2519 = vld [vmem:[%s2513 + $0x28] sm:$0xff]
    %v2520 = vld [vmem:[%s2513 + $0x30] sm:$0xff]
    %v2521 = vld [vmem:[%s2513 + $0x38] sm:$0xff]
    %v2522 = vld [vmem:[%s2513 + $0x40] sm:$0xff]
    %v2523 = vld [vmem:[%s2513 + $0x48] sm:$0xff]
    %v2524 = vld [vmem:[%s2513 + $0x50] sm:$0xff]
    %v2525 = vld [vmem:[%s2513 + $0x58] sm:$0xff]
    %v2526 = vld [vmem:[%s2513 + $0x60] sm:$0xff]
    %v2527 = vld [vmem:[%s2513 + $0x68] sm:$0xff]
    %v2528 = vld [vmem:[%s2513 + $0x70] sm:$0xff]
    %v2529 = vld [vmem:[%s2513 + $0x78] sm:$0xff]
    %v2530 = vld [vmem:[%s2513 + $0x80] sm:$0xff]
    %v2531 = vld [vmem:[%s2513 + $0x88] sm:$0xff]
    %v2532 = vld [vmem:[%s2513 + $0x90] sm:$0xff]
    %v2533 = vld [vmem:[%s2513 + $0x98] sm:$0xff]
    %v2534 = vld [vmem:[%s2513 + $0xa0] sm:$0xff]
    %v2535 = vld [vmem:[%s2513 + $0xa8] sm:$0xff]
    %v2536 = vld [vmem:[%s2513 + $0xb0] sm:$0xff]
    %v2537 = vld [vmem:[%s2513 + $0xb8] sm:$0xff]
    %v2538 = vld [vmem:[%s2513 + $0xc0] sm:$0xff]
    %v2539 = vld [vmem:[%s2513 + $0xc8] sm:$0xff]
    %v2540 = vld [vmem:[%s2513 + $0xd0] sm:$0xff]
    %v2541 = vld [vmem:[%s2513 + $0xd8] sm:$0xff]
    %v2542 = vld [vmem:[%s2513 + $0xe0] sm:$0xff]
    %v2543 = vld [vmem:[%s2513 + $0xe8] sm:$0xff]
    %v2544 = vld [vmem:[%s2513 + $0xf0] sm:$0xff]
    %v2545 = vld [vmem:[%s2513 + $0xf8] sm:$0xff]
    %v2548 = vrot.slane %v2511, 1
    %v2549 = vrot.slane %v2512, 1
    %v2584 = vunpack.c.l.b16 %v2514
    %v2585 = vunpack.c.h.b16 %v2514
    %v2586 = vunpack.c.l.b16 %v2515
    %v2587 = vunpack.c.h.b16 %v2515
    %v2588 = vunpack.c.l.b16 %v2516
    %v2589 = vunpack.c.h.b16 %v2516
    %v2590 = vunpack.c.l.b16 %v2517
    %v2591 = vunpack.c.h.b16 %v2517
    %v2592 = vunpack.c.l.b16 %v2518
    %v2593 = vunpack.c.h.b16 %v2518
    %v2594 = vunpack.c.l.b16 %v2519
    %v2595 = vunpack.c.h.b16 %v2519
    %v2596 = vunpack.c.l.b16 %v2520
    %v2597 = vunpack.c.h.b16 %v2520
    %v2598 = vunpack.c.l.b16 %v2521
    %v2599 = vunpack.c.h.b16 %v2521
    %v2600 = vunpack.c.l.b16 %v2522
    %v2601 = vunpack.c.h.b16 %v2522
    %v2602 = vunpack.c.l.b16 %v2523
    %v2603 = vunpack.c.h.b16 %v2523
    %v2604 = vunpack.c.l.b16 %v2524
    %v2605 = vunpack.c.h.b16 %v2524
    %v2606 = vunpack.c.l.b16 %v2525
    %v2607 = vunpack.c.h.b16 %v2525
    %v2608 = vunpack.c.l.b16 %v2526
    %v2609 = vunpack.c.h.b16 %v2526
    %v2610 = vunpack.c.l.b16 %v2527
    %v2611 = vunpack.c.h.b16 %v2527
    %v2612 = vunpack.c.l.b16 %v2528
    %v2613 = vunpack.c.h.b16 %v2528
    %v2614 = vunpack.c.l.b16 %v2529
    %v2615 = vunpack.c.h.b16 %v2529
    %v2616 = vunpack.c.l.b16 %v2530
    %v2617 = vunpack.c.h.b16 %v2530
    %v2618 = vunpack.c.l.b16 %v2531
    %v2619 = vunpack.c.h.b16 %v2531
    %v2620 = vunpack.c.l.b16 %v2532
    %v2621 = vunpack.c.h.b16 %v2532
    %v2622 = vunpack.c.l.b16 %v2533
    %v2623 = vunpack.c.h.b16 %v2533
    %v2624 = vunpack.c.l.b16 %v2534
    %v2625 = vunpack.c.h.b16 %v2534
    %v2626 = vunpack.c.l.b16 %v2535
    %v2627 = vunpack.c.h.b16 %v2535
    %v2628 = vunpack.c.l.b16 %v2536
    %v2629 = vunpack.c.h.b16 %v2536
    %v2630 = vunpack.c.l.b16 %v2537
    %v2631 = vunpack.c.h.b16 %v2537
    %v2632 = vunpack.c.l.b16 %v2538
    %v2633 = vunpack.c.h.b16 %v2538
    %v2634 = vunpack.c.l.b16 %v2539
    %v2635 = vunpack.c.h.b16 %v2539
    %v2636 = vunpack.c.l.b16 %v2540
    %v2637 = vunpack.c.h.b16 %v2540
    %v2638 = vunpack.c.l.b16 %v2541
    %v2639 = vunpack.c.h.b16 %v2541
    %v2640 = vunpack.c.l.b16 %v2542
    %v2641 = vunpack.c.h.b16 %v2542
    %v2642 = vunpack.c.l.b16 %v2543
    %v2643 = vunpack.c.h.b16 %v2543
    %v2644 = vunpack.c.l.b16 %v2544
    %v2645 = vunpack.c.h.b16 %v2544
    %v2646 = vunpack.c.l.b16 %v2545
    %v2647 = vunpack.c.h.b16 %v2545
    %v2648 = vpack.c.b16 %v2586, %v2584
    %v2649 = vpack.c.b16 %v2587, %v2585
    %v2650 = vpack.c.b16 %v2590, %v2588
    %v2651 = vpack.c.b16 %v2591, %v2589
    %v2652 = vpack.c.b16 %v2594, %v2592
    %v2653 = vpack.c.b16 %v2595, %v2593
    %v2654 = vpack.c.b16 %v2598, %v2596
    %v2655 = vpack.c.b16 %v2599, %v2597
    %v2656 = vpack.c.b16 %v2602, %v2600
    %v2657 = vpack.c.b16 %v2603, %v2601
    %v2658 = vpack.c.b16 %v2606, %v2604
    %v2659 = vpack.c.b16 %v2607, %v2605
    %v2660 = vpack.c.b16 %v2610, %v2608
    %v2661 = vpack.c.b16 %v2611, %v2609
    %v2662 = vpack.c.b16 %v2614, %v2612
    %v2663 = vpack.c.b16 %v2615, %v2613
    %v2664 = vpack.c.b16 %v2618, %v2616
    %v2665 = vpack.c.b16 %v2619, %v2617
    %v2666 = vpack.c.b16 %v2622, %v2620
    %v2667 = vpack.c.b16 %v2623, %v2621
    %v2668 = vpack.c.b16 %v2626, %v2624
    %v2669 = vpack.c.b16 %v2627, %v2625
    %v2670 = vpack.c.b16 %v2630, %v2628
    %v2671 = vpack.c.b16 %v2631, %v2629
    %v2672 = vpack.c.b16 %v2634, %v2632
    %v2673 = vpack.c.b16 %v2635, %v2633
    %v2674 = vpack.c.b16 %v2638, %v2636
    %v2675 = vpack.c.b16 %v2639, %v2637
    %v2676 = vpack.c.b16 %v2642, %v2640
    %v2677 = vpack.c.b16 %v2643, %v2641
    %v2678 = vpack.c.b16 %v2646, %v2644
    %v2679 = vpack.c.b16 %v2647, %v2645
    %2712 = vmatprep.subr.bf16.mxu0 %v2649
    %2713 = vmatpush1.bf16.msra.mxu0 %v2648
    %2714 = vmatprep.subr.bf16.mxu0 %v2651
    %2715 = vmatpush1.bf16.msra.mxu0 %v2650
    %2716 = vmatprep.subr.bf16.mxu0 %v2653
    %2717 = vmatpush1.bf16.msra.mxu0 %v2652
    %2718 = vmatprep.subr.bf16.mxu0 %v2655
    %2719 = vmatpush1.bf16.msra.mxu0 %v2654
    %2720 = vmatprep.subr.bf16.mxu0 %v2657
    %2721 = vmatpush1.bf16.msra.mxu0 %v2656
    %2722 = vmatprep.subr.bf16.mxu0 %v2659
    %2723 = vmatpush1.bf16.msra.mxu0 %v2658
    %2724 = vmatprep.subr.bf16.mxu0 %v2661
    %2725 = vmatpush1.bf16.msra.mxu0 %v2660
    %2726 = vmatprep.subr.bf16.mxu0 %v2663
    %2727 = vmatpush1.bf16.msra.mxu0 %v2662
    %2728 = vmatprep.subr.bf16.mxu0 %v2665
    %2729 = vmatpush1.bf16.msra.mxu0 %v2664
    %2730 = vmatprep.subr.bf16.mxu0 %v2667
    %2731 = vmatpush1.bf16.msra.mxu0 %v2666
    %2732 = vmatprep.subr.bf16.mxu0 %v2669
    %2733 = vmatpush1.bf16.msra.mxu0 %v2668
    %2734 = vmatprep.subr.bf16.mxu0 %v2671
    %2735 = vmatpush1.bf16.msra.mxu0 %v2670
    %2736 = vmatprep.subr.bf16.mxu0 %v2673
    %2737 = vmatpush1.bf16.msra.mxu0 %v2672
    %2738 = vmatprep.subr.bf16.mxu0 %v2675
    %2739 = vmatpush1.bf16.msra.mxu0 %v2674
    %2740 = vmatprep.subr.bf16.mxu0 %v2677
    %2741 = vmatpush1.bf16.msra.mxu0 %v2676
    %2742 = vmatprep.subr.bf16.mxu0 %v2679
    %2743 = vmatpush1.bf16.msra.mxu0 %v2678
    %2744 = vmatprep.mubr.bf16.mxu0 %v2549
    %2745 = vmatmul.mubr.bf16.gmra.mrb[0].mxu0 %v2548
    %v2746 = vpop.f32.mrb[0].mxu0
    %v2747 = vadd.f32 0.0, %v2746
    %v2748 = vpop.f32.mrb[0].mxu0
    %v2749 = vadd.f32 0.0, %v2748
    %v2750 = vpop.f32.mrb[0].mxu0
    %v2751 = vadd.f32 0.0, %v2750
    %v2752 = vpop.f32.mrb[0].mxu0
    %v2753 = vadd.f32 0.0, %v2752
    %2754 = vdwg.mxu0
    %v2755 = vadd.f32 %v2499, %v2747
    %v2756 = vadd.f32 %v2501, %v2749
    %v2757 = vadd.f32 %v2503, %v2751
    %v2758 = vadd.f32 %v2505, %v2753
    %v2759 = vld [vmem:[#allocation4] sm:$0xf8]
    %v2760 = vld [vmem:[#allocation4 + $0x8] sm:$0xf8]
    %v2761 = vld [vmem:[#allocation4 + $0x10] sm:$0x7f]
    %v2762 = vld [vmem:[#allocation4 + $0x18] sm:$0x7f]
    %v2763 = vpack.c.bf16 %v2761, %v2759
    %v2764 = vpack.c.bf16 %v2762, %v2760
    %s2765 = scalar_lea.vmem [#allocation8], 768
    %v2766 = vld [vmem:[%s2765] sm:$0xff]
    %v2767 = vld [vmem:[%s2765 + $0x8] sm:$0xff]
    %v2768 = vld [vmem:[%s2765 + $0x10] sm:$0xff]
    %v2769 = vld [vmem:[%s2765 + $0x18] sm:$0xff]
    %v2770 = vld [vmem:[%s2765 + $0x20] sm:$0xff]
    %v2771 = vld [vmem:[%s2765 + $0x28] sm:$0xff]
    %v2772 = vld [vmem:[%s2765 + $0x30] sm:$0xff]
    %v2773 = vld [vmem:[%s2765 + $0x38] sm:$0xff]
    %v2774 = vld [vmem:[%s2765 + $0x40] sm:$0xff]
    %v2775 = vld [vmem:[%s2765 + $0x48] sm:$0xff]
    %v2776 = vld [vmem:[%s2765 + $0x50] sm:$0xff]
    %v2777 = vld [vmem:[%s2765 + $0x58] sm:$0xff]
    %v2778 = vld [vmem:[%s2765 + $0x60] sm:$0xff]
    %v2779 = vld [vmem:[%s2765 + $0x68] sm:$0xff]
    %v2780 = vld [vmem:[%s2765 + $0x70] sm:$0xff]
    %v2781 = vld [vmem:[%s2765 + $0x78] sm:$0xff]
    %v2782 = vld [vmem:[%s2765 + $0x80] sm:$0xff]
    %v2783 = vld [vmem:[%s2765 + $0x88] sm:$0xff]
    %v2784 = vld [vmem:[%s2765 + $0x90] sm:$0xff]
    %v2785 = vld [vmem:[%s2765 + $0x98] sm:$0xff]
    %v2786 = vld [vmem:[%s2765 + $0xa0] sm:$0xff]
    %v2787 = vld [vmem:[%s2765 + $0xa8] sm:$0xff]
    %v2788 = vld [vmem:[%s2765 + $0xb0] sm:$0xff]
    %v2789 = vld [vmem:[%s2765 + $0xb8] sm:$0xff]
    %v2790 = vld [vmem:[%s2765 + $0xc0] sm:$0xff]
    %v2791 = vld [vmem:[%s2765 + $0xc8] sm:$0xff]
    %v2792 = vld [vmem:[%s2765 + $0xd0] sm:$0xff]
    %v2793 = vld [vmem:[%s2765 + $0xd8] sm:$0xff]
    %v2794 = vld [vmem:[%s2765 + $0xe0] sm:$0xff]
    %v2795 = vld [vmem:[%s2765 + $0xe8] sm:$0xff]
    %v2796 = vld [vmem:[%s2765 + $0xf0] sm:$0xff]
    %v2797 = vld [vmem:[%s2765 + $0xf8] sm:$0xff]
    %v2799 = vshrl.u32 %v2763, 16
    %v2801 = vrot.slane %v2799, 1
    %v2802 = vshll.u32 %v2763, 16
    %v2804 = vrot.slane %v2802, 2
    %v2805 = vor.u32 %v2801, %v2804
    %v2807 = vshrl.u32 %v2764, 16
    %v2809 = vrot.slane %v2807, 1
    %v2810 = vshll.u32 %v2764, 16
    %v2812 = vrot.slane %v2810, 2
    %v2813 = vor.u32 %v2809, %v2812
    %v2848 = vunpack.c.l.b16 %v2766
    %v2849 = vunpack.c.h.b16 %v2766
    %v2850 = vunpack.c.l.b16 %v2767
    %v2851 = vunpack.c.h.b16 %v2767
    %v2852 = vunpack.c.l.b16 %v2768
    %v2853 = vunpack.c.h.b16 %v2768
    %v2854 = vunpack.c.l.b16 %v2769
    %v2855 = vunpack.c.h.b16 %v2769
    %v2856 = vunpack.c.l.b16 %v2770
    %v2857 = vunpack.c.h.b16 %v2770
    %v2858 = vunpack.c.l.b16 %v2771
    %v2859 = vunpack.c.h.b16 %v2771
    %v2860 = vunpack.c.l.b16 %v2772
    %v2861 = vunpack.c.h.b16 %v2772
    %v2862 = vunpack.c.l.b16 %v2773
    %v2863 = vunpack.c.h.b16 %v2773
    %v2864 = vunpack.c.l.b16 %v2774
    %v2865 = vunpack.c.h.b16 %v2774
    %v2866 = vunpack.c.l.b16 %v2775
    %v2867 = vunpack.c.h.b16 %v2775
    %v2868 = vunpack.c.l.b16 %v2776
    %v2869 = vunpack.c.h.b16 %v2776
    %v2870 = vunpack.c.l.b16 %v2777
    %v2871 = vunpack.c.h.b16 %v2777
    %v2872 = vunpack.c.l.b16 %v2778
    %v2873 = vunpack.c.h.b16 %v2778
    %v2874 = vunpack.c.l.b16 %v2779
    %v2875 = vunpack.c.h.b16 %v2779
    %v2876 = vunpack.c.l.b16 %v2780
    %v2877 = vunpack.c.h.b16 %v2780
    %v2878 = vunpack.c.l.b16 %v2781
    %v2879 = vunpack.c.h.b16 %v2781
    %v2880 = vunpack.c.l.b16 %v2782
    %v2881 = vunpack.c.h.b16 %v2782
    %v2882 = vunpack.c.l.b16 %v2783
    %v2883 = vunpack.c.h.b16 %v2783
    %v2884 = vunpack.c.l.b16 %v2784
    %v2885 = vunpack.c.h.b16 %v2784
    %v2886 = vunpack.c.l.b16 %v2785
    %v2887 = vunpack.c.h.b16 %v2785
    %v2888 = vunpack.c.l.b16 %v2786
    %v2889 = vunpack.c.h.b16 %v2786
    %v2890 = vunpack.c.l.b16 %v2787
    %v2891 = vunpack.c.h.b16 %v2787
    %v2892 = vunpack.c.l.b16 %v2788
    %v2893 = vunpack.c.h.b16 %v2788
    %v2894 = vunpack.c.l.b16 %v2789
    %v2895 = vunpack.c.h.b16 %v2789
    %v2896 = vunpack.c.l.b16 %v2790
    %v2897 = vunpack.c.h.b16 %v2790
    %v2898 = vunpack.c.l.b16 %v2791
    %v2899 = vunpack.c.h.b16 %v2791
    %v2900 = vunpack.c.l.b16 %v2792
    %v2901 = vunpack.c.h.b16 %v2792
    %v2902 = vunpack.c.l.b16 %v2793
    %v2903 = vunpack.c.h.b16 %v2793
    %v2904 = vunpack.c.l.b16 %v2794
    %v2905 = vunpack.c.h.b16 %v2794
    %v2906 = vunpack.c.l.b16 %v2795
    %v2907 = vunpack.c.h.b16 %v2795
    %v2908 = vunpack.c.l.b16 %v2796
    %v2909 = vunpack.c.h.b16 %v2796
    %v2910 = vunpack.c.l.b16 %v2797
    %v2911 = vunpack.c.h.b16 %v2797
    %v2912 = vpack.c.b16 %v2850, %v2848
    %v2913 = vpack.c.b16 %v2851, %v2849
    %v2914 = vpack.c.b16 %v2854, %v2852
    %v2915 = vpack.c.b16 %v2855, %v2853
    %v2916 = vpack.c.b16 %v2858, %v2856
    %v2917 = vpack.c.b16 %v2859, %v2857
    %v2918 = vpack.c.b16 %v2862, %v2860
    %v2919 = vpack.c.b16 %v2863, %v2861
    %v2920 = vpack.c.b16 %v2866, %v2864
    %v2921 = vpack.c.b16 %v2867, %v2865
    %v2922 = vpack.c.b16 %v2870, %v2868
    %v2923 = vpack.c.b16 %v2871, %v2869
    %v2924 = vpack.c.b16 %v2874, %v2872
    %v2925 = vpack.c.b16 %v2875, %v2873
    %v2926 = vpack.c.b16 %v2878, %v2876
    %v2927 = vpack.c.b16 %v2879, %v2877
    %v2928 = vpack.c.b16 %v2882, %v2880
    %v2929 = vpack.c.b16 %v2883, %v2881
    %v2930 = vpack.c.b16 %v2886, %v2884
    %v2931 = vpack.c.b16 %v2887, %v2885
    %v2932 = vpack.c.b16 %v2890, %v2888
    %v2933 = vpack.c.b16 %v2891, %v2889
    %v2934 = vpack.c.b16 %v2894, %v2892
    %v2935 = vpack.c.b16 %v2895, %v2893
    %v2936 = vpack.c.b16 %v2898, %v2896
    %v2937 = vpack.c.b16 %v2899, %v2897
    %v2938 = vpack.c.b16 %v2902, %v2900
    %v2939 = vpack.c.b16 %v2903, %v2901
    %v2940 = vpack.c.b16 %v2906, %v2904
    %v2941 = vpack.c.b16 %v2907, %v2905
    %v2942 = vpack.c.b16 %v2910, %v2908
    %v2943 = vpack.c.b16 %v2911, %v2909
    %2976 = vmatprep.subr.bf16.mxu0 %v2913
    %2977 = vmatpush1.bf16.msra.mxu0 %v2912
    %2978 = vmatprep.subr.bf16.mxu0 %v2915
    %2979 = vmatpush1.bf16.msra.mxu0 %v2914
    %2980 = vmatprep.subr.bf16.mxu0 %v2917
    %2981 = vmatpush1.bf16.msra.mxu0 %v2916
    %2982 = vmatprep.subr.bf16.mxu0 %v2919
    %2983 = vmatpush1.bf16.msra.mxu0 %v2918
    %2984 = vmatprep.subr.bf16.mxu0 %v2921
    %2985 = vmatpush1.bf16.msra.mxu0 %v2920
    %2986 = vmatprep.subr.bf16.mxu0 %v2923
    %2987 = vmatpush1.bf16.msra.mxu0 %v2922
    %2988 = vmatprep.subr.bf16.mxu0 %v2925
    %2989 = vmatpush1.bf16.msra.mxu0 %v2924
    %2990 = vmatprep.subr.bf16.mxu0 %v2927
    %2991 = vmatpush1.bf16.msra.mxu0 %v2926
    %2992 = vmatprep.subr.bf16.mxu0 %v2929
    %2993 = vmatpush1.bf16.msra.mxu0 %v2928
    %2994 = vmatprep.subr.bf16.mxu0 %v2931
    %2995 = vmatpush1.bf16.msra.mxu0 %v2930
    %2996 = vmatprep.subr.bf16.mxu0 %v2933
    %2997 = vmatpush1.bf16.msra.mxu0 %v2932
    %2998 = vmatprep.subr.bf16.mxu0 %v2935
    %2999 = vmatpush1.bf16.msra.mxu0 %v2934
    %3000 = vmatprep.subr.bf16.mxu0 %v2937
    %3001 = vmatpush1.bf16.msra.mxu0 %v2936
    %3002 = vmatprep.subr.bf16.mxu0 %v2939
    %3003 = vmatpush1.bf16.msra.mxu0 %v2938
    %3004 = vmatprep.subr.bf16.mxu0 %v2941
    %3005 = vmatpush1.bf16.msra.mxu0 %v2940
    %3006 = vmatprep.subr.bf16.mxu0 %v2943
    %3007 = vmatpush1.bf16.msra.mxu0 %v2942
    %3008 = vmatprep.mubr.bf16.mxu0 %v2813
    %3009 = vmatmul.mubr.bf16.gmra.mrb[0].mxu0 %v2805
    %v3010 = vpop.f32.mrb[0].mxu0
    %v3011 = vadd.f32 0.0, %v3010
    %v3012 = vpop.f32.mrb[0].mxu0
    %v3013 = vadd.f32 0.0, %v3012
    %v3014 = vpop.f32.mrb[0].mxu0
    %v3015 = vadd.f32 0.0, %v3014
    %v3016 = vpop.f32.mrb[0].mxu0
    %v3017 = vadd.f32 0.0, %v3016
    %3018 = vdwg.mxu0
    %v3019 = vadd.f32 %v2755, %v3011
    %v3020 = vadd.f32 %v2756, %v3013
    %v3021 = vadd.f32 %v2757, %v3015
    %v3022 = vadd.f32 %v2758, %v3017
    %v3023 = vld [vmem:[#allocation4] sm:$0xf0]
    %v3024 = vld [vmem:[#allocation4 + $0x8] sm:$0xf0]
    %v3025 = vld [vmem:[#allocation4 + $0x10] sm:$0xff]
    %v3026 = vld [vmem:[#allocation4 + $0x18] sm:$0xff]
    %v3027 = vpack.c.bf16 %v3025, %v3023
    %v3028 = vpack.c.bf16 %v3026, %v3024
    %s3029 = scalar_lea.vmem [#allocation8], 1024
    %v3030 = vld [vmem:[%s3029] sm:$0xff]
    %v3031 = vld [vmem:[%s3029 + $0x8] sm:$0xff]
    %v3032 = vld [vmem:[%s3029 + $0x10] sm:$0xff]
    %v3033 = vld [vmem:[%s3029 + $0x18] sm:$0xff]
    %v3034 = vld [vmem:[%s3029 + $0x20] sm:$0xff]
    %v3035 = vld [vmem:[%s3029 + $0x28] sm:$0xff]
    %v3036 = vld [vmem:[%s3029 + $0x30] sm:$0xff]
    %v3037 = vld [vmem:[%s3029 + $0x38] sm:$0xff]
    %v3038 = vld [vmem:[%s3029 + $0x40] sm:$0xff]
    %v3039 = vld [vmem:[%s3029 + $0x48] sm:$0xff]
    %v3040 = vld [vmem:[%s3029 + $0x50] sm:$0xff]
    %v3041 = vld [vmem:[%s3029 + $0x58] sm:$0xff]
    %v3042 = vld [vmem:[%s3029 + $0x60] sm:$0xff]
    %v3043 = vld [vmem:[%s3029 + $0x68] sm:$0xff]
    %v3044 = vld [vmem:[%s3029 + $0x70] sm:$0xff]
    %v3045 = vld [vmem:[%s3029 + $0x78] sm:$0xff]
    %v3046 = vld [vmem:[%s3029 + $0x80] sm:$0xff]
    %v3047 = vld [vmem:[%s3029 + $0x88] sm:$0xff]
    %v3048 = vld [vmem:[%s3029 + $0x90] sm:$0xff]
    %v3049 = vld [vmem:[%s3029 + $0x98] sm:$0xff]
    %v3050 = vld [vmem:[%s3029 + $0xa0] sm:$0xff]
    %v3051 = vld [vmem:[%s3029 + $0xa8] sm:$0xff]
    %v3052 = vld [vmem:[%s3029 + $0xb0] sm:$0xff]
    %v3053 = vld [vmem:[%s3029 + $0xb8] sm:$0xff]
    %v3054 = vld [vmem:[%s3029 + $0xc0] sm:$0xff]
    %v3055 = vld [vmem:[%s3029 + $0xc8] sm:$0xff]
    %v3056 = vld [vmem:[%s3029 + $0xd0] sm:$0xff]
    %v3057 = vld [vmem:[%s3029 + $0xd8] sm:$0xff]
    %v3058 = vld [vmem:[%s3029 + $0xe0] sm:$0xff]
    %v3059 = vld [vmem:[%s3029 + $0xe8] sm:$0xff]
    %v3060 = vld [vmem:[%s3029 + $0xf0] sm:$0xff]
    %v3061 = vld [vmem:[%s3029 + $0xf8] sm:$0xff]
    %v3064 = vrot.slane %v3027, 2
    %v3065 = vrot.slane %v3028, 2
    %v3100 = vunpack.c.l.b16 %v3030
    %v3101 = vunpack.c.h.b16 %v3030
    %v3102 = vunpack.c.l.b16 %v3031
    %v3103 = vunpack.c.h.b16 %v3031
    %v3104 = vunpack.c.l.b16 %v3032
    %v3105 = vunpack.c.h.b16 %v3032
    %v3106 = vunpack.c.l.b16 %v3033
    %v3107 = vunpack.c.h.b16 %v3033
    %v3108 = vunpack.c.l.b16 %v3034
    %v3109 = vunpack.c.h.b16 %v3034
    %v3110 = vunpack.c.l.b16 %v3035
    %v3111 = vunpack.c.h.b16 %v3035
    %v3112 = vunpack.c.l.b16 %v3036
    %v3113 = vunpack.c.h.b16 %v3036
    %v3114 = vunpack.c.l.b16 %v3037
    %v3115 = vunpack.c.h.b16 %v3037
    %v3116 = vunpack.c.l.b16 %v3038
    %v3117 = vunpack.c.h.b16 %v3038
    %v3118 = vunpack.c.l.b16 %v3039
    %v3119 = vunpack.c.h.b16 %v3039
    %v3120 = vunpack.c.l.b16 %v3040
    %v3121 = vunpack.c.h.b16 %v3040
    %v3122 = vunpack.c.l.b16 %v3041
    %v3123 = vunpack.c.h.b16 %v3041
    %v3124 = vunpack.c.l.b16 %v3042
    %v3125 = vunpack.c.h.b16 %v3042
    %v3126 = vunpack.c.l.b16 %v3043
    %v3127 = vunpack.c.h.b16 %v3043
    %v3128 = vunpack.c.l.b16 %v3044
    %v3129 = vunpack.c.h.b16 %v3044
    %v3130 = vunpack.c.l.b16 %v3045
    %v3131 = vunpack.c.h.b16 %v3045
    %v3132 = vunpack.c.l.b16 %v3046
    %v3133 = vunpack.c.h.b16 %v3046
    %v3134 = vunpack.c.l.b16 %v3047
    %v3135 = vunpack.c.h.b16 %v3047
    %v3136 = vunpack.c.l.b16 %v3048
    %v3137 = vunpack.c.h.b16 %v3048
    %v3138 = vunpack.c.l.b16 %v3049
    %v3139 = vunpack.c.h.b16 %v3049
    %v3140 = vunpack.c.l.b16 %v3050
    %v3141 = vunpack.c.h.b16 %v3050
    %v3142 = vunpack.c.l.b16 %v3051
    %v3143 = vunpack.c.h.b16 %v3051
    %v3144 = vunpack.c.l.b16 %v3052
    %v3145 = vunpack.c.h.b16 %v3052
    %v3146 = vunpack.c.l.b16 %v3053
    %v3147 = vunpack.c.h.b16 %v3053
    %v3148 = vunpack.c.l.b16 %v3054
    %v3149 = vunpack.c.h.b16 %v3054
    %v3150 = vunpack.c.l.b16 %v3055
    %v3151 = vunpack.c.h.b16 %v3055
    %v3152 = vunpack.c.l.b16 %v3056
    %v3153 = vunpack.c.h.b16 %v3056
    %v3154 = vunpack.c.l.b16 %v3057
    %v3155 = vunpack.c.h.b16 %v3057
    %v3156 = vunpack.c.l.b16 %v3058
    %v3157 = vunpack.c.h.b16 %v3058
    %v3158 = vunpack.c.l.b16 %v3059
    %v3159 = vunpack.c.h.b16 %v3059
    %v3160 = vunpack.c.l.b16 %v3060
    %v3161 = vunpack.c.h.b16 %v3060
    %v3162 = vunpack.c.l.b16 %v3061
    %v3163 = vunpack.c.h.b16 %v3061
    %v3164 = vpack.c.b16 %v3102, %v3100
    %v3165 = vpack.c.b16 %v3103, %v3101
    %v3166 = vpack.c.b16 %v3106, %v3104
    %v3167 = vpack.c.b16 %v3107, %v3105
    %v3168 = vpack.c.b16 %v3110, %v3108
    %v3169 = vpack.c.b16 %v3111, %v3109
    %v3170 = vpack.c.b16 %v3114, %v3112
    %v3171 = vpack.c.b16 %v3115, %v3113
    %v3172 = vpack.c.b16 %v3118, %v3116
    %v3173 = vpack.c.b16 %v3119, %v3117
    %v3174 = vpack.c.b16 %v3122, %v3120
    %v3175 = vpack.c.b16 %v3123, %v3121
    %v3176 = vpack.c.b16 %v3126, %v3124
    %v3177 = vpack.c.b16 %v3127, %v3125
    %v3178 = vpack.c.b16 %v3130, %v3128
    %v3179 = vpack.c.b16 %v3131, %v3129
    %v3180 = vpack.c.b16 %v3134, %v3132
    %v3181 = vpack.c.b16 %v3135, %v3133
    %v3182 = vpack.c.b16 %v3138, %v3136
    %v3183 = vpack.c.b16 %v3139, %v3137
    %v3184 = vpack.c.b16 %v3142, %v3140
    %v3185 = vpack.c.b16 %v3143, %v3141
    %v3186 = vpack.c.b16 %v3146, %v3144
    %v3187 = vpack.c.b16 %v3147, %v3145
    %v3188 = vpack.c.b16 %v3150, %v3148
    %v3189 = vpack.c.b16 %v3151, %v3149
    %v3190 = vpack.c.b16 %v3154, %v3152
    %v3191 = vpack.c.b16 %v3155, %v3153
    %v3192 = vpack.c.b16 %v3158, %v3156
    %v3193 = vpack.c.b16 %v3159, %v3157
    %v3194 = vpack.c.b16 %v3162, %v3160
    %v3195 = vpack.c.b16 %v3163, %v3161
    %3228 = vmatprep.subr.bf16.mxu0 %v3165
    %3229 = vmatpush1.bf16.msra.mxu0 %v3164
    %3230 = vmatprep.subr.bf16.mxu0 %v3167
    %3231 = vmatpush1.bf16.msra.mxu0 %v3166
    %3232 = vmatprep.subr.bf16.mxu0 %v3169
    %3233 = vmatpush1.bf16.msra.mxu0 %v3168
    %3234 = vmatprep.subr.bf16.mxu0 %v3171
    %3235 = vmatpush1.bf16.msra.mxu0 %v3170
    %3236 = vmatprep.subr.bf16.mxu0 %v3173
    %3237 = vmatpush1.bf16.msra.mxu0 %v3172
    %3238 = vmatprep.subr.bf16.mxu0 %v3175
    %3239 = vmatpush1.bf16.msra.mxu0 %v3174
    %3240 = vmatprep.subr.bf16.mxu0 %v3177
    %3241 = vmatpush1.bf16.msra.mxu0 %v3176
    %3242 = vmatprep.subr.bf16.mxu0 %v3179
    %3243 = vmatpush1.bf16.msra.mxu0 %v3178
    %3244 = vmatprep.subr.bf16.mxu0 %v3181
    %3245 = vmatpush1.bf16.msra.mxu0 %v3180
    %3246 = vmatprep.subr.bf16.mxu0 %v3183
    %3247 = vmatpush1.bf16.msra.mxu0 %v3182
    %3248 = vmatprep.subr.bf16.mxu0 %v3185
    %3249 = vmatpush1.bf16.msra.mxu0 %v3184
    %3250 = vmatprep.subr.bf16.mxu0 %v3187
    %3251 = vmatpush1.bf16.msra.mxu0 %v3186
    %3252 = vmatprep.subr.bf16.mxu0 %v3189
    %3253 = vmatpush1.bf16.msra.mxu0 %v3188
    %3254 = vmatprep.subr.bf16.mxu0 %v3191
    %3255 = vmatpush1.bf16.msra.mxu0 %v3190
    %3256 = vmatprep.subr.bf16.mxu0 %v3193
    %3257 = vmatpush1.bf16.msra.mxu0 %v3192
    %3258 = vmatprep.subr.bf16.mxu0 %v3195
    %3259 = vmatpush1.bf16.msra.mxu0 %v3194
    %3260 = vmatprep.mubr.bf16.mxu0 %v3065
    %3261 = vmatmul.mubr.bf16.gmra.mrb[0].mxu0 %v3064
    %v3262 = vpop.f32.mrb[0].mxu0
    %v3263 = vadd.f32 0.0, %v3262
    %v3264 = vpop.f32.mrb[0].mxu0
    %v3265 = vadd.f32 0.0, %v3264
    %v3266 = vpop.f32.mrb[0].mxu0
    %v3267 = vadd.f32 0.0, %v3266
    %v3268 = vpop.f32.mrb[0].mxu0
    %v3269 = vadd.f32 0.0, %v3268
    %3270 = vdwg.mxu0
    %v3271 = vadd.f32 %v3019, %v3263
    %v3272 = vadd.f32 %v3020, %v3265
    %v3273 = vadd.f32 %v3021, %v3267
    %v3274 = vadd.f32 %v3022, %v3269
    %v3275 = vld [vmem:[%s7] sm:$0x3]
    %v3277 = vlaneseq
    %v3278 = vshrl.u32 %v3277, 7
    %v3279 = vsub.s32 0, %v3278
    %v3280 = vrot.slane %v3275, %v3279
    %v3281 = vlaneseq
    %v3282 = vshrl.u32 %v3281, 7
    %v3283 = vsub.s32 1, %v3282
    %v3284 = vrot.slane %v3275, %v3283
    %v3287 = vadd.f32 %v3271, %v3280
    %v3288 = vadd.f32 %v3272, %v3284
    %v3289 = vadd.f32 %v3273, %v3280
    %v3290 = vadd.f32 %v3274, %v3284
    %v3291 = vld [vmem:[%s8] sm:$0x3]
    %v3293 = vlaneseq
    %v3294 = vshrl.u32 %v3293, 7
    %v3295 = vsub.s32 0, %v3294
    %v3296 = vrot.slane %v3291, %v3295
    %v3297 = vlaneseq
    %v3298 = vshrl.u32 %v3297, 7
    %v3299 = vsub.s32 1, %v3298
    %v3300 = vrot.slane %v3291, %v3299
    %v3303 = vmul.f32 %v3287, %v3296
    %v3304 = vmul.f32 %v3288, %v3300
    %v3305 = vmul.f32 %v3289, %v3296
    %v3306 = vmul.f32 %v3290, %v3300
    %v3307 = vld [vmem:[%s9] sm:$0x3]
    %v3309 = vlaneseq
    %v3310 = vshrl.u32 %v3309, 7
    %v3311 = vsub.s32 0, %v3310
    %v3312 = vrot.slane %v3307, %v3311
    %v3313 = vlaneseq
    %v3314 = vshrl.u32 %v3313, 7
    %v3315 = vsub.s32 1, %v3314
    %v3316 = vrot.slane %v3307, %v3315
    %v3319 = vadd.f32 %v3303, %v3312
    %v3320 = vadd.f32 %v3304, %v3316
    %v3321 = vadd.f32 %v3305, %v3312
    %v3322 = vadd.f32 %v3306, %v3316
    %v3323 = vmax.f32 %v3319, 0.0
    %v3324 = vmax.f32 %v3320, 0.0
    %v3325 = vmax.f32 %v3321, 0.0
    %v3326 = vmax.f32 %v3322, 0.0
    %v3327 = vld [vmem:[%s14] sm:$0xf]
    %v3328 = vpack.c.bf16 %v3325, %v3323
    %v3329 = vpack.c.bf16 %v3326, %v3324
    %vm3330 = vcmask 97280
    %v3332 = vsel %vm3330, %v3327, 0
    %vm3334 = vcmask 1045504
    %v3336 = vsel %vm3334, %v3328, 0
    %v3339 = vsel %vm3334, %v3329, 0
    %3341 = vmatprep.subr.bf16.mxu0 %v3339
    %3342 = vmatpush1.bf16.msra.mxu0 %v3336
    %3343 = vmatprep.subr.bf16.mxu0 0
    %3344 = vmatpush1.bf16.msra.mxu0 0
    %3345 = vmatprep.subr.bf16.mxu0 0
    %3346 = vmatpush1.bf16.msra.mxu0 0
    %3347 = vmatprep.subr.bf16.mxu0 0
    %3348 = vmatpush1.bf16.msra.mxu0 0
    %3349 = vmatprep.subr.bf16.mxu0 0
    %3350 = vmatpush1.bf16.msra.mxu0 0
    %3351 = vmatprep.subr.bf16.mxu0 0
    %3352 = vmatpush1.bf16.msra.mxu0 0
    %3353 = vmatprep.subr.bf16.mxu0 0
    %3354 = vmatpush1.bf16.msra.mxu0 0
    %3355 = vmatprep.subr.bf16.mxu0 0
    %3356 = vmatpush1.bf16.msra.mxu0 0
    %3357 = vmatprep.subr.bf16.mxu0 0
    %3358 = vmatpush1.bf16.msra.mxu0 0
    %3359 = vmatprep.subr.bf16.mxu0 0
    %3360 = vmatpush1.bf16.msra.mxu0 0
    %3361 = vmatprep.subr.bf16.mxu0 0
    %3362 = vmatpush1.bf16.msra.mxu0 0
    %3363 = vmatprep.subr.bf16.mxu0 0
    %3364 = vmatpush1.bf16.msra.mxu0 0
    %3365 = vmatprep.subr.bf16.mxu0 0
    %3366 = vmatpush1.bf16.msra.mxu0 0
    %3367 = vmatprep.subr.bf16.mxu0 0
    %3368 = vmatpush1.bf16.msra.mxu0 0
    %3369 = vmatprep.subr.bf16.mxu0 0
    %3370 = vmatpush1.bf16.msra.mxu0 0
    %3371 = vmatprep.subr.bf16.mxu0 0
    %3372 = vmatpush1.bf16.msra.mxu0 0
    %3373 = vmatprep.mubr.bf16.mxu0 0
    %3374 = vmatmul.mubr.bf16.gmra.mrb[0].mxu0 %v3332
    %v3375 = vpop.f32.mrb[0].mxu0
    %v3376 = vadd.f32 0.0, %v3375
    %v3377 = vpop.f32.mrb[0].mxu0
    %v3378 = vadd.f32 0.0, %v3377
    %v3379 = vpop.f32.mrb[0].mxu0
    %v3380 = vpop.f32.mrb[0].mxu0
    %3381 = vdwg.mxu0
    %v3382 = vpack.c.bf16 %v3376, %v3376
    %v3383 = vpack.c.bf16 %v3378, %v3378
    %v3384 = vld [vmem:[#allocation10] sm:$0xf]
    %v3385 = vld [vmem:[#allocation10 + $0x4] sm:$0xf]
    %v3386 = vld [vmem:[#allocation10 + $0x8] sm:$0xf]
    %v3387 = vld [vmem:[#allocation10 + $0xc] sm:$0xf]
    %v3388 = vld [vmem:[#allocation10 + $0x10] sm:$0xf]
    %v3389 = vld [vmem:[#allocation10 + $0x14] sm:$0xf]
    %v3390 = vld [vmem:[#allocation10 + $0x18] sm:$0xf]
    %v3391 = vld [vmem:[#allocation10 + $0x1c] sm:$0xf]
    %v3392 = vld [vmem:[#allocation10 + $0x20] sm:$0xf]
    %v3393 = vld [vmem:[#allocation10 + $0x24] sm:$0xf]
    %v3394 = vld [vmem:[#allocation10 + $0x28] sm:$0xf]
    %v3395 = vld [vmem:[#allocation10 + $0x2c] sm:$0xf]
    %v3396 = vld [vmem:[#allocation10 + $0x30] sm:$0xf]
    %v3397 = vld [vmem:[#allocation10 + $0x34] sm:$0xf]
    %v3398 = vld [vmem:[#allocation10 + $0x38] sm:$0xf]
    %v3399 = vld [vmem:[#allocation10 + $0x3c] sm:$0xf]
    %v3400 = vld [vmem:[#allocation10 + $0x40] sm:$0xf]
    %v3401 = vld [vmem:[#allocation10 + $0x44] sm:$0xf]
    %v3402 = vld [vmem:[#allocation10 + $0x48] sm:$0xf]
    %v3403 = vld [vmem:[#allocation10 + $0x4c] sm:$0xf]
    %v3404 = vld [vmem:[#allocation10 + $0x50] sm:$0xf]
    %v3405 = vld [vmem:[#allocation10 + $0x54] sm:$0xf]
    %v3406 = vld [vmem:[#allocation10 + $0x58] sm:$0xf]
    %v3407 = vld [vmem:[#allocation10 + $0x5c] sm:$0xf]
    %v3408 = vld [vmem:[#allocation10 + $0x60] sm:$0xf]
    %v3409 = vld [vmem:[#allocation10 + $0x64] sm:$0xf]
    %v3410 = vld [vmem:[#allocation10 + $0x68] sm:$0xf]
    %v3411 = vld [vmem:[#allocation10 + $0x6c] sm:$0xf]
    %v3412 = vld [vmem:[#allocation10 + $0x70] sm:$0xf]
    %v3413 = vld [vmem:[#allocation10 + $0x74] sm:$0xf]
    %v3414 = vld [vmem:[#allocation10 + $0x78] sm:$0xf]
    %v3415 = vld [vmem:[#allocation10 + $0x7c] sm:$0xf]
    %s3416 = scalar_lea.vmem [#allocation10], 128
    %v3417 = vld [vmem:[%s3416] sm:$0xf]
    %v3418 = vld [vmem:[%s3416 + $0x4] sm:$0xf]
    %v3419 = vld [vmem:[%s3416 + $0x8] sm:$0xf]
    %v3420 = vld [vmem:[%s3416 + $0xc] sm:$0xf]
    %v3421 = vld [vmem:[%s3416 + $0x10] sm:$0xf]
    %v3422 = vld [vmem:[%s3416 + $0x14] sm:$0xf]
    %v3423 = vld [vmem:[%s3416 + $0x18] sm:$0xf]
    %v3424 = vld [vmem:[%s3416 + $0x1c] sm:$0xf]
    %v3425 = vld [vmem:[%s3416 + $0x20] sm:$0xf]
    %v3426 = vld [vmem:[%s3416 + $0x24] sm:$0xf]
    %v3427 = vld [vmem:[%s3416 + $0x28] sm:$0xf]
    %v3428 = vld [vmem:[%s3416 + $0x2c] sm:$0xf]
    %v3429 = vld [vmem:[%s3416 + $0x30] sm:$0xf]
    %v3430 = vld [vmem:[%s3416 + $0x34] sm:$0xf]
    %v3431 = vld [vmem:[%s3416 + $0x38] sm:$0xf]
    %v3432 = vld [vmem:[%s3416 + $0x3c] sm:$0xf]
    %v3433 = vld [vmem:[%s3416 + $0x40] sm:$0xf]
    %v3434 = vld [vmem:[%s3416 + $0x44] sm:$0xf]
    %v3435 = vld [vmem:[%s3416 + $0x48] sm:$0xf]
    %v3436 = vld [vmem:[%s3416 + $0x4c] sm:$0xf]
    %v3437 = vld [vmem:[%s3416 + $0x50] sm:$0xf]
    %v3438 = vld [vmem:[%s3416 + $0x54] sm:$0xf]
    %v3439 = vld [vmem:[%s3416 + $0x58] sm:$0xf]
    %v3440 = vld [vmem:[%s3416 + $0x5c] sm:$0xf]
    %v3441 = vld [vmem:[%s3416 + $0x60] sm:$0xf]
    %v3442 = vld [vmem:[%s3416 + $0x64] sm:$0xf]
    %v3443 = vld [vmem:[%s3416 + $0x68] sm:$0xf]
    %v3444 = vld [vmem:[%s3416 + $0x6c] sm:$0xf]
    %v3445 = vld [vmem:[%s3416 + $0x70] sm:$0xf]
    %v3446 = vld [vmem:[%s3416 + $0x74] sm:$0xf]
    %v3447 = vld [vmem:[%s3416 + $0x78] sm:$0xf]
    %v3448 = vld [vmem:[%s3416 + $0x7c] sm:$0xf]
    %v3451 = vrot.slane %v3382, 1
    %v3452 = vrot.slane %v3383, 1
    %v3487 = vunpack.c.l.b16 %v3417
    %v3488 = vunpack.c.l.b16 %v3418
    %v3489 = vunpack.c.l.b16 %v3419
    %v3490 = vunpack.c.l.b16 %v3420
    %v3491 = vunpack.c.l.b16 %v3421
    %v3492 = vunpack.c.l.b16 %v3422
    %v3493 = vunpack.c.l.b16 %v3423
    %v3494 = vunpack.c.l.b16 %v3424
    %v3495 = vunpack.c.l.b16 %v3425
    %v3496 = vunpack.c.l.b16 %v3426
    %v3497 = vunpack.c.l.b16 %v3427
    %v3498 = vunpack.c.l.b16 %v3428
    %v3499 = vunpack.c.l.b16 %v3429
    %v3500 = vunpack.c.l.b16 %v3430
    %v3501 = vunpack.c.l.b16 %v3431
    %v3502 = vunpack.c.l.b16 %v3432
    %v3503 = vunpack.c.l.b16 %v3433
    %v3504 = vunpack.c.l.b16 %v3434
    %v3505 = vunpack.c.l.b16 %v3435
    %v3506 = vunpack.c.l.b16 %v3436
    %v3507 = vunpack.c.l.b16 %v3437
    %v3508 = vunpack.c.l.b16 %v3438
    %v3509 = vunpack.c.l.b16 %v3439
    %v3510 = vunpack.c.l.b16 %v3440
    %v3511 = vunpack.c.l.b16 %v3441
    %v3512 = vunpack.c.l.b16 %v3442
    %v3513 = vunpack.c.l.b16 %v3443
    %v3514 = vunpack.c.l.b16 %v3444
    %v3515 = vunpack.c.l.b16 %v3445
    %v3516 = vunpack.c.l.b16 %v3446
    %v3517 = vunpack.c.l.b16 %v3447
    %v3518 = vunpack.c.l.b16 %v3448
    %v3519 = vpack.c.b16 %v3488, %v3487
    %v3520 = vpack.c.b16 %v3490, %v3489
    %v3521 = vpack.c.b16 %v3492, %v3491
    %v3522 = vpack.c.b16 %v3494, %v3493
    %v3523 = vpack.c.b16 %v3496, %v3495
    %v3524 = vpack.c.b16 %v3498, %v3497
    %v3525 = vpack.c.b16 %v3500, %v3499
    %v3526 = vpack.c.b16 %v3502, %v3501
    %v3527 = vpack.c.b16 %v3504, %v3503
    %v3528 = vpack.c.b16 %v3506, %v3505
    %v3529 = vpack.c.b16 %v3508, %v3507
    %v3530 = vpack.c.b16 %v3510, %v3509
    %v3531 = vpack.c.b16 %v3512, %v3511
    %v3532 = vpack.c.b16 %v3514, %v3513
    %v3533 = vpack.c.b16 %v3516, %v3515
    %v3534 = vpack.c.b16 %v3518, %v3517
    %3551 = vmatprep.subr.bf16.mxu0 0
    %3552 = vmatpush1.bf16.msra.mxu0 %v3519
    %3553 = vmatprep.subr.bf16.mxu0 0
    %3554 = vmatpush1.bf16.msra.mxu0 %v3520
    %3555 = vmatprep.subr.bf16.mxu0 0
    %3556 = vmatpush1.bf16.msra.mxu0 %v3521
    %3557 = vmatprep.subr.bf16.mxu0 0
    %3558 = vmatpush1.bf16.msra.mxu0 %v3522
    %3559 = vmatprep.subr.bf16.mxu0 0
    %3560 = vmatpush1.bf16.msra.mxu0 %v3523
    %3561 = vmatprep.subr.bf16.mxu0 0
    %3562 = vmatpush1.bf16.msra.mxu0 %v3524
    %3563 = vmatprep.subr.bf16.mxu0 0
    %3564 = vmatpush1.bf16.msra.mxu0 %v3525
    %3565 = vmatprep.subr.bf16.mxu0 0
    %3566 = vmatpush1.bf16.msra.mxu0 %v3526
    %3567 = vmatprep.subr.bf16.mxu0 0
    %3568 = vmatpush1.bf16.msra.mxu0 %v3527
    %3569 = vmatprep.subr.bf16.mxu0 0
    %3570 = vmatpush1.bf16.msra.mxu0 %v3528
    %3571 = vmatprep.subr.bf16.mxu0 0
    %3572 = vmatpush1.bf16.msra.mxu0 %v3529
    %3573 = vmatprep.subr.bf16.mxu0 0
    %3574 = vmatpush1.bf16.msra.mxu0 %v3530
    %3575 = vmatprep.subr.bf16.mxu0 0
    %3576 = vmatpush1.bf16.msra.mxu0 %v3531
    %3577 = vmatprep.subr.bf16.mxu0 0
    %3578 = vmatpush1.bf16.msra.mxu0 %v3532
    %3579 = vmatprep.subr.bf16.mxu0 0
    %3580 = vmatpush1.bf16.msra.mxu0 %v3533
    %3581 = vmatprep.subr.bf16.mxu0 0
    %3582 = vmatpush1.bf16.msra.mxu0 %v3534
    %3583 = vmatprep.mubr.bf16.mxu0 %v3452
    %3584 = vmatmul.mubr.bf16.gmra.mrb[0].mxu0 %v3451
    %v3585 = vpop.f32.mrb[0].mxu0
    %v3586 = vadd.f32 0.0, %v3585
    %v3587 = vpop.f32.mrb[0].mxu0
    %v3588 = vpop.f32.mrb[0].mxu0
    %v3589 = vpop.f32.mrb[0].mxu0
    %3590 = vdwg.mxu0
    %v3623 = vunpack.c.l.b16 %v3384
    %v3624 = vunpack.c.l.b16 %v3385
    %v3625 = vunpack.c.l.b16 %v3386
    %v3626 = vunpack.c.l.b16 %v3387
    %v3627 = vunpack.c.l.b16 %v3388
    %v3628 = vunpack.c.l.b16 %v3389
    %v3629 = vunpack.c.l.b16 %v3390
    %v3630 = vunpack.c.l.b16 %v3391
    %v3631 = vunpack.c.l.b16 %v3392
    %v3632 = vunpack.c.l.b16 %v3393
    %v3633 = vunpack.c.l.b16 %v3394
    %v3634 = vunpack.c.l.b16 %v3395
    %v3635 = vunpack.c.l.b16 %v3396
    %v3636 = vunpack.c.l.b16 %v3397
    %v3637 = vunpack.c.l.b16 %v3398
    %v3638 = vunpack.c.l.b16 %v3399
    %v3639 = vunpack.c.l.b16 %v3400
    %v3640 = vunpack.c.l.b16 %v3401
    %v3641 = vunpack.c.l.b16 %v3402
    %v3642 = vunpack.c.l.b16 %v3403
    %v3643 = vunpack.c.l.b16 %v3404
    %v3644 = vunpack.c.l.b16 %v3405
    %v3645 = vunpack.c.l.b16 %v3406
    %v3646 = vunpack.c.l.b16 %v3407
    %v3647 = vunpack.c.l.b16 %v3408
    %v3648 = vunpack.c.l.b16 %v3409
    %v3649 = vunpack.c.l.b16 %v3410
    %v3650 = vunpack.c.l.b16 %v3411
    %v3651 = vunpack.c.l.b16 %v3412
    %v3652 = vunpack.c.l.b16 %v3413
    %v3653 = vunpack.c.l.b16 %v3414
    %v3654 = vunpack.c.l.b16 %v3415
    %v3655 = vpack.c.b16 %v3624, %v3623
    %v3656 = vpack.c.b16 %v3626, %v3625
    %v3657 = vpack.c.b16 %v3628, %v3627
    %v3658 = vpack.c.b16 %v3630, %v3629
    %v3659 = vpack.c.b16 %v3632, %v3631
    %v3660 = vpack.c.b16 %v3634, %v3633
    %v3661 = vpack.c.b16 %v3636, %v3635
    %v3662 = vpack.c.b16 %v3638, %v3637
    %v3663 = vpack.c.b16 %v3640, %v3639
    %v3664 = vpack.c.b16 %v3642, %v3641
    %v3665 = vpack.c.b16 %v3644, %v3643
    %v3666 = vpack.c.b16 %v3646, %v3645
    %v3667 = vpack.c.b16 %v3648, %v3647
    %v3668 = vpack.c.b16 %v3650, %v3649
    %v3669 = vpack.c.b16 %v3652, %v3651
    %v3670 = vpack.c.b16 %v3654, %v3653
    %3687 = vmatprep.subr.bf16.mxu0 0
    %3688 = vmatpush1.bf16.msra.mxu0 %v3655
    %3689 = vmatprep.subr.bf16.mxu0 0
    %3690 = vmatpush1.bf16.msra.mxu0 %v3656
    %3691 = vmatprep.subr.bf16.mxu0 0
    %3692 = vmatpush1.bf16.msra.mxu0 %v3657
    %3693 = vmatprep.subr.bf16.mxu0 0
    %3694 = vmatpush1.bf16.msra.mxu0 %v3658
    %3695 = vmatprep.subr.bf16.mxu0 0
    %3696 = vmatpush1.bf16.msra.mxu0 %v3659
    %3697 = vmatprep.subr.bf16.mxu0 0
    %3698 = vmatpush1.bf16.msra.mxu0 %v3660
    %3699 = vmatprep.subr.bf16.mxu0 0
    %3700 = vmatpush1.bf16.msra.mxu0 %v3661
    %3701 = vmatprep.subr.bf16.mxu0 0
    %3702 = vmatpush1.bf16.msra.mxu0 %v3662
    %3703 = vmatprep.subr.bf16.mxu0 0
    %3704 = vmatpush1.bf16.msra.mxu0 %v3663
    %3705 = vmatprep.subr.bf16.mxu0 0
    %3706 = vmatpush1.bf16.msra.mxu0 %v3664
    %3707 = vmatprep.subr.bf16.mxu0 0
    %3708 = vmatpush1.bf16.msra.mxu0 %v3665
    %3709 = vmatprep.subr.bf16.mxu0 0
    %3710 = vmatpush1.bf16.msra.mxu0 %v3666
    %3711 = vmatprep.subr.bf16.mxu0 0
    %3712 = vmatpush1.bf16.msra.mxu0 %v3667
    %3713 = vmatprep.subr.bf16.mxu0 0
    %3714 = vmatpush1.bf16.msra.mxu0 %v3668
    %3715 = vmatprep.subr.bf16.mxu0 0
    %3716 = vmatpush1.bf16.msra.mxu0 %v3669
    %3717 = vmatprep.subr.bf16.mxu0 0
    %3718 = vmatpush1.bf16.msra.mxu0 %v3670
    %3719 = vmatprep.mubr.bf16.mxu0 %v3383
    %3720 = vmatmul.mubr.bf16.gmra.mrb[0].mxu0 %v3382
    %v3721 = vpop.f32.mrb[0].mxu0
    %v3722 = vadd.f32 %v3586, %v3721
    %v3723 = vpop.f32.mrb[0].mxu0
    %v3724 = vpop.f32.mrb[0].mxu0
    %v3725 = vpop.f32.mrb[0].mxu0
    %3726 = vdwg.mxu0
    %s3727 = scalar_lea.vmem [#allocation10], 256
    %v3728 = vld [vmem:[%s3727] sm:$0xf]
    %v3729 = vld [vmem:[%s3727 + $0x4] sm:$0xf]
    %v3730 = vld [vmem:[%s3727 + $0x8] sm:$0xf]
    %v3731 = vld [vmem:[%s3727 + $0xc] sm:$0xf]
    %v3732 = vld [vmem:[%s3727 + $0x10] sm:$0xf]
    %v3733 = vld [vmem:[%s3727 + $0x14] sm:$0xf]
    %v3734 = vld [vmem:[%s3727 + $0x18] sm:$0xf]
    %v3735 = vld [vmem:[%s3727 + $0x1c] sm:$0xf]
    %v3736 = vld [vmem:[%s3727 + $0x20] sm:$0xf]
    %v3737 = vld [vmem:[%s3727 + $0x24] sm:$0xf]
    %v3738 = vld [vmem:[%s3727 + $0x28] sm:$0xf]
    %v3739 = vld [vmem:[%s3727 + $0x2c] sm:$0xf]
    %v3740 = vld [vmem:[%s3727 + $0x30] sm:$0xf]
    %v3741 = vld [vmem:[%s3727 + $0x34] sm:$0xf]
    %v3742 = vld [vmem:[%s3727 + $0x38] sm:$0xf]
    %v3743 = vld [vmem:[%s3727 + $0x3c] sm:$0xf]
    %v3744 = vld [vmem:[%s3727 + $0x40] sm:$0xf]
    %v3745 = vld [vmem:[%s3727 + $0x44] sm:$0xf]
    %v3746 = vld [vmem:[%s3727 + $0x48] sm:$0xf]
    %v3747 = vld [vmem:[%s3727 + $0x4c] sm:$0xf]
    %v3748 = vld [vmem:[%s3727 + $0x50] sm:$0xf]
    %v3749 = vld [vmem:[%s3727 + $0x54] sm:$0xf]
    %v3750 = vld [vmem:[%s3727 + $0x58] sm:$0xf]
    %v3751 = vld [vmem:[%s3727 + $0x5c] sm:$0xf]
    %v3752 = vld [vmem:[%s3727 + $0x60] sm:$0xf]
    %v3753 = vld [vmem:[%s3727 + $0x64] sm:$0xf]
    %v3754 = vld [vmem:[%s3727 + $0x68] sm:$0xf]
    %v3755 = vld [vmem:[%s3727 + $0x6c] sm:$0xf]
    %v3756 = vld [vmem:[%s3727 + $0x70] sm:$0xf]
    %v3757 = vld [vmem:[%s3727 + $0x74] sm:$0xf]
    %v3758 = vld [vmem:[%s3727 + $0x78] sm:$0xf]
    %v3759 = vld [vmem:[%s3727 + $0x7c] sm:$0xf]
    %v3760 = vrot.slane %v3382, 2
    %v3761 = vrot.slane %v3383, 2
    %v3796 = vunpack.c.l.b16 %v3728
    %v3797 = vunpack.c.l.b16 %v3729
    %v3798 = vunpack.c.l.b16 %v3730
    %v3799 = vunpack.c.l.b16 %v3731
    %v3800 = vunpack.c.l.b16 %v3732
    %v3801 = vunpack.c.l.b16 %v3733
    %v3802 = vunpack.c.l.b16 %v3734
    %v3803 = vunpack.c.l.b16 %v3735
    %v3804 = vunpack.c.l.b16 %v3736
    %v3805 = vunpack.c.l.b16 %v3737
    %v3806 = vunpack.c.l.b16 %v3738
    %v3807 = vunpack.c.l.b16 %v3739
    %v3808 = vunpack.c.l.b16 %v3740
    %v3809 = vunpack.c.l.b16 %v3741
    %v3810 = vunpack.c.l.b16 %v3742
    %v3811 = vunpack.c.l.b16 %v3743
    %v3812 = vunpack.c.l.b16 %v3744
    %v3813 = vunpack.c.l.b16 %v3745
    %v3814 = vunpack.c.l.b16 %v3746
    %v3815 = vunpack.c.l.b16 %v3747
    %v3816 = vunpack.c.l.b16 %v3748
    %v3817 = vunpack.c.l.b16 %v3749
    %v3818 = vunpack.c.l.b16 %v3750
    %v3819 = vunpack.c.l.b16 %v3751
    %v3820 = vunpack.c.l.b16 %v3752
    %v3821 = vunpack.c.l.b16 %v3753
    %v3822 = vunpack.c.l.b16 %v3754
    %v3823 = vunpack.c.l.b16 %v3755
    %v3824 = vunpack.c.l.b16 %v3756
    %v3825 = vunpack.c.l.b16 %v3757
    %v3826 = vunpack.c.l.b16 %v3758
    %v3827 = vunpack.c.l.b16 %v3759
    %v3828 = vpack.c.b16 %v3797, %v3796
    %v3829 = vpack.c.b16 %v3799, %v3798
    %v3830 = vpack.c.b16 %v3801, %v3800
    %v3831 = vpack.c.b16 %v3803, %v3802
    %v3832 = vpack.c.b16 %v3805, %v3804
    %v3833 = vpack.c.b16 %v3807, %v3806
    %v3834 = vpack.c.b16 %v3809, %v3808
    %v3835 = vpack.c.b16 %v3811, %v3810
    %v3836 = vpack.c.b16 %v3813, %v3812
    %v3837 = vpack.c.b16 %v3815, %v3814
    %v3838 = vpack.c.b16 %v3817, %v3816
    %v3839 = vpack.c.b16 %v3819, %v3818
    %v3840 = vpack.c.b16 %v3821, %v3820
    %v3841 = vpack.c.b16 %v3823, %v3822
    %v3842 = vpack.c.b16 %v3825, %v3824
    %v3843 = vpack.c.b16 %v3827, %v3826
    %3860 = vmatprep.subr.bf16.mxu0 0
    %3861 = vmatpush1.bf16.msra.mxu0 %v3828
    %3862 = vmatprep.subr.bf16.mxu0 0
    %3863 = vmatpush1.bf16.msra.mxu0 %v3829
    %3864 = vmatprep.subr.bf16.mxu0 0
    %3865 = vmatpush1.bf16.msra.mxu0 %v3830
    %3866 = vmatprep.subr.bf16.mxu0 0
    %3867 = vmatpush1.bf16.msra.mxu0 %v3831
    %3868 = vmatprep.subr.bf16.mxu0 0
    %3869 = vmatpush1.bf16.msra.mxu0 %v3832
    %3870 = vmatprep.subr.bf16.mxu0 0
    %3871 = vmatpush1.bf16.msra.mxu0 %v3833
    %3872 = vmatprep.subr.bf16.mxu0 0
    %3873 = vmatpush1.bf16.msra.mxu0 %v3834
    %3874 = vmatprep.subr.bf16.mxu0 0
    %3875 = vmatpush1.bf16.msra.mxu0 %v3835
    %3876 = vmatprep.subr.bf16.mxu0 0
    %3877 = vmatpush1.bf16.msra.mxu0 %v3836
    %3878 = vmatprep.subr.bf16.mxu0 0
    %3879 = vmatpush1.bf16.msra.mxu0 %v3837
    %3880 = vmatprep.subr.bf16.mxu0 0
    %3881 = vmatpush1.bf16.msra.mxu0 %v3838
    %3882 = vmatprep.subr.bf16.mxu0 0
    %3883 = vmatpush1.bf16.msra.mxu0 %v3839
    %3884 = vmatprep.subr.bf16.mxu0 0
    %3885 = vmatpush1.bf16.msra.mxu0 %v3840
    %3886 = vmatprep.subr.bf16.mxu0 0
    %3887 = vmatpush1.bf16.msra.mxu0 %v3841
    %3888 = vmatprep.subr.bf16.mxu0 0
    %3889 = vmatpush1.bf16.msra.mxu0 %v3842
    %3890 = vmatprep.subr.bf16.mxu0 0
    %3891 = vmatpush1.bf16.msra.mxu0 %v3843
    %3892 = vmatprep.mubr.bf16.mxu0 %v3761
    %3893 = vmatmul.mubr.bf16.gmra.mrb[0].mxu0 %v3760
    %v3894 = vpop.f32.mrb[0].mxu0
    %v3895 = vadd.f32 0.0, %v3894
    %v3896 = vpop.f32.mrb[0].mxu0
    %v3897 = vpop.f32.mrb[0].mxu0
    %v3898 = vpop.f32.mrb[0].mxu0
    %3899 = vdwg.mxu0
    %v3900 = vadd.f32 %v3722, %v3895
    %s3901 = scalar_lea.vmem [#allocation10], 384
    %v3902 = vld [vmem:[%s3901] sm:$0xf]
    %v3903 = vld [vmem:[%s3901 + $0x4] sm:$0xf]
    %v3904 = vld [vmem:[%s3901 + $0x8] sm:$0xf]
    %v3905 = vld [vmem:[%s3901 + $0xc] sm:$0xf]
    %v3906 = vld [vmem:[%s3901 + $0x10] sm:$0xf]
    %v3907 = vld [vmem:[%s3901 + $0x14] sm:$0xf]
    %v3908 = vld [vmem:[%s3901 + $0x18] sm:$0xf]
    %v3909 = vld [vmem:[%s3901 + $0x1c] sm:$0xf]
    %v3910 = vld [vmem:[%s3901 + $0x20] sm:$0xf]
    %v3911 = vld [vmem:[%s3901 + $0x24] sm:$0xf]
    %v3912 = vld [vmem:[%s3901 + $0x28] sm:$0xf]
    %v3913 = vld [vmem:[%s3901 + $0x2c] sm:$0xf]
    %v3914 = vld [vmem:[%s3901 + $0x30] sm:$0xf]
    %v3915 = vld [vmem:[%s3901 + $0x34] sm:$0xf]
    %v3916 = vld [vmem:[%s3901 + $0x38] sm:$0xf]
    %v3917 = vld [vmem:[%s3901 + $0x3c] sm:$0xf]
    %v3918 = vld [vmem:[%s3901 + $0x40] sm:$0xf]
    %v3919 = vld [vmem:[%s3901 + $0x44] sm:$0xf]
    %v3920 = vld [vmem:[%s3901 + $0x48] sm:$0xf]
    %v3921 = vld [vmem:[%s3901 + $0x4c] sm:$0xf]
    %v3922 = vld [vmem:[%s3901 + $0x50] sm:$0xf]
    %v3923 = vld [vmem:[%s3901 + $0x54] sm:$0xf]
    %v3924 = vld [vmem:[%s3901 + $0x58] sm:$0xf]
    %v3925 = vld [vmem:[%s3901 + $0x5c] sm:$0xf]
    %v3926 = vld [vmem:[%s3901 + $0x60] sm:$0xf]
    %v3927 = vld [vmem:[%s3901 + $0x64] sm:$0xf]
    %v3928 = vld [vmem:[%s3901 + $0x68] sm:$0xf]
    %v3929 = vld [vmem:[%s3901 + $0x6c] sm:$0xf]
    %v3930 = vld [vmem:[%s3901 + $0x70] sm:$0xf]
    %v3931 = vld [vmem:[%s3901 + $0x74] sm:$0xf]
    %v3932 = vld [vmem:[%s3901 + $0x78] sm:$0xf]
    %v3933 = vld [vmem:[%s3901 + $0x7c] sm:$0xf]
    %v3934 = vrot.slane %v3382, 3
    %v3935 = vrot.slane %v3383, 3
    %v3970 = vunpack.c.l.b16 %v3902
    %v3971 = vunpack.c.l.b16 %v3903
    %v3972 = vunpack.c.l.b16 %v3904
    %v3973 = vunpack.c.l.b16 %v3905
    %v3974 = vunpack.c.l.b16 %v3906
    %v3975 = vunpack.c.l.b16 %v3907
    %v3976 = vunpack.c.l.b16 %v3908
    %v3977 = vunpack.c.l.b16 %v3909
    %v3978 = vunpack.c.l.b16 %v3910
    %v3979 = vunpack.c.l.b16 %v3911
    %v3980 = vunpack.c.l.b16 %v3912
    %v3981 = vunpack.c.l.b16 %v3913
    %v3982 = vunpack.c.l.b16 %v3914
    %v3983 = vunpack.c.l.b16 %v3915
    %v3984 = vunpack.c.l.b16 %v3916
    %v3985 = vunpack.c.l.b16 %v3917
    %v3986 = vunpack.c.l.b16 %v3918
    %v3987 = vunpack.c.l.b16 %v3919
    %v3988 = vunpack.c.l.b16 %v3920
    %v3989 = vunpack.c.l.b16 %v3921
    %v3990 = vunpack.c.l.b16 %v3922
    %v3991 = vunpack.c.l.b16 %v3923
    %v3992 = vunpack.c.l.b16 %v3924
    %v3993 = vunpack.c.l.b16 %v3925
    %v3994 = vunpack.c.l.b16 %v3926
    %v3995 = vunpack.c.l.b16 %v3927
    %v3996 = vunpack.c.l.b16 %v3928
    %v3997 = vunpack.c.l.b16 %v3929
    %v3998 = vunpack.c.l.b16 %v3930
    %v3999 = vunpack.c.l.b16 %v3931
    %v4000 = vunpack.c.l.b16 %v3932
    %v4001 = vunpack.c.l.b16 %v3933
    %v4002 = vpack.c.b16 %v3971, %v3970
    %v4003 = vpack.c.b16 %v3973, %v3972
    %v4004 = vpack.c.b16 %v3975, %v3974
    %v4005 = vpack.c.b16 %v3977, %v3976
    %v4006 = vpack.c.b16 %v3979, %v3978
    %v4007 = vpack.c.b16 %v3981, %v3980
    %v4008 = vpack.c.b16 %v3983, %v3982
    %v4009 = vpack.c.b16 %v3985, %v3984
    %v4010 = vpack.c.b16 %v3987, %v3986
    %v4011 = vpack.c.b16 %v3989, %v3988
    %v4012 = vpack.c.b16 %v3991, %v3990
    %v4013 = vpack.c.b16 %v3993, %v3992
    %v4014 = vpack.c.b16 %v3995, %v3994
    %v4015 = vpack.c.b16 %v3997, %v3996
    %v4016 = vpack.c.b16 %v3999, %v3998
    %v4017 = vpack.c.b16 %v4001, %v4000
    %4034 = vmatprep.subr.bf16.mxu0 0
    %4035 = vmatpush1.bf16.msra.mxu0 %v4002
    %4036 = vmatprep.subr.bf16.mxu0 0
    %4037 = vmatpush1.bf16.msra.mxu0 %v4003
    %4038 = vmatprep.subr.bf16.mxu0 0
    %4039 = vmatpush1.bf16.msra.mxu0 %v4004
    %4040 = vmatprep.subr.bf16.mxu0 0
    %4041 = vmatpush1.bf16.msra.mxu0 %v4005
    %4042 = vmatprep.subr.bf16.mxu0 0
    %4043 = vmatpush1.bf16.msra.mxu0 %v4006
    %4044 = vmatprep.subr.bf16.mxu0 0
    %4045 = vmatpush1.bf16.msra.mxu0 %v4007
    %4046 = vmatprep.subr.bf16.mxu0 0
    %4047 = vmatpush1.bf16.msra.mxu0 %v4008
    %4048 = vmatprep.subr.bf16.mxu0 0
    %4049 = vmatpush1.bf16.msra.mxu0 %v4009
    %4050 = vmatprep.subr.bf16.mxu0 0
    %4051 = vmatpush1.bf16.msra.mxu0 %v4010
    %4052 = vmatprep.subr.bf16.mxu0 0
    %4053 = vmatpush1.bf16.msra.mxu0 %v4011
    %4054 = vmatprep.subr.bf16.mxu0 0
    %4055 = vmatpush1.bf16.msra.mxu0 %v4012
    %4056 = vmatprep.subr.bf16.mxu0 0
    %4057 = vmatpush1.bf16.msra.mxu0 %v4013
    %4058 = vmatprep.subr.bf16.mxu0 0
    %4059 = vmatpush1.bf16.msra.mxu0 %v4014
    %4060 = vmatprep.subr.bf16.mxu0 0
    %4061 = vmatpush1.bf16.msra.mxu0 %v4015
    %4062 = vmatprep.subr.bf16.mxu0 0
    %4063 = vmatpush1.bf16.msra.mxu0 %v4016
    %4064 = vmatprep.subr.bf16.mxu0 0
    %4065 = vmatpush1.bf16.msra.mxu0 %v4017
    %4066 = vmatprep.mubr.bf16.mxu0 %v3935
    %4067 = vmatmul.mubr.bf16.gmra.mrb[0].mxu0 %v3934
    %v4068 = vpop.f32.mrb[0].mxu0
    %v4069 = vadd.f32 0.0, %v4068
    %v4070 = vpop.f32.mrb[0].mxu0
    %v4071 = vpop.f32.mrb[0].mxu0
    %v4072 = vpop.f32.mrb[0].mxu0
    %4073 = vdwg.mxu0
    %v4074 = vadd.f32 %v3900, %v4069
    %v4075 = vld [vmem:[%s16] sm:$0x1]
    %v4077 = vlaneseq
    %v4078 = vshrl.u32 %v4077, 7
    %v4079 = vsub.s32 0, %v4078
    %v4080 = vrot.slane %v4075, %v4079
    %v4082 = vadd.f32 %v4074, %v4080
    %v4083 = vmax.f32 %v4082, 0.0
    %v4084 = vpack.c.bf16 %v4083, %v4083
    %v4085 = vld [vmem:[%s17] sm:$0xf]
    %v4086 = vld [vmem:[%s17 + $0x4] sm:$0xf]
    %v4087 = vld [vmem:[%s17 + $0x8] sm:$0xf]
    %v4088 = vld [vmem:[%s17 + $0xc] sm:$0xf]
    %v4089 = vld [vmem:[%s17 + $0x10] sm:$0xf]
    %v4090 = vld [vmem:[%s17 + $0x14] sm:$0xf]
    %v4091 = vld [vmem:[%s17 + $0x18] sm:$0xf]
    %v4092 = vld [vmem:[%s17 + $0x1c] sm:$0xf]
    %v4093 = vld [vmem:[%s17 + $0x20] sm:$0xf]
    %v4094 = vld [vmem:[%s17 + $0x24] sm:$0xf]
    %v4095 = vld [vmem:[%s17 + $0x28] sm:$0xf]
    %v4096 = vld [vmem:[%s17 + $0x2c] sm:$0xf]
    %v4097 = vld [vmem:[%s17 + $0x30] sm:$0xf]
    %v4098 = vld [vmem:[%s17 + $0x34] sm:$0xf]
    %v4099 = vld [vmem:[%s17 + $0x38] sm:$0xf]
    %v4100 = vld [vmem:[%s17 + $0x3c] sm:$0xf]
    %v4101 = vld [vmem:[#allocation5] sm:$0x1]
    %v4103 = vlaneseq
    %v4104 = vshrl.u32 %v4103, 7
    %v4105 = vsub.s32 0, %v4104
    %v4106 = vrot.slane %v4101, %v4105
    %v4124 = vunpack.c.l.b16 %v4085
    %v4125 = vunpack.c.l.b16 %v4086
    %v4126 = vunpack.c.l.b16 %v4087
    %v4127 = vunpack.c.l.b16 %v4088
    %v4128 = vunpack.c.l.b16 %v4089
    %v4129 = vunpack.c.l.b16 %v4090
    %v4130 = vunpack.c.l.b16 %v4091
    %v4131 = vunpack.c.l.b16 %v4092
    %v4132 = vunpack.c.l.b16 %v4093
    %v4133 = vunpack.c.l.b16 %v4094
    %v4134 = vunpack.c.l.b16 %v4095
    %v4135 = vunpack.c.l.b16 %v4096
    %v4136 = vunpack.c.l.b16 %v4097
    %v4137 = vunpack.c.l.b16 %v4098
    %v4138 = vunpack.c.l.b16 %v4099
    %v4139 = vunpack.c.l.b16 %v4100
    %v4140 = vpack.c.b16 %v4125, %v4124
    %v4141 = vpack.c.b16 %v4127, %v4126
    %v4142 = vpack.c.b16 %v4129, %v4128
    %v4143 = vpack.c.b16 %v4131, %v4130
    %v4144 = vpack.c.b16 %v4133, %v4132
    %v4145 = vpack.c.b16 %v4135, %v4134
    %v4146 = vpack.c.b16 %v4137, %v4136
    %v4147 = vpack.c.b16 %v4139, %v4138
    %4156 = vmatprep.subr.bf16.mxu0 0
    %4157 = vmatpush1.bf16.msra.mxu0 %v4140
    %4158 = vmatprep.subr.bf16.mxu0 0
    %4159 = vmatpush1.bf16.msra.mxu0 %v4141
    %4160 = vmatprep.subr.bf16.mxu0 0
    %4161 = vmatpush1.bf16.msra.mxu0 %v4142
    %4162 = vmatprep.subr.bf16.mxu0 0
    %4163 = vmatpush1.bf16.msra.mxu0 %v4143
    %4164 = vmatprep.subr.bf16.mxu0 0
    %4165 = vmatpush1.bf16.msra.mxu0 %v4144
    %4166 = vmatprep.subr.bf16.mxu0 0
    %4167 = vmatpush1.bf16.msra.mxu0 %v4145
    %4168 = vmatprep.subr.bf16.mxu0 0
    %4169 = vmatpush1.bf16.msra.mxu0 %v4146
    %4170 = vmatprep.subr.bf16.mxu0 0
    %4171 = vmatpush1.bf16.msra.mxu0 %v4147
    %4172 = vmatprep.subr.bf16.mxu0 0
    %4173 = vmatpush1.bf16.msra.mxu0 0
    %4174 = vmatprep.subr.bf16.mxu0 0
    %4175 = vmatpush1.bf16.msra.mxu0 0
    %4176 = vmatprep.subr.bf16.mxu0 0
    %4177 = vmatpush1.bf16.msra.mxu0 0
    %4178 = vmatprep.subr.bf16.mxu0 0
    %4179 = vmatpush1.bf16.msra.mxu0 0
    %4180 = vmatprep.subr.bf16.mxu0 0
    %4181 = vmatpush1.bf16.msra.mxu0 0
    %4182 = vmatprep.subr.bf16.mxu0 0
    %4183 = vmatpush1.bf16.msra.mxu0 0
    %4184 = vmatprep.subr.bf16.mxu0 0
    %4185 = vmatpush1.bf16.msra.mxu0 0
    %4186 = vmatprep.subr.bf16.mxu0 0
    %4187 = vmatpush1.bf16.msra.mxu0 0
    %4188 = vmatprep.mubr.bf16.mxu0 0
    %4189 = vmatmul.mubr.bf16.gmra.mrb[0].mxu0 %v4084
    %v4190 = vpop.f32.mrb[0].mxu0
    %v4191 = vadd.f32 %v4106, %v4190
    %v4192 = vpop.f32.mrb[0].mxu0
    %v4193 = vpop.f32.mrb[0].mxu0
    %v4194 = vpop.f32.mrb[0].mxu0
    %4195 = vdwg.mxu0
    %vm4196 = vcmask 1024
    %4197 = vst.msk [vmem:[%s19] sm:$0x3] %vm4196, %v4191
    // Predicated region
    $region90: #{cnn_forward.1} parent=1 // pred_check
      _
    $region91: #{cnn_forward.1} parent=1 // pred_check_branch
      %4199 = sbr.rel (0) target = $region93
    $region92: #{cnn_forward.1} parent=1 // pred_region
      _
    $region93: #{cnn_forward.1} parent=1 // pred_fallthru
      _
    // Predicated region
    $region94: #{cnn_forward.1} parent=1 // pred_check
      _
    $region95: #{cnn_forward.1} parent=1 // pred_check_branch
      %4201 = sbr.rel (0) target = $region97
    $region96: #{cnn_forward.1} parent=1 // pred_region
      _
    $region97: #{cnn_forward.1} parent=1 // pred_fallthru
      _
    %4202 = vsyncpa [#allocation7], 1
    %4203 = vsyncpa [#allocation9], 1

</llo_original>
